<compile_context>
chip_gen: v7x
topology: tpu7x:2x2x1
jax: 0.10.0
libtpu: 0.0.40
codegen_flags: <defaults>
</compile_context>

<pallas_src>
import functools

import jax
import jax.numpy as jnp
from jax import lax
from jax.experimental import pallas as pl
from jax.experimental.pallas import tpu as pltpu


_NS_ITERS = 15
_NS_F32_TAIL = 3           # last Newton-Schulz iterations always in f32
_NS_BF16_MIN_N = 256       # bf16 NS operands only where the N^3 matmuls dominate
_GRAM_BF16_MIN_N = 128     # bf16 gram operands only where the MXU is filled

_VMEM_LIMIT_BYTES = 48 << 20   # explicit scoped-VMEM limit; v7x-safe (64 MiB phys)
_VMEM_TILE_BUDGET = 24 << 20   # budget used when sizing the streamed x blocks


def _eye(n, dtype=jnp.float32):
    row = lax.broadcasted_iota(jnp.int32, (n, n), 0)
    col = lax.broadcasted_iota(jnp.int32, (n, n), 1)
    return jnp.where(row == col, jnp.ones((n, n), dtype), jnp.zeros((n, n), dtype))


# ---------------------------------------------------------------------------
# Shared in-kernel helpers (accumulation over P tiles + finalization).
# ---------------------------------------------------------------------------
def _accumulate(x_ref, sum_acc, xx_acc):
    """Accumulate row sums and the uncentered gram X X^T over P tiles."""
    @pl.when(pl.program_id(0) == 0)
    def _():
        sum_acc[...] = jnp.zeros_like(sum_acc)
        xx_acc[...] = jnp.zeros_like(xx_acc)

    n = x_ref.shape[0]
    x = x_ref[...]                                          # native dtype tile
    x_f32 = x.astype(jnp.float32)
    sum_acc[...] += jnp.sum(x_f32, axis=1, keepdims=True)

    # MXU operand dtype: bf16 where it pays (or input already bf16); the
    # accumulation stays f32 via preferred_element_type.
    if x.dtype == jnp.bfloat16 or n >= _GRAM_BF16_MIN_N:
        x_mm = x.astype(jnp.bfloat16)
    else:
        x_mm = x_f32
    # x @ x.T without an explicit transpose (contract over the P axis).
    xx_acc[...] += lax.dot_general(
        x_mm, x_mm, dimension_numbers=(((1,), (1,)), ((), ())),
        preferred_element_type=jnp.float32)


def _finalize_stats(sum_acc, xx_acc, p, eye):
    """M and the centered gram: (X-M)(X-M)^T = X X^T - P * M M^T."""
    m = sum_acc[...] / p                                    # (N, 1)
    outer = lax.dot_general(                                # M M^T (no transpose)
        m, m, dimension_numbers=(((1,), (1,)), ((), ())),
        preferred_element_type=jnp.float32)
    g = (xx_acc[...] - p * outer + 1e-6 * eye) / p
    return m, g


def _newton_schulz_sqrtm(g, eye, *, bf16_iters):
    """15-iteration Newton-Schulz matrix sqrt, unrolled, mixed precision."""
    # TODO(synk): the PyTorch reference computes the Frobenius norm in float64;
    # this runs in float32 (small relative error on ill-conditioned G).
    norm = jnp.sqrt(jnp.maximum(jnp.sum(g * g), 1e-30))
    eye15 = 1.5 * eye                      # hoisted: built once, not 15x

    def make_body(mm_dtype):
        def body(_, carry):
            y, z = carry
            zy = jnp.dot(z.astype(mm_dtype), y.astype(mm_dtype),
                         preferred_element_type=jnp.float32)
            t = eye15 - 0.5 * zy           # == 0.5 * (3I - ZY), constants folded
            y = jnp.dot(y.astype(mm_dtype), t.astype(mm_dtype),
                        preferred_element_type=jnp.float32)
            z = jnp.dot(t.astype(mm_dtype), z.astype(mm_dtype),
                        preferred_element_type=jnp.float32)
            return y, z
        return body

    carry = (g / norm, eye)
    if bf16_iters > 0:                     # bf16 operands, f32 accumulation
        carry = lax.fori_loop(0, bf16_iters, make_body(jnp.bfloat16), carry,
                              unroll=True)
    carry = lax.fori_loop(0, _NS_ITERS - bf16_iters, make_body(jnp.float32),
                          carry, unroll=True)
    y, _ = carry
    return y * jnp.sqrt(norm)


def _ns_bf16_iters(n):
    return (_NS_ITERS - _NS_F32_TAIL) if n >= _NS_BF16_MIN_N else 0


# ---------------------------------------------------------------------------
# Kernels.
# ---------------------------------------------------------------------------
def _target_stats_kernel(x_ref, m_ref, g_ref, s_ref, sum_acc, xx_acc, *, p):
    """__init__ path: emit targetM, targetG and sqrtm(targetG) in one launch."""
    _accumulate(x_ref, sum_acc, xx_acc)

    @pl.when(pl.program_id(0) == pl.num_programs(0) - 1)
    def _():
        n = g_ref.shape[0]
        eye = _eye(n)
        m, g = _finalize_stats(sum_acc, xx_acc, p, eye)
        m_ref[...] = m
        g_ref[...] = g
        s_ref[...] = _newton_schulz_sqrtm(g, eye, bf16_iters=_ns_bf16_iters(n))


def _forward_loss_kernel(x_ref, tm_ref, ts_t_ref, tr_tg_ref, loss_ref,
                         sum_acc, xx_acc, *, p, channels):
    """Forward path: stats + sqrtm + loss fused into a single launch."""
    _accumulate(x_ref, sum_acc, xx_acc)

    @pl.when(pl.program_id(0) == pl.num_programs(0) - 1)
    def _():
        n = ts_t_ref.shape[0]
        eye = _eye(n)
        m, g = _finalize_stats(sum_acc, xx_acc, p, eye)
        sqrt_g = _newton_schulz_sqrtm(g, eye, bf16_iters=_ns_bf16_iters(n))

        mse = jnp.sum((m - tm_ref[...]) ** 2)               # sum((M - Mt)^2)
        # trace(G + Gt): trace(targetG) arrives as an SMEM scalar (no N^2 DMA).
        tr_sum = jnp.sum(g * eye) + tr_tg_ref[0, 0]
        # trace(sqrtG @ sqrtGt) == sum(sqrtG * sqrtGt^T); target pre-transposed
        # once in __init__, so no N^3 matmul here.
        tr_cross = jnp.sum(sqrt_g * ts_t_ref[...])

        loss = (mse + tr_sum - 2.0 * tr_cross) / channels
        loss_ref[...] = jnp.full((1, 1), loss, dtype=jnp.float32)


# ---------------------------------------------------------------------------
# Wrappers.
# ---------------------------------------------------------------------------
def _pad_lanes(x2d):
    """Zero-pad P to a multiple of 128 (zeros add nothing to sum(X) or X·X^T)."""
    n, p = x2d.shape
    p_pad = ((p + 127) // 128) * 128
    if p_pad != p:
        x2d = jnp.pad(x2d, ((0, 0), (0, p_pad - p)))
    return x2d, p


def _pick_p_tile(n, p_pad, itemsize):
    """Largest 128-multiple tile along P: whole axis as one block when the
    double-buffered input blocks + final-step working set (targets, gram
    accumulator, ~6-8 N^2 Newton-Schulz temporaries) fit a generation-safe
    budget; otherwise the largest 128-multiple divisor that fits."""
    fixed = 10 * n * n * 4 + 4 * n * 4          # rough resident working set
    avail = max(_VMEM_TILE_BUDGET - fixed, 2 << 20)
    tp_max = max(128, (avail // (2 * n * itemsize)) // 128 * 128)
    if p_pad <= tp_max:
        return p_pad                            # single block -> grid of 1
    tp = tp_max
    while p_pad % tp != 0:                      # 128 always divides p_pad
        tp -= 128
    return tp


def _common_call_kwargs(n, p_pad, tp, itemsize):
    ns_flops = _NS_ITERS * 3 * 2 * n ** 3              # Newton-Schulz matmuls
    flops = 2 * n * n * p_pad + ns_flops               # + gram accumulation
    bytes_accessed = n * p_pad * itemsize + (3 * n * n + 2 * n) * 4
    return dict(
        grid=(p_pad // tp,),
        compiler_params=pltpu.CompilerParams(
            dimension_semantics=("arbitrary",),        # P axis is a reduction
            vmem_limit_bytes=_VMEM_LIMIT_BYTES),
        cost_estimate=pl.CostEstimate(flops=int(flops), transcendentals=0,
                                      bytes_accessed=int(bytes_accessed)),
    )


def compute_target_stats(x2d):
    x2d, p_true = _pad_lanes(x2d)
    n, p_pad = x2d.shape
    itemsize = jnp.dtype(x2d.dtype).itemsize
    tp = _pick_p_tile(n, p_pad, itemsize)
    return pl.pallas_call(
        functools.partial(_target_stats_kernel, p=float(p_true)),
        out_shape=(jax.ShapeDtypeStruct((n, 1), jnp.float32),
                   jax.ShapeDtypeStruct((n, n), jnp.float32),
                   jax.ShapeDtypeStruct((n, n), jnp.float32)),
        in_specs=[pl.BlockSpec((n, tp), lambda k: (0, k))],
        out_specs=(pl.BlockSpec((n, 1), lambda k: (0, 0)),
                   pl.BlockSpec((n, n), lambda k: (0, 0)),
                   pl.BlockSpec((n, n), lambda k: (0, 0))),
        scratch_shapes=[pltpu.VMEM((n, 1), jnp.float32),
                        pltpu.VMEM((n, n), jnp.float32)],
        **_common_call_kwargs(n, p_pad, tp, itemsize),
    )(x2d)


def compute_forward_loss(x2d, target_m, sqrt_target_g_t, tr_target_g, channels):
    x2d, p_true = _pad_lanes(x2d)
    n, p_pad = x2d.shape
    itemsize = jnp.dtype(x2d.dtype).itemsize
    tp = _pick_p_tile(n, p_pad, itemsize)
    loss = pl.pallas_call(
        functools.partial(_forward_loss_kernel, p=float(p_true),
                          channels=float(channels)),
        out_shape=jax.ShapeDtypeStruct((1, 1), jnp.float32),
        in_specs=[pl.BlockSpec((n, tp), lambda k: (0, k)),
                  pl.BlockSpec((n, 1), lambda k: (0, 0)),   # resident targetM
                  pl.BlockSpec((n, n), lambda k: (0, 0)),   # resident sqrtGt^T
                  pl.BlockSpec(memory_space=pltpu.MemorySpace.SMEM)],  # tr(Gt)
        out_specs=pl.BlockSpec((1, 1), lambda k: (0, 0)),
        scratch_shapes=[pltpu.VMEM((n, 1), jnp.float32),
                        pltpu.VMEM((n, n), jnp.float32)],
        **_common_call_kwargs(n, p_pad, tp, itemsize),
    )(x2d, target_m, sqrt_target_g_t, tr_target_g)
    return loss[0, 0]


class TexLossOptTrans:
    """Pallas port of the PyTorch constraint layer (loss stored on self.loss)."""

    def __init__(self, target_feature):
        a, b, c, d = target_feature.shape
        self.channels = b
        X = target_feature.reshape(a * b, c * d)            # native dtype
        self.targetM, self.targetG, self.sqrtTargetG = compute_target_stats(X)
        # Pre-transpose once so the per-call kernel uses an elementwise trace:
        # trace(sqrtG @ sqrtTargetG) == sum(sqrtG * sqrtTargetG.T).
        self.sqrtTargetG_T = jnp.transpose(self.sqrtTargetG)
        # trace(targetG) as a (1,1) SMEM scalar -> forward no longer streams Gt.
        self.trTargetG = jnp.trace(self.targetG).reshape(1, 1).astype(jnp.float32)

    def __call__(self, x):
        a, b, c, d = x.shape
        X = x.reshape(a * b, c * d)                         # native dtype
        self.loss = compute_forward_loss(X, self.targetM, self.sqrtTargetG_T,
                                         self.trTargetG, self.channels)
        return x  # forward passes the input through unchanged


# ---------------------------------------------------------------------------
# Pure-JAX reference (mirrors the PyTorch math) for sanity checks.
# ---------------------------------------------------------------------------
def _reference_loss(x, target_feature):
    hi = lax.Precision.HIGHEST

    def stats(t):
        a, b, c, d = t.shape
        X = t.reshape(a * b, c * d).astype(jnp.float32)
        M = X.mean(axis=1, keepdims=True)
        Xc = X - M
        G = (jnp.dot(Xc, Xc.T, precision=hi)
             + 1e-6 * jnp.eye(a * b, dtype=jnp.float32)) / (c * d)
        return M, G

    def sqrtm(g):
        n = g.shape[0]
        norm = jnp.sqrt(jnp.sum(g * g))
        eye = jnp.eye(n, dtype=jnp.float32)
        y, z = g / norm, eye
        for _ in range(_NS_ITERS):
            t = 0.5 * (3.0 * eye - jnp.dot(z, y, precision=hi))
            y, z = jnp.dot(y, t, precision=hi), jnp.dot(t, z, precision=hi)
        return y * jnp.sqrt(norm)

    tm, tg = stats(target_feature)
    m, g = stats(x)
    loss = (jnp.sum((m - tm) ** 2) + jnp.trace(g + tg)
            - 2.0 * jnp.trace(jnp.dot(sqrtm(g), sqrtm(tg), precision=hi)))
    return loss / x.shape[1]


if __name__ == "__main__":
    key = jax.random.PRNGKey(0)
    k_t, k_x, k_t2, k_x2 = jax.random.split(key, 4)

    # --- Test 1: small shapes, pure f32 path (N = a*b = 8, P = c*d = 256). ---
    target = jax.random.normal(k_t, (2, 4, 16, 16), dtype=jnp.float32)
    x = jax.random.normal(k_x, (2, 4, 16, 16), dtype=jnp.float32)
    module = TexLossOptTrans(target)
    out = module(x)
    jax.block_until_ready((out, module.loss))
    got = float(module.loss)
    ref = float(_reference_loss(x, target))
    assert out.shape == x.shape and out.dtype == x.dtype
    assert abs(got - ref) <= 1e-3 + 1e-2 * abs(ref), (got, ref)

    # --- Test 2: N = 256 engages the bf16 MXU paths (gram + mixed-precision
    # Newton-Schulz).  x is scaled/shifted vs. the target so the Bures term is
    # not dominated by cancellation; tolerance reflects bf16 operand rounding.
    target2 = jax.random.normal(k_t2, (8, 32, 32, 32), dtype=jnp.float32)
    x2 = 0.5 + 2.0 * jax.random.normal(k_x2, (8, 32, 32, 32), dtype=jnp.float32)
    module2 = TexLossOptTrans(target2)
    out2 = module2(x2)
    jax.block_until_ready((out2, module2.loss))
    got2 = float(module2.loss)
    ref2 = float(_reference_loss(x2, target2))
    assert out2.shape == x2.shape
    assert abs(got2 - ref2) <= 1e-2 + 3e-2 * abs(ref2), (got2, ref2)

    print("KERNEL_OK")
</pallas_src>

<mosaic_0001>
module attributes {stable_mosaic.version = 11 : i64} {
  func.func @_target_stats_kernel(%arg0: i32, %arg1: memref<8x256xf32, #tpu.memory_space<vmem>>, %arg2: memref<8x1xf32, #tpu.memory_space<vmem>>, %arg3: memref<8x8xf32, #tpu.memory_space<vmem>>, %arg4: memref<8x8xf32, #tpu.memory_space<vmem>>, %arg5: memref<8x1xf32, #tpu.memory_space<vmem>>, %arg6: memref<8x8xf32, #tpu.memory_space<vmem>>) attributes {dimension_semantics = [#tpu.dimension_semantics<arbitrary>], iteration_bounds = array<i64: 1>, scalar_prefetch = 0 : i64, scratch_operands = 2 : i64, tpu.core_type = #tpu.core_type<tc>, window_params = [{transform_indices = @transform_0, window_bounds = array<i64: 8, 256>}, {pipeline_mode = #tpu.pipeline_mode<synchronous>, transform_indices = @transform_1, window_bounds = array<i64: 8, 1>}, {pipeline_mode = #tpu.pipeline_mode<synchronous>, transform_indices = @transform_2, window_bounds = array<i64: 8, 8>}, {pipeline_mode = #tpu.pipeline_mode<synchronous>, transform_indices = @transform_3, window_bounds = array<i64: 8, 8>}]} {
    %c0_i32 = arith.constant 0 : i32
    %0 = arith.cmpi eq, %arg0, %c0_i32 : i32
    %1 = arith.extui %0 : i1 to i32
    %c0_i32_0 = arith.constant 0 : i32
    %2 = arith.cmpi ne, %1, %c0_i32_0 : i32
    scf.if %2 {
      %cst_13 = arith.constant 0.000000e+00 : f32
      %16 = vector.broadcast %cst_13 : f32 to vector<8x1xf32>
      %c0_14 = arith.constant 0 : index
      %c0_15 = arith.constant 0 : index
      %17 = vector.load %arg5[%c0_14, %c0_15] : memref<8x1xf32, #tpu.memory_space<vmem>>, vector<8x1xf32>
      tpu.vector_store %arg5[%c0_14, %c0_15], %16 {strides = array<i32>} : memref<8x1xf32, #tpu.memory_space<vmem>>, vector<8x1xf32>,
      %cst_16 = arith.constant 0.000000e+00 : f32
      %18 = vector.broadcast %cst_16 : f32 to vector<8x8xf32>
      %c0_17 = arith.constant 0 : index
      %c0_18 = arith.constant 0 : index
      %19 = vector.load %arg6[%c0_17, %c0_18] : memref<8x8xf32, #tpu.memory_space<vmem>>, vector<8x8xf32>
      tpu.vector_store %arg6[%c0_17, %c0_18], %18 {strides = array<i32>} : memref<8x8xf32, #tpu.memory_space<vmem>>, vector<8x8xf32>,
    } else {
    }
    %c0 = arith.constant 0 : index
    %c0_1 = arith.constant 0 : index
    %3 = vector.load %arg1[%c0, %c0_1] : memref<8x256xf32, #tpu.memory_space<vmem>>, vector<8x256xf32>
    %c0_2 = arith.constant 0 : index
    %c0_3 = arith.constant 0 : index
    %4 = vector.load %arg5[%c0_2, %c0_3] : memref<8x1xf32, #tpu.memory_space<vmem>>, vector<8x1xf32>
    %cst = arith.constant dense<0.000000e+00> : vector<8xf32>
    %5 = vector.multi_reduction <add>, %3, %cst [1] : vector<8x256xf32> to vector<8xf32>
    %6 = vector.shape_cast %5 : vector<8xf32> to vector<8x1xf32>
    %7 = arith.addf %4, %6 : vector<8x1xf32>
    %c0_4 = arith.constant 0 : index
    %c0_5 = arith.constant 0 : index
    %8 = vector.load %arg5[%c0_4, %c0_5] : memref<8x1xf32, #tpu.memory_space<vmem>>, vector<8x1xf32>
    tpu.vector_store %arg5[%c0_4, %c0_5], %7 {strides = array<i32>} : memref<8x1xf32, #tpu.memory_space<vmem>>, vector<8x1xf32>,
    %c0_6 = arith.constant 0 : index
    %c0_7 = arith.constant 0 : index
    %9 = vector.load %arg6[%c0_6, %c0_7] : memref<8x8xf32, #tpu.memory_space<vmem>>, vector<8x8xf32>
    %cst_8 = arith.constant dense<0.000000e+00> : vector<8x8xf32>
    %10 = tpu.matmul %3, %3, %cst_8 {dimension_numbers = #tpu.dot_dimension_numbers<[1], [1], [0], [0], [0, 0, 1, 0], [], []>} : vector<8x256xf32>, vector<8x256xf32>, vector<8x8xf32> -> vector<8x8xf32>
    %11 = arith.addf %9, %10 : vector<8x8xf32>
    %c0_9 = arith.constant 0 : index
    %c0_10 = arith.constant 0 : index
    %12 = vector.load %arg6[%c0_9, %c0_10] : memref<8x8xf32, #tpu.memory_space<vmem>>, vector<8x8xf32>
    tpu.vector_store %arg6[%c0_9, %c0_10], %11 {strides = array<i32>} : memref<8x8xf32, #tpu.memory_space<vmem>>, vector<8x8xf32>,
    %c0_i32_11 = arith.constant 0 : i32
    %13 = arith.cmpi eq, %arg0, %c0_i32_11 : i32
    %14 = arith.extui %13 : i1 to i32
    %c0_i32_12 = arith.constant 0 : i32
    %15 = arith.cmpi ne, %14, %c0_i32_12 : i32
    scf.if %15 {
      %16 = tpu.iota {dimensions = array<i32: 0>} : vector<8x8xi32>
      %17 = tpu.iota {dimensions = array<i32: 1>} : vector<8x8xi32>
      %18 = arith.cmpi eq, %16, %17 : vector<8x8xi32>
      %cst_13 = arith.constant 1.000000e+00 : f32
      %19 = vector.broadcast %cst_13 : f32 to vector<8x8xf32>
      %cst_14 = arith.constant 0.000000e+00 : f32
      %20 = vector.broadcast %cst_14 : f32 to vector<8x8xf32>
      %21 = arith.select %18, %19, %20 : vector<8x8xi1>, vector<8x8xf32>
      %c0_15 = arith.constant 0 : index
      %c0_16 = arith.constant 0 : index
      %22 = vector.load %arg5[%c0_15, %c0_16] : memref<8x1xf32, #tpu.memory_space<vmem>>, vector<8x1xf32>
      %cst_17 = arith.constant 2.560000e+02 : f32
      %23 = vector.broadcast %cst_17 : f32 to vector<8x1xf32>
      %24 = arith.divf %22, %23 : vector<8x1xf32>
      %cst_18 = arith.constant dense<0.000000e+00> : vector<8x8xf32>
      %25 = tpu.matmul %24, %24, %cst_18 {dimension_numbers = #tpu.dot_dimension_numbers<[1], [1], [0], [0], [0, 0, 1, 0], [], []>} : vector<8x1xf32>, vector<8x1xf32>, vector<8x8xf32> -> vector<8x8xf32>
      %c0_19 = arith.constant 0 : index
      %c0_20 = arith.constant 0 : index
      %26 = vector.load %arg6[%c0_19, %c0_20] : memref<8x8xf32, #tpu.memory_space<vmem>>, vector<8x8xf32>
      %cst_21 = arith.constant 2.560000e+02 : f32
      %27 = vector.broadcast %cst_21 : f32 to vector<8x8xf32>
      %28 = arith.mulf %27, %25 : vector<8x8xf32>
      %29 = arith.subf %26, %28 : vector<8x8xf32>
      %cst_22 = arith.constant 9.99999997E-7 : f32
      %30 = vector.broadcast %cst_22 : f32 to vector<8x8xf32>
      %31 = arith.mulf %30, %21 : vector<8x8xf32>
      %32 = arith.addf %29, %31 : vector<8x8xf32>
      %cst_23 = arith.constant 2.560000e+02 : f32
      %33 = vector.broadcast %cst_23 : f32 to vector<8x8xf32>
      %34 = arith.divf %32, %33 : vector<8x8xf32>
      %c0_24 = arith.constant 0 : index
      %c0_25 = arith.constant 0 : index
      %35 = vector.load %arg2[%c0_24, %c0_25] : memref<8x1xf32, #tpu.memory_space<vmem>>, vector<8x1xf32>
      tpu.vector_store %arg2[%c0_24, %c0_25], %24 {strides = array<i32>} : memref<8x1xf32, #tpu.memory_space<vmem>>, vector<8x1xf32>,
      %c0_26 = arith.constant 0 : index
      %c0_27 = arith.constant 0 : index
      %36 = vector.load %arg3[%c0_26, %c0_27] : memref<8x8xf32, #tpu.memory_space<vmem>>, vector<8x8xf32>
      tpu.vector_store %arg3[%c0_26, %c0_27], %34 {strides = array<i32>} : memref<8x8xf32, #tpu.memory_space<vmem>>, vector<8x8xf32>,
      %37 = arith.mulf %34, %34 : vector<8x8xf32>
      %38 = vector.shape_cast %37 : vector<8x8xf32> to vector<1x8x8xf32>
      %cst_28 = arith.constant dense<0.000000e+00> : vector<1xf32>
      %39 = vector.multi_reduction <add>, %38, %cst_28 [1, 2] : vector<1x8x8xf32> to vector<1xf32>
      %40 = vector.shape_cast %39 : vector<1xf32> to vector<1x1x1xf32>
      %41 = vector.extract %40[0, 0, 0] : f32 from vector<1x1x1xf32>
      %cst_29 = arith.constant 1.000000e-30 : f32
      %42 = arith.maximumf %41, %cst_29 : f32
      %43 = math.sqrt %42 : f32
      %cst_30 = arith.constant 1.500000e+00 : f32
      %44 = vector.broadcast %cst_30 : f32 to vector<8x8xf32>
      %45 = arith.mulf %44, %21 : vector<8x8xf32>
      %46 = vector.broadcast %43 : f32 to vector<8x8xf32>
      %47 = arith.divf %34, %46 : vector<8x8xf32>
      %c0_i32_31 = arith.constant 0 : i32
      %cst_32 = arith.constant dense<0.000000e+00> : vector<8x8xf32>
      %48 = tpu.matmul %21, %47, %cst_32 {dimension_numbers = #tpu.dot_dimension_numbers<[1], [0], [0], [1], [0, 0, 1, 1], [], []>} : vector<8x8xf32>, vector<8x8xf32>, vector<8x8xf32> -> vector<8x8xf32>
      %cst_33 = arith.constant 5.000000e-01 : f32
      %49 = vector.broadcast %cst_33 : f32 to vector<8x8xf32>
      %50 = arith.mulf %49, %48 : vector<8x8xf32>
      %51 = arith.subf %45, %50 : vector<8x8xf32>
      %cst_34 = arith.constant dense<0.000000e+00> : vector<8x8xf32>
      %52 = tpu.matmul %47, %51, %cst_34 {dimension_numbers = #tpu.dot_dimension_numbers<[1], [0], [0], [1], [0, 0, 1, 1], [], []>} : vector<8x8xf32>, vector<8x8xf32>, vector<8x8xf32> -> vector<8x8xf32>
      %cst_35 = arith.constant dense<0.000000e+00> : vector<8x8xf32>
      %53 = tpu.matmul %51, %21, %cst_35 {dimension_numbers = #tpu.dot_dimension_numbers<[1], [0], [0], [1], [0, 0, 1, 1], [], []>} : vector<8x8xf32>, vector<8x8xf32>, vector<8x8xf32> -> vector<8x8xf32>
      %c1_i32 = arith.constant 1 : i32
      %cst_36 = arith.constant dense<0.000000e+00> : vector<8x8xf32>
      %54 = tpu.matmul %53, %52, %cst_36 {dimension_numbers = #tpu.dot_dimension_numbers<[1], [0], [0], [1], [0, 0, 1, 1], [], []>} : vector<8x8xf32>, vector<8x8xf32>, vector<8x8xf32> -> vector<8x8xf32>
      %cst_37 = arith.constant 5.000000e-01 : f32
      %55 = vector.broadcast %cst_37 : f32 to vector<8x8xf32>
      %56 = arith.mulf %55, %54 : vector<8x8xf32>
      %57 = arith.subf %45, %56 : vector<8x8xf32>
      %cst_38 = arith.constant dense<0.000000e+00> : vector<8x8xf32>
      %58 = tpu.matmul %52, %57, %cst_38 {dimension_numbers = #tpu.dot_dimension_numbers<[1], [0], [0], [1], [0, 0, 1, 1], [], []>} : vector<8x8xf32>, vector<8x8xf32>, vector<8x8xf32> -> vector<8x8xf32>
      %cst_39 = arith.constant dense<0.000000e+00> : vector<8x8xf32>
      %59 = tpu.matmul %57, %53, %cst_39 {dimension_numbers = #tpu.dot_dimension_numbers<[1], [0], [0], [1], [0, 0, 1, 1], [], []>} : vector<8x8xf32>, vector<8x8xf32>, vector<8x8xf32> -> vector<8x8xf32>
      %c2_i32 = arith.constant 2 : i32
      %cst_40 = arith.constant dense<0.000000e+00> : vector<8x8xf32>
      %60 = tpu.matmul %59, %58, %cst_40 {dimension_numbers = #tpu.dot_dimension_numbers<[1], [0], [0], [1], [0, 0, 1, 1], [], []>} : vector<8x8xf32>, vector<8x8xf32>, vector<8x8xf32> -> vector<8x8xf32>
      %cst_41 = arith.constant 5.000000e-01 : f32
      %61 = vector.broadcast %cst_41 : f32 to vector<8x8xf32>
      %62 = arith.mulf %61, %60 : vector<8x8xf32>
      %63 = arith.subf %45, %62 : vector<8x8xf32>
      %cst_42 = arith.constant dense<0.000000e+00> : vector<8x8xf32>
      %64 = tpu.matmul %58, %63, %cst_42 {dimension_numbers = #tpu.dot_dimension_numbers<[1], [0], [0], [1], [0, 0, 1, 1], [], []>} : vector<8x8xf32>, vector<8x8xf32>, vector<8x8xf32> -> vector<8x8xf32>
      %cst_43 = arith.constant dense<0.000000e+00> : vector<8x8xf32>
      %65 = tpu.matmul %63, %59, %cst_43 {dimension_numbers = #tpu.dot_dimension_numbers<[1], [0], [0], [1], [0, 0, 1, 1], [], []>} : vector<8x8xf32>, vector<8x8xf32>, vector<8x8xf32> -> vector<8x8xf32>
      %c3_i32 = arith.constant 3 : i32
      %cst_44 = arith.constant dense<0.000000e+00> : vector<8x8xf32>
      %66 = tpu.matmul %65, %64, %cst_44 {dimension_numbers = #tpu.dot_dimension_numbers<[1], [0], [0], [1], [0, 0, 1, 1], [], []>} : vector<8x8xf32>, vector<8x8xf32>, vector<8x8xf32> -> vector<8x8xf32>
      %cst_45 = arith.constant 5.000000e-01 : f32
      %67 = vector.broadcast %cst_45 : f32 to vector<8x8xf32>
      %68 = arith.mulf %67, %66 : vector<8x8xf32>
      %69 = arith.subf %45, %68 : vector<8x8xf32>
      %cst_46 = arith.constant dense<0.000000e+00> : vector<8x8xf32>
      %70 = tpu.matmul %64, %69, %cst_46 {dimension_numbers = #tpu.dot_dimension_numbers<[1], [0], [0], [1], [0, 0, 1, 1], [], []>} : vector<8x8xf32>, vector<8x8xf32>, vector<8x8xf32> -> vector<8x8xf32>
      %cst_47 = arith.constant dense<0.000000e+00> : vector<8x8xf32>
      %71 = tpu.matmul %69, %65, %cst_47 {dimension_numbers = #tpu.dot_dimension_numbers<[1], [0], [0], [1], [0, 0, 1, 1], [], []>} : vector<8x8xf32>, vector<8x8xf32>, vector<8x8xf32> -> vector<8x8xf32>
      %c4_i32 = arith.constant 4 : i32
      %cst_48 = arith.constant dense<0.000000e+00> : vector<8x8xf32>
      %72 = tpu.matmul %71, %70, %cst_48 {dimension_numbers = #tpu.dot_dimension_numbers<[1], [0], [0], [1], [0, 0, 1, 1], [], []>} : vector<8x8xf32>, vector<8x8xf32>, vector<8x8xf32> -> vector<8x8xf32>
      %cst_49 = arith.constant 5.000000e-01 : f32
      %73 = vector.broadcast %cst_49 : f32 to vector<8x8xf32>
      %74 = arith.mulf %73, %72 : vector<8x8xf32>
      %75 = arith.subf %45, %74 : vector<8x8xf32>
      %cst_50 = arith.constant dense<0.000000e+00> : vector<8x8xf32>
      %76 = tpu.matmul %70, %75, %cst_50 {dimension_numbers = #tpu.dot_dimension_numbers<[1], [0], [0], [1], [0, 0, 1, 1], [], []>} : vector<8x8xf32>, vector<8x8xf32>, vector<8x8xf32> -> vector<8x8xf32>
      %cst_51 = arith.constant dense<0.000000e+00> : vector<8x8xf32>
      %77 = tpu.matmul %75, %71, %cst_51 {dimension_numbers = #tpu.dot_dimension_numbers<[1], [0], [0], [1], [0, 0, 1, 1], [], []>} : vector<8x8xf32>, vector<8x8xf32>, vector<8x8xf32> -> vector<8x8xf32>
      %c5_i32 = arith.constant 5 : i32
      %cst_52 = arith.constant dense<0.000000e+00> : vector<8x8xf32>
      %78 = tpu.matmul %77, %76, %cst_52 {dimension_numbers = #tpu.dot_dimension_numbers<[1], [0], [0], [1], [0, 0, 1, 1], [], []>} : vector<8x8xf32>, vector<8x8xf32>, vector<8x8xf32> -> vector<8x8xf32>
      %cst_53 = arith.constant 5.000000e-01 : f32
      %79 = vector.broadcast %cst_53 : f32 to vector<8x8xf32>
      %80 = arith.mulf %79, %78 : vector<8x8xf32>
      %81 = arith.subf %45, %80 : vector<8x8xf32>
      %cst_54 = arith.constant dense<0.000000e+00> : vector<8x8xf32>
      %82 = tpu.matmul %76, %81, %cst_54 {dimension_numbers = #tpu.dot_dimension_numbers<[1], [0], [0], [1], [0, 0, 1, 1], [], []>} : vector<8x8xf32>, vector<8x8xf32>, vector<8x8xf32> -> vector<8x8xf32>
      %cst_55 = arith.constant dense<0.000000e+00> : vector<8x8xf32>
      %83 = tpu.matmul %81, %77, %cst_55 {dimension_numbers = #tpu.dot_dimension_numbers<[1], [0], [0], [1], [0, 0, 1, 1], [], []>} : vector<8x8xf32>, vector<8x8xf32>, vector<8x8xf32> -> vector<8x8xf32>
      %c6_i32 = arith.constant 6 : i32
      %cst_56 = arith.constant dense<0.000000e+00> : vector<8x8xf32>
      %84 = tpu.matmul %83, %82, %cst_56 {dimension_numbers = #tpu.dot_dimension_numbers<[1], [0], [0], [1], [0, 0, 1, 1], [], []>} : vector<8x8xf32>, vector<8x8xf32>, vector<8x8xf32> -> vector<8x8xf32>
      %cst_57 = arith.constant 5.000000e-01 : f32
      %85 = vector.broadcast %cst_57 : f32 to vector<8x8xf32>
      %86 = arith.mulf %85, %84 : vector<8x8xf32>
      %87 = arith.subf %45, %86 : vector<8x8xf32>
      %cst_58 = arith.constant dense<0.000000e+00> : vector<8x8xf32>
      %88 = tpu.matmul %82, %87, %cst_58 {dimension_numbers = #tpu.dot_dimension_numbers<[1], [0], [0], [1], [0, 0, 1, 1], [], []>} : vector<8x8xf32>, vector<8x8xf32>, vector<8x8xf32> -> vector<8x8xf32>
      %cst_59 = arith.constant dense<0.000000e+00> : vector<8x8xf32>
      %89 = tpu.matmul %87, %83, %cst_59 {dimension_numbers = #tpu.dot_dimension_numbers<[1], [0], [0], [1], [0, 0, 1, 1], [], []>} : vector<8x8xf32>, vector<8x8xf32>, vector<8x8xf32> -> vector<8x8xf32>
      %c7_i32 = arith.constant 7 : i32
      %cst_60 = arith.constant dense<0.000000e+00> : vector<8x8xf32>
      %90 = tpu.matmul %89, %88, %cst_60 {dimension_numbers = #tpu.dot_dimension_numbers<[1], [0], [0], [1], [0, 0, 1, 1], [], []>} : vector<8x8xf32>, vector<8x8xf32>, vector<8x8xf32> -> vector<8x8xf32>
      %cst_61 = arith.constant 5.000000e-01 : f32
      %91 = vector.broadcast %cst_61 : f32 to vector<8x8xf32>
      %92 = arith.mulf %91, %90 : vector<8x8xf32>
      %93 = arith.subf %45, %92 : vector<8x8xf32>
      %cst_62 = arith.constant dense<0.000000e+00> : vector<8x8xf32>
      %94 = tpu.matmul %88, %93, %cst_62 {dimension_numbers = #tpu.dot_dimension_numbers<[1], [0], [0], [1], [0, 0, 1, 1], [], []>} : vector<8x8xf32>, vector<8x8xf32>, vector<8x8xf32> -> vector<8x8xf32>
      %cst_63 = arith.constant dense<0.000000e+00> : vector<8x8xf32>
      %95 = tpu.matmul %93, %89, %cst_63 {dimension_numbers = #tpu.dot_dimension_numbers<[1], [0], [0], [1], [0, 0, 1, 1], [], []>} : vector<8x8xf32>, vector<8x8xf32>, vector<8x8xf32> -> vector<8x8xf32>
      %c8_i32 = arith.constant 8 : i32
      %cst_64 = arith.constant dense<0.000000e+00> : vector<8x8xf32>
      %96 = tpu.matmul %95, %94, %cst_64 {dimension_numbers = #tpu.dot_dimension_numbers<[1], [0], [0], [1], [0, 0, 1, 1], [], []>} : vector<8x8xf32>, vector<8x8xf32>, vector<8x8xf32> -> vector<8x8xf32>
      %cst_65 = arith.constant 5.000000e-01 : f32
      %97 = vector.broadcast %cst_65 : f32 to vector<8x8xf32>
      %98 = arith.mulf %97, %96 : vector<8x8xf32>
      %99 = arith.subf %45, %98 : vector<8x8xf32>
      %cst_66 = arith.constant dense<0.000000e+00> : vector<8x8xf32>
      %100 = tpu.matmul %94, %99, %cst_66 {dimension_numbers = #tpu.dot_dimension_numbers<[1], [0], [0], [1], [0, 0, 1, 1], [], []>} : vector<8x8xf32>, vector<8x8xf32>, vector<8x8xf32> -> vector<8x8xf32>
      %cst_67 = arith.constant dense<0.000000e+00> : vector<8x8xf32>
      %101 = tpu.matmul %99, %95, %cst_67 {dimension_numbers = #tpu.dot_dimension_numbers<[1], [0], [0], [1], [0, 0, 1, 1], [], []>} : vector<8x8xf32>, vector<8x8xf32>, vector<8x8xf32> -> vector<8x8xf32>
      %c9_i32 = arith.constant 9 : i32
      %cst_68 = arith.constant dense<0.000000e+00> : vector<8x8xf32>
      %102 = tpu.matmul %101, %100, %cst_68 {dimension_numbers = #tpu.dot_dimension_numbers<[1], [0], [0], [1], [0, 0, 1, 1], [], []>} : vector<8x8xf32>, vector<8x8xf32>, vector<8x8xf32> -> vector<8x8xf32>
      %cst_69 = arith.constant 5.000000e-01 : f32
      %103 = vector.broadcast %cst_69 : f32 to vector<8x8xf32>
      %104 = arith.mulf %103, %102 : vector<8x8xf32>
      %105 = arith.subf %45, %104 : vector<8x8xf32>
      %cst_70 = arith.constant dense<0.000000e+00> : vector<8x8xf32>
      %106 = tpu.matmul %100, %105, %cst_70 {dimension_numbers = #tpu.dot_dimension_numbers<[1], [0], [0], [1], [0, 0, 1, 1], [], []>} : vector<8x8xf32>, vector<8x8xf32>, vector<8x8xf32> -> vector<8x8xf32>
      %cst_71 = arith.constant dense<0.000000e+00> : vector<8x8xf32>
      %107 = tpu.matmul %105, %101, %cst_71 {dimension_numbers = #tpu.dot_dimension_numbers<[1], [0], [0], [1], [0, 0, 1, 1], [], []>} : vector<8x8xf32>, vector<8x8xf32>, vector<8x8xf32> -> vector<8x8xf32>
      %c10_i32 = arith.constant 10 : i32
      %cst_72 = arith.constant dense<0.000000e+00> : vector<8x8xf32>
      %108 = tpu.matmul %107, %106, %cst_72 {dimension_numbers = #tpu.dot_dimension_numbers<[1], [0], [0], [1], [0, 0, 1, 1], [], []>} : vector<8x8xf32>, vector<8x8xf32>, vector<8x8xf32> -> vector<8x8xf32>
      %cst_73 = arith.constant 5.000000e-01 : f32
      %109 = vector.broadcast %cst_73 : f32 to vector<8x8xf32>
      %110 = arith.mulf %109, %108 : vector<8x8xf32>
      %111 = arith.subf %45, %110 : vector<8x8xf32>
      %cst_74 = arith.constant dense<0.000000e+00> : vector<8x8xf32>
      %112 = tpu.matmul %106, %111, %cst_74 {dimension_numbers = #tpu.dot_dimension_numbers<[1], [0], [0], [1], [0, 0, 1, 1], [], []>} : vector<8x8xf32>, vector<8x8xf32>, vector<8x8xf32> -> vector<8x8xf32>
      %cst_75 = arith.constant dense<0.000000e+00> : vector<8x8xf32>
      %113 = tpu.matmul %111, %107, %cst_75 {dimension_numbers = #tpu.dot_dimension_numbers<[1], [0], [0], [1], [0, 0, 1, 1], [], []>} : vector<8x8xf32>, vector<8x8xf32>, vector<8x8xf32> -> vector<8x8xf32>
      %c11_i32 = arith.constant 11 : i32
      %cst_76 = arith.constant dense<0.000000e+00> : vector<8x8xf32>
      %114 = tpu.matmul %113, %112, %cst_76 {dimension_numbers = #tpu.dot_dimension_numbers<[1], [0], [0], [1], [0, 0, 1, 1], [], []>} : vector<8x8xf32>, vector<8x8xf32>, vector<8x8xf32> -> vector<8x8xf32>
      %cst_77 = arith.constant 5.000000e-01 : f32
      %115 = vector.broadcast %cst_77 : f32 to vector<8x8xf32>
      %116 = arith.mulf %115, %114 : vector<8x8xf32>
      %117 = arith.subf %45, %116 : vector<8x8xf32>
      %cst_78 = arith.constant dense<0.000000e+00> : vector<8x8xf32>
      %118 = tpu.matmul %112, %117, %cst_78 {dimension_numbers = #tpu.dot_dimension_numbers<[1], [0], [0], [1], [0, 0, 1, 1], [], []>} : vector<8x8xf32>, vector<8x8xf32>, vector<8x8xf32> -> vector<8x8xf32>
      %cst_79 = arith.constant dense<0.000000e+00> : vector<8x8xf32>
      %119 = tpu.matmul %117, %113, %cst_79 {dimension_numbers = #tpu.dot_dimension_numbers<[1], [0], [0], [1], [0, 0, 1, 1], [], []>} : vector<8x8xf32>, vector<8x8xf32>, vector<8x8xf32> -> vector<8x8xf32>
      %c12_i32 = arith.constant 12 : i32
      %cst_80 = arith.constant dense<0.000000e+00> : vector<8x8xf32>
      %120 = tpu.matmul %119, %118, %cst_80 {dimension_numbers = #tpu.dot_dimension_numbers<[1], [0], [0], [1], [0, 0, 1, 1], [], []>} : vector<8x8xf32>, vector<8x8xf32>, vector<8x8xf32> -> vector<8x8xf32>
      %cst_81 = arith.constant 5.000000e-01 : f32
      %121 = vector.broadcast %cst_81 : f32 to vector<8x8xf32>
      %122 = arith.mulf %121, %120 : vector<8x8xf32>
      %123 = arith.subf %45, %122 : vector<8x8xf32>
      %cst_82 = arith.constant dense<0.000000e+00> : vector<8x8xf32>
      %124 = tpu.matmul %118, %123, %cst_82 {dimension_numbers = #tpu.dot_dimension_numbers<[1], [0], [0], [1], [0, 0, 1, 1], [], []>} : vector<8x8xf32>, vector<8x8xf32>, vector<8x8xf32> -> vector<8x8xf32>
      %cst_83 = arith.constant dense<0.000000e+00> : vector<8x8xf32>
      %125 = tpu.matmul %123, %119, %cst_83 {dimension_numbers = #tpu.dot_dimension_numbers<[1], [0], [0], [1], [0, 0, 1, 1], [], []>} : vector<8x8xf32>, vector<8x8xf32>, vector<8x8xf32> -> vector<8x8xf32>
      %c13_i32 = arith.constant 13 : i32
      %cst_84 = arith.constant dense<0.000000e+00> : vector<8x8xf32>
      %126 = tpu.matmul %125, %124, %cst_84 {dimension_numbers = #tpu.dot_dimension_numbers<[1], [0], [0], [1], [0, 0, 1, 1], [], []>} : vector<8x8xf32>, vector<8x8xf32>, vector<8x8xf32> -> vector<8x8xf32>
      %cst_85 = arith.constant 5.000000e-01 : f32
      %127 = vector.broadcast %cst_85 : f32 to vector<8x8xf32>
      %128 = arith.mulf %127, %126 : vector<8x8xf32>
      %129 = arith.subf %45, %128 : vector<8x8xf32>
      %cst_86 = arith.constant dense<0.000000e+00> : vector<8x8xf32>
      %130 = tpu.matmul %124, %129, %cst_86 {dimension_numbers = #tpu.dot_dimension_numbers<[1], [0], [0], [1], [0, 0, 1, 1], [], []>} : vector<8x8xf32>, vector<8x8xf32>, vector<8x8xf32> -> vector<8x8xf32>
      %cst_87 = arith.constant dense<0.000000e+00> : vector<8x8xf32>
      %131 = tpu.matmul %129, %125, %cst_87 {dimension_numbers = #tpu.dot_dimension_numbers<[1], [0], [0], [1], [0, 0, 1, 1], [], []>} : vector<8x8xf32>, vector<8x8xf32>, vector<8x8xf32> -> vector<8x8xf32>
      %c14_i32 = arith.constant 14 : i32
      %cst_88 = arith.constant dense<0.000000e+00> : vector<8x8xf32>
      %132 = tpu.matmul %131, %130, %cst_88 {dimension_numbers = #tpu.dot_dimension_numbers<[1], [0], [0], [1], [0, 0, 1, 1], [], []>} : vector<8x8xf32>, vector<8x8xf32>, vector<8x8xf32> -> vector<8x8xf32>
      %cst_89 = arith.constant 5.000000e-01 : f32
      %133 = vector.broadcast %cst_89 : f32 to vector<8x8xf32>
      %134 = arith.mulf %133, %132 : vector<8x8xf32>
      %135 = arith.subf %45, %134 : vector<8x8xf32>
      %cst_90 = arith.constant dense<0.000000e+00> : vector<8x8xf32>
      %136 = tpu.matmul %130, %135, %cst_90 {dimension_numbers = #tpu.dot_dimension_numbers<[1], [0], [0], [1], [0, 0, 1, 1], [], []>} : vector<8x8xf32>, vector<8x8xf32>, vector<8x8xf32> -> vector<8x8xf32>
      %cst_91 = arith.constant dense<0.000000e+00> : vector<8x8xf32>
      %137 = tpu.matmul %135, %131, %cst_91 {dimension_numbers = #tpu.dot_dimension_numbers<[1], [0], [0], [1], [0, 0, 1, 1], [], []>} : vector<8x8xf32>, vector<8x8xf32>, vector<8x8xf32> -> vector<8x8xf32>
      %138 = math.sqrt %43 : f32
      %139 = vector.broadcast %138 : f32 to vector<8x8xf32>
      %140 = arith.mulf %136, %139 : vector<8x8xf32>
      %c0_92 = arith.constant 0 : index
      %c0_93 = arith.constant 0 : index
      %141 = vector.load %arg4[%c0_92, %c0_93] : memref<8x8xf32, #tpu.memory_space<vmem>>, vector<8x8xf32>
      tpu.vector_store %arg4[%c0_92, %c0_93], %140 {strides = array<i32>} : memref<8x8xf32, #tpu.memory_space<vmem>>, vector<8x8xf32>,
    } else {
    }
    return
  }
  func.func @transform_0(%arg0: i32) -> (i32, i32) {
    %c0_i32 = arith.constant 0 : i32
    %c0_i32_0 = arith.constant 0 : i32
    return %c0_i32, %arg0 : i32, i32
  }
  func.func @transform_1(%arg0: i32) -> (i32, i32) {
    %c0_i32 = arith.constant 0 : i32
    %c0_i32_0 = arith.constant 0 : i32
    %c0_i32_1 = arith.constant 0 : i32
    return %c0_i32, %c0_i32_0 : i32, i32
  }
  func.func @transform_2(%arg0: i32) -> (i32, i32) {
    %c0_i32 = arith.constant 0 : i32
    %c0_i32_0 = arith.constant 0 : i32
    %c0_i32_1 = arith.constant 0 : i32
    return %c0_i32, %c0_i32_0 : i32, i32
  }
  func.func @transform_3(%arg0: i32) -> (i32, i32) {
    %c0_i32 = arith.constant 0 : i32
    %c0_i32_0 = arith.constant 0 : i32
    %c0_i32_1 = arith.constant 0 : i32
    return %c0_i32, %c0_i32_0 : i32, i32
  }
}

</mosaic_0001>

<llo_original>
// kernel: tpu_custom_call.1
$region0: #{tpu_custom_call.1}
  #allocation0 [shape = 'u32[]', space=smem, size = 0x4, offset = 0x4, fixed_abs, tag = 'smem constant byte address 0x4 - core index']
  #allocation1 [shape = 'u32[144,128]{1,0:T(1,128)}', space=vmem, size = 0x12000, scoped, tag = 'internal scratch']
  #allocation2 [shape = 'f32[8,1]{1,0:T(8,128)}', space=vmem, size = 0x1000, scoped, tag = 'scratch operand']
  #allocation3 [shape = 'f32[8,8]{1,0:T(8,128)}', space=vmem, size = 0x1000, scoped, tag = 'scratch operand']
  %s0 = inlined_call_operand.hbm [shape: f32[8,256], index: 0, kind: input, shape index: {}]
  %s1 = inlined_call_operand.vmem [shape: f32[8,1], index: 1, kind: output, shape index: {0}]
  %s2 = inlined_call_operand.hbm [shape: f32[8,8], index: 2, kind: output, shape index: {1}]
  %s3 = inlined_call_operand.hbm [shape: f32[8,8], index: 3, kind: output, shape index: {2}]
  %4 = xla_tuple %s1, %s2, %s3
  %s5 = sld [smem:[#allocation0]]
  $region42: #{tpu_custom_call.1} parent=0
    _
  %s7 = ssub.s32 1, %s5
  %s8 = scalar_select 0, %s7, %s5
  $region1: #{tpu_custom_call.1} parent=0
    #allocation4 [shape = 'u8[8192]{0}', space=vmem, size = 0x2000, scoped, tag = 'input window, operand 0, single buffered']
    #allocation5 [shape = 's32[1]{0}', space=sflag, size = 0x4, scoped, tag = 'scoped memory for tpu_custom_call.1']
    #allocation6 [shape = 's32[1]{0}', space=sflag, size = 0x4, scoped, tag = 'scoped memory for tpu_custom_call.1']
    #allocation7 [shape = 'u8[4096]{0}', space=vmem, size = 0x1000, scoped, tag = 'output window, operand 1, single buffered']
    #allocation8 [shape = 'u8[4096]{0}', space=vmem, size = 0x1000, scoped, tag = 'output window, operand 2, single buffered']
    #allocation9 [shape = 's32[1]{0}', space=sflag, size = 0x4, scoped, tag = 'scoped memory for tpu_custom_call.1']
    %9 = vsyncpa [#allocation5], 0
    %10 = vsyncpa [#allocation6], 0
    %11 = vsyncpa [#allocation9], 0
    // Predicated region
    $region2: #{tpu_custom_call.1} parent=1 // pred_check
      _
    $region3: #{tpu_custom_call.1} parent=1 // pred_check_branch
      %13 = sbr.rel (0) target = $region5
    $region4: #{tpu_custom_call.1} parent=1 // pred_region
      %s15 = ssub.s32 256, 256
      %16 = vsyncadd [#allocation5], %s15
      %s18 = sshll.u32 [#allocation4], 4
      %s19 = int_to_ptr.vmem [resolvable:$true] %s18
      %21 = dma.hbm_to_vmem [thread:$0]  %s0, 256, %s19, [#allocation5]
    $region5: #{tpu_custom_call.1} parent=1 // pred_fallthru
      _
    // Predicated region
    $region6: #{tpu_custom_call.1} parent=1 // pred_check
      _
    $region7: #{tpu_custom_call.1} parent=1 // pred_check_branch
      %23 = sbr.rel (0) target = $region9
    $region8: #{tpu_custom_call.1} parent=1 // pred_region
      %24 = dma.done [#allocation5], 256
    $region9: #{tpu_custom_call.1} parent=1 // pred_fallthru
      _
    %p25 = scmp.eq.s32.totalorder 0, 0
    // Predicated region
    $region10: #{tpu_custom_call.1} parent=1 // pred_check
      %p26 = pneg %p25
    $region11: #{tpu_custom_call.1} parent=1 // pred_check_branch
      %28 = sbr.rel (%p26) target = $region13
    $region12: #{tpu_custom_call.1} parent=1 // pred_region
      %vm29 = vcmask 7168
      %30 = vst.msk [vmem:[#allocation2] sm:$0xff] %vm29, 0.0
      %vm31 = vcmask 64512
      %32 = vst.msk [vmem:[#allocation3] sm:$0xff] %vm31, 0.0
    $region13: #{tpu_custom_call.1} parent=1 // pred_fallthru
      _
    %v33 = vld [vmem:[#allocation4] sm:$0xff]
    %v34 = vld [vmem:[#allocation4 + $0x8] sm:$0xff]
    %v35 = vld [vmem:[#allocation2] sm:$0xff]
    %v36 = vadd.f32 %v33, %v34
    %37 = vadd.xlane.f32.xlu0 %v36
    %v38 = vpop.xlane.xlu0 %37
    %v39 = vadd.f32 %v35, %v38
    %vm40 = vcmask 7168
    %41 = vst.msk [vmem:[#allocation2] sm:$0xff] %vm40, %v39
    %v42 = vld [vmem:[#allocation3] sm:$0xff]
    %43 = vmatprep.subr.mxu0 %v34
    %44 = vmatpush1.xpose.msra.mxu0 %v33
    %45 = vmatprep.subr.mxu0 0.0
    %46 = vmatpush1.xpose.msra.mxu0 0.0
    %47 = vmatprep.subr.mxu0 0.0
    %48 = vmatpush1.xpose.msra.mxu0 0.0
    %49 = vmatprep.subr.mxu0 0.0
    %50 = vmatpush1.xpose.msra.mxu0 0.0
    %51 = vmatprep.subr.mxu0 0.0
    %52 = vmatpush1.xpose.msra.mxu0 0.0
    %53 = vmatprep.subr.mxu0 0.0
    %54 = vmatpush1.xpose.msra.mxu0 0.0
    %55 = vmatprep.subr.mxu0 0.0
    %56 = vmatpush1.xpose.msra.mxu0 0.0
    %57 = vmatprep.subr.mxu0 0.0
    %58 = vmatpush1.xpose.msra.mxu0 0.0
    %59 = vmatprep.subr.mxu0 0.0
    %60 = vmatpush1.xpose.msra.mxu0 0.0
    %61 = vmatprep.subr.mxu0 0.0
    %62 = vmatpush1.xpose.msra.mxu0 0.0
    %63 = vmatprep.subr.mxu0 0.0
    %64 = vmatpush1.xpose.msra.mxu0 0.0
    %65 = vmatprep.subr.mxu0 0.0
    %66 = vmatpush1.xpose.msra.mxu0 0.0
    %67 = vmatprep.subr.mxu0 0.0
    %68 = vmatpush1.xpose.msra.mxu0 0.0
    %69 = vmatprep.subr.mxu0 0.0
    %70 = vmatpush1.xpose.msra.mxu0 0.0
    %71 = vmatprep.subr.mxu0 0.0
    %72 = vmatpush1.xpose.msra.mxu0 0.0
    %73 = vmatprep.subr.mxu0 0.0
    %74 = vmatpush1.xpose.msra.mxu0 0.0
    %75 = vmatprep.subr.mxu0 0.0
    %76 = vmatpush1.xpose.msra.mxu0 0.0
    %77 = vmatprep.subr.mxu0 0.0
    %78 = vmatpush1.xpose.msra.mxu0 0.0
    %79 = vmatprep.subr.mxu0 0.0
    %80 = vmatpush1.xpose.msra.mxu0 0.0
    %81 = vmatprep.subr.mxu0 0.0
    %82 = vmatpush1.xpose.msra.mxu0 0.0
    %83 = vmatprep.subr.mxu0 0.0
    %84 = vmatpush1.xpose.msra.mxu0 0.0
    %85 = vmatprep.subr.mxu0 0.0
    %86 = vmatpush1.xpose.msra.mxu0 0.0
    %87 = vmatprep.subr.mxu0 0.0
    %88 = vmatpush1.xpose.msra.mxu0 0.0
    %89 = vmatprep.subr.mxu0 0.0
    %90 = vmatpush1.xpose.msra.mxu0 0.0
    %91 = vmatprep.subr.mxu0 0.0
    %92 = vmatpush1.xpose.msra.mxu0 0.0
    %93 = vmatprep.subr.mxu0 0.0
    %94 = vmatpush1.xpose.msra.mxu0 0.0
    %95 = vmatprep.subr.mxu0 0.0
    %96 = vmatpush1.xpose.msra.mxu0 0.0
    %97 = vmatprep.subr.mxu0 0.0
    %98 = vmatpush1.xpose.msra.mxu0 0.0
    %99 = vmatprep.subr.mxu0 0.0
    %100 = vmatpush1.xpose.msra.mxu0 0.0
    %101 = vmatprep.subr.mxu0 0.0
    %102 = vmatpush1.xpose.msra.mxu0 0.0
    %103 = vmatprep.subr.mxu0 0.0
    %104 = vmatpush1.xpose.msra.mxu0 0.0
    %105 = vmatprep.subr.mxu0 0.0
    %106 = vmatpush1.xpose.msra.mxu0 0.0
    %107 = vmatprep.mubr.f32.mxu0 %v34
    %108 = vmatmul.mubr.f32.gmra.mrb[0].mxu0 %v33
    %v109 = vpop.f32.mrb[0].mxu0
    %v110 = vadd.f32 0.0, %v109
    %v111 = vpop.f32.mrb[0].mxu0
    %112 = vdwg.mxu0
    %v113 = vadd.f32 %v42, %v110
    %vm114 = vcmask 64512
    %115 = vst.msk [vmem:[#allocation3] sm:$0xff] %vm114, %v113
    // Predicated region
    $region14: #{tpu_custom_call.1} parent=1 // pred_check
      %p116 = pneg %p25
    $region15: #{tpu_custom_call.1} parent=1 // pred_check_branch
      %118 = sbr.rel (%p116) target = $region17
    $region16: #{tpu_custom_call.1} parent=1 // pred_region
      %v119 = vlaneseq
      %v120 = vshrl.u32 %v119, 7
      %v121 = vlaneseq
      %v122 = vand.u32 %v121, 127
      %vm123 = vcmp.eq.s32.totalorder %v120, %v122
      %v124 = vsel %vm123, 1.0, 0.0
      %v125 = vld [vmem:[#allocation2] sm:$0xff]
      %v126 = vrcp.pop 256.0
      %v127 = vmul.f32 %v125, %v126
      %v129 = vsel %vm40, %v127, 0
      %131 = vmatprep.subr.mxu0 0.0
      %132 = vmatpush1.xpose.msra.mxu0 %v129
      %133 = vmatprep.subr.mxu0 0.0
      %134 = vmatpush1.xpose.msra.mxu0 0.0
      %135 = vmatprep.subr.mxu0 0.0
      %136 = vmatpush1.xpose.msra.mxu0 0.0
      %137 = vmatprep.subr.mxu0 0.0
      %138 = vmatpush1.xpose.msra.mxu0 0.0
      %139 = vmatprep.subr.mxu0 0.0
      %140 = vmatpush1.xpose.msra.mxu0 0.0
      %141 = vmatprep.subr.mxu0 0.0
      %142 = vmatpush1.xpose.msra.mxu0 0.0
      %143 = vmatprep.subr.mxu0 0.0
      %144 = vmatpush1.xpose.msra.mxu0 0.0
      %145 = vmatprep.subr.mxu0 0.0
      %146 = vmatpush1.xpose.msra.mxu0 0.0
      %147 = vmatprep.subr.mxu0 0.0
      %148 = vmatpush1.xpose.msra.mxu0 0.0
      %149 = vmatprep.subr.mxu0 0.0
      %150 = vmatpush1.xpose.msra.mxu0 0.0
      %151 = vmatprep.subr.mxu0 0.0
      %152 = vmatpush1.xpose.msra.mxu0 0.0
      %153 = vmatprep.subr.mxu0 0.0
      %154 = vmatpush1.xpose.msra.mxu0 0.0
      %155 = vmatprep.subr.mxu0 0.0
      %156 = vmatpush1.xpose.msra.mxu0 0.0
      %157 = vmatprep.subr.mxu0 0.0
      %158 = vmatpush1.xpose.msra.mxu0 0.0
      %159 = vmatprep.subr.mxu0 0.0
      %160 = vmatpush1.xpose.msra.mxu0 0.0
      %161 = vmatprep.subr.mxu0 0.0
      %162 = vmatpush1.xpose.msra.mxu0 0.0
      %163 = vmatprep.subr.mxu0 0.0
      %164 = vmatpush1.xpose.msra.mxu0 0.0
      %165 = vmatprep.subr.mxu0 0.0
      %166 = vmatpush1.xpose.msra.mxu0 0.0
      %167 = vmatprep.subr.mxu0 0.0
      %168 = vmatpush1.xpose.msra.mxu0 0.0
      %169 = vmatprep.subr.mxu0 0.0
      %170 = vmatpush1.xpose.msra.mxu0 0.0
      %171 = vmatprep.subr.mxu0 0.0
      %172 = vmatpush1.xpose.msra.mxu0 0.0
      %173 = vmatprep.subr.mxu0 0.0
      %174 = vmatpush1.xpose.msra.mxu0 0.0
      %175 = vmatprep.subr.mxu0 0.0
      %176 = vmatpush1.xpose.msra.mxu0 0.0
      %177 = vmatprep.subr.mxu0 0.0
      %178 = vmatpush1.xpose.msra.mxu0 0.0
      %179 = vmatprep.subr.mxu0 0.0
      %180 = vmatpush1.xpose.msra.mxu0 0.0
      %181 = vmatprep.subr.mxu0 0.0
      %182 = vmatpush1.xpose.msra.mxu0 0.0
      %183 = vmatprep.subr.mxu0 0.0
      %184 = vmatpush1.xpose.msra.mxu0 0.0
      %185 = vmatprep.subr.mxu0 0.0
      %186 = vmatpush1.xpose.msra.mxu0 0.0
      %187 = vmatprep.subr.mxu0 0.0
      %188 = vmatpush1.xpose.msra.mxu0 0.0
      %189 = vmatprep.subr.mxu0 0.0
      %190 = vmatpush1.xpose.msra.mxu0 0.0
      %191 = vmatprep.subr.mxu0 0.0
      %192 = vmatpush1.xpose.msra.mxu0 0.0
      %193 = vmatprep.subr.mxu0 0.0
      %194 = vmatpush1.xpose.msra.mxu0 0.0
      %195 = vmatprep.mubr.f32.mxu0 0.0
      %196 = vmatmul.mubr.f32.gmra.mrb[0].mxu0 %v129
      %v197 = vpop.f32.mrb[0].mxu0
      %v198 = vadd.f32 0.0, %v197
      %v199 = vpop.f32.mrb[0].mxu0
      %200 = vdwg.mxu0
      %v201 = vld [vmem:[#allocation3] sm:$0xff]
      %v202 = vmul.f32 %v198, 256.0
      %v203 = vsub.f32 %v201, %v202
      %v204 = vmul.f32 %v124, 1e-06
      %v205 = vadd.f32 %v203, %v204
      %v206 = vmul.f32 %v205, %v126
      %207 = vst.msk [vmem:[%s1] sm:$0xff] %vm40, %v127
      %208 = vst.msk [vmem:[#allocation7] sm:$0xff] %vm114, %v206
      %v209 = vmul.f32 %v206, %v206
      %v210 = vsel %vm114, %v209, 0.0
      %211 = vadd.xlane.f32.xlu0 %v210
      %v212 = vpop.xlane.xlu0 %211
      %v213 = vrot.slane %v212, 4
      %v214 = vadd.f32 %v212, %v213
      %v215 = vrot.slane %v214, 2
      %v216 = vadd.f32 %v214, %v215
      %v217 = vrot.slane %v216, 1
      %v218 = vadd.f32 %v216, %v217
      %s219 = vtos %v218
      %s220 = smax.f32 %s219, 1e-30
      %v221 = vstv %s220
      %v222 = vrsqrt.pop %v221
      %v223 = vmul.f32 %v221, %v222
      %vm224 = vcmp.eq.f32.partialorder %v221, inf
      %v225 = vsel %vm224, %v221, %v223
      %vm226 = vcmp.eq.f32.partialorder %v221, 0.0
      %v227 = vand.u32 %v221, 2147483648
      %v228 = vsel %vm226, %v227, %v225
      %s229 = vtos %v228
      %v230 = vmul.f32 %v124, 1.5
      %v231 = vstv %s229
      %v232 = vrcp.pop %v231
      %v233 = vmul.f32 %v206, %v232
      %v235 = vsel %vm114, %v124, 0
      %237 = vmatprep.subr.mxu0 0.0
      %238 = vmatpush1.msra.mxu0 %v233
      %239 = vmatprep.subr.mxu0 0.0
      %240 = vmatpush1.msra.mxu0 0.0
      %241 = vmatprep.subr.mxu0 0.0
      %242 = vmatpush1.msra.mxu0 0.0
      %243 = vmatprep.subr.mxu0 0.0
      %244 = vmatpush1.msra.mxu0 0.0
      %245 = vmatprep.subr.mxu0 0.0
      %246 = vmatpush1.msra.mxu0 0.0
      %247 = vmatprep.subr.mxu0 0.0
      %248 = vmatpush1.msra.mxu0 0.0
      %249 = vmatprep.subr.mxu0 0.0
      %250 = vmatpush1.msra.mxu0 0.0
      %251 = vmatprep.subr.mxu0 0.0
      %252 = vmatpush1.msra.mxu0 0.0
      %253 = vmatprep.subr.mxu0 0.0
      %254 = vmatpush1.msra.mxu0 0.0
      %255 = vmatprep.subr.mxu0 0.0
      %256 = vmatpush1.msra.mxu0 0.0
      %257 = vmatprep.subr.mxu0 0.0
      %258 = vmatpush1.msra.mxu0 0.0
      %259 = vmatprep.subr.mxu0 0.0
      %260 = vmatpush1.msra.mxu0 0.0
      %261 = vmatprep.subr.mxu0 0.0
      %262 = vmatpush1.msra.mxu0 0.0
      %263 = vmatprep.subr.mxu0 0.0
      %264 = vmatpush1.msra.mxu0 0.0
      %265 = vmatprep.subr.mxu0 0.0
      %266 = vmatpush1.msra.mxu0 0.0
      %267 = vmatprep.subr.mxu0 0.0
      %268 = vmatpush1.msra.mxu0 0.0
      %269 = vmatprep.subr.mxu0 0.0
      %270 = vmatpush1.msra.mxu0 0.0
      %271 = vmatprep.subr.mxu0 0.0
      %272 = vmatpush1.msra.mxu0 0.0
      %273 = vmatprep.subr.mxu0 0.0
      %274 = vmatpush1.msra.mxu0 0.0
      %275 = vmatprep.subr.mxu0 0.0
      %276 = vmatpush1.msra.mxu0 0.0
      %277 = vmatprep.subr.mxu0 0.0
      %278 = vmatpush1.msra.mxu0 0.0
      %279 = vmatprep.subr.mxu0 0.0
      %280 = vmatpush1.msra.mxu0 0.0
      %281 = vmatprep.subr.mxu0 0.0
      %282 = vmatpush1.msra.mxu0 0.0
      %283 = vmatprep.subr.mxu0 0.0
      %284 = vmatpush1.msra.mxu0 0.0
      %285 = vmatprep.subr.mxu0 0.0
      %286 = vmatpush1.msra.mxu0 0.0
      %287 = vmatprep.subr.mxu0 0.0
      %288 = vmatpush1.msra.mxu0 0.0
      %289 = vmatprep.subr.mxu0 0.0
      %290 = vmatpush1.msra.mxu0 0.0
      %291 = vmatprep.subr.mxu0 0.0
      %292 = vmatpush1.msra.mxu0 0.0
      %293 = vmatprep.subr.mxu0 0.0
      %294 = vmatpush1.msra.mxu0 0.0
      %295 = vmatprep.subr.mxu0 0.0
      %296 = vmatpush1.msra.mxu0 0.0
      %297 = vmatprep.subr.mxu0 0.0
      %298 = vmatpush1.msra.mxu0 0.0
      %299 = vmatprep.subr.mxu0 0.0
      %300 = vmatpush1.msra.mxu0 0.0
      %301 = vmatprep.mubr.f32.mxu0 0.0
      %302 = vmatmul.mubr.f32.gmra.mrb[0].mxu0 %v235
      %v303 = vpop.f32.mrb[0].mxu0
      %v304 = vadd.f32 0.0, %v303
      %v305 = vpop.f32.mrb[0].mxu0
      %306 = vdwg.mxu0
      %v307 = vmul.f32 %v304, 0.5
      %v308 = vsub.f32 %v230, %v307
      %v310 = vsel %vm114, %v233, 0
      %312 = vmatprep.subr.mxu0 0.0
      %313 = vmatpush1.msra.mxu0 %v308
      %314 = vmatprep.subr.mxu0 0.0
      %315 = vmatpush1.msra.mxu0 0.0
      %316 = vmatprep.subr.mxu0 0.0
      %317 = vmatpush1.msra.mxu0 0.0
      %318 = vmatprep.subr.mxu0 0.0
      %319 = vmatpush1.msra.mxu0 0.0
      %320 = vmatprep.subr.mxu0 0.0
      %321 = vmatpush1.msra.mxu0 0.0
      %322 = vmatprep.subr.mxu0 0.0
      %323 = vmatpush1.msra.mxu0 0.0
      %324 = vmatprep.subr.mxu0 0.0
      %325 = vmatpush1.msra.mxu0 0.0
      %326 = vmatprep.subr.mxu0 0.0
      %327 = vmatpush1.msra.mxu0 0.0
      %328 = vmatprep.subr.mxu0 0.0
      %329 = vmatpush1.msra.mxu0 0.0
      %330 = vmatprep.subr.mxu0 0.0
      %331 = vmatpush1.msra.mxu0 0.0
      %332 = vmatprep.subr.mxu0 0.0
      %333 = vmatpush1.msra.mxu0 0.0
      %334 = vmatprep.subr.mxu0 0.0
      %335 = vmatpush1.msra.mxu0 0.0
      %336 = vmatprep.subr.mxu0 0.0
      %337 = vmatpush1.msra.mxu0 0.0
      %338 = vmatprep.subr.mxu0 0.0
      %339 = vmatpush1.msra.mxu0 0.0
      %340 = vmatprep.subr.mxu0 0.0
      %341 = vmatpush1.msra.mxu0 0.0
      %342 = vmatprep.subr.mxu0 0.0
      %343 = vmatpush1.msra.mxu0 0.0
      %344 = vmatprep.subr.mxu0 0.0
      %345 = vmatpush1.msra.mxu0 0.0
      %346 = vmatprep.subr.mxu0 0.0
      %347 = vmatpush1.msra.mxu0 0.0
      %348 = vmatprep.subr.mxu0 0.0
      %349 = vmatpush1.msra.mxu0 0.0
      %350 = vmatprep.subr.mxu0 0.0
      %351 = vmatpush1.msra.mxu0 0.0
      %352 = vmatprep.subr.mxu0 0.0
      %353 = vmatpush1.msra.mxu0 0.0
      %354 = vmatprep.subr.mxu0 0.0
      %355 = vmatpush1.msra.mxu0 0.0
      %356 = vmatprep.subr.mxu0 0.0
      %357 = vmatpush1.msra.mxu0 0.0
      %358 = vmatprep.subr.mxu0 0.0
      %359 = vmatpush1.msra.mxu0 0.0
      %360 = vmatprep.subr.mxu0 0.0
      %361 = vmatpush1.msra.mxu0 0.0
      %362 = vmatprep.subr.mxu0 0.0
      %363 = vmatpush1.msra.mxu0 0.0
      %364 = vmatprep.subr.mxu0 0.0
      %365 = vmatpush1.msra.mxu0 0.0
      %366 = vmatprep.subr.mxu0 0.0
      %367 = vmatpush1.msra.mxu0 0.0
      %368 = vmatprep.subr.mxu0 0.0
      %369 = vmatpush1.msra.mxu0 0.0
      %370 = vmatprep.subr.mxu0 0.0
      %371 = vmatpush1.msra.mxu0 0.0
      %372 = vmatprep.subr.mxu0 0.0
      %373 = vmatpush1.msra.mxu0 0.0
      %374 = vmatprep.subr.mxu0 0.0
      %375 = vmatpush1.msra.mxu0 0.0
      %376 = vmatprep.mubr.f32.mxu0 0.0
      %377 = vmatmul.mubr.f32.gmra.mrb[0].mxu0 %v310
      %v378 = vpop.f32.mrb[0].mxu0
      %v379 = vadd.f32 0.0, %v378
      %v380 = vpop.f32.mrb[0].mxu0
      %381 = vdwg.mxu0
      %v383 = vsel %vm114, %v308, 0
      %385 = vmatprep.subr.mxu0 0.0
      %386 = vmatpush1.msra.mxu0 %v124
      %387 = vmatprep.subr.mxu0 0.0
      %388 = vmatpush1.msra.mxu0 0.0
      %389 = vmatprep.subr.mxu0 0.0
      %390 = vmatpush1.msra.mxu0 0.0
      %391 = vmatprep.subr.mxu0 0.0
      %392 = vmatpush1.msra.mxu0 0.0
      %393 = vmatprep.subr.mxu0 0.0
      %394 = vmatpush1.msra.mxu0 0.0
      %395 = vmatprep.subr.mxu0 0.0
      %396 = vmatpush1.msra.mxu0 0.0
      %397 = vmatprep.subr.mxu0 0.0
      %398 = vmatpush1.msra.mxu0 0.0
      %399 = vmatprep.subr.mxu0 0.0
      %400 = vmatpush1.msra.mxu0 0.0
      %401 = vmatprep.subr.mxu0 0.0
      %402 = vmatpush1.msra.mxu0 0.0
      %403 = vmatprep.subr.mxu0 0.0
      %404 = vmatpush1.msra.mxu0 0.0
      %405 = vmatprep.subr.mxu0 0.0
      %406 = vmatpush1.msra.mxu0 0.0
      %407 = vmatprep.subr.mxu0 0.0
      %408 = vmatpush1.msra.mxu0 0.0
      %409 = vmatprep.subr.mxu0 0.0
      %410 = vmatpush1.msra.mxu0 0.0
      %411 = vmatprep.subr.mxu0 0.0
      %412 = vmatpush1.msra.mxu0 0.0
      %413 = vmatprep.subr.mxu0 0.0
      %414 = vmatpush1.msra.mxu0 0.0
      %415 = vmatprep.subr.mxu0 0.0
      %416 = vmatpush1.msra.mxu0 0.0
      %417 = vmatprep.subr.mxu0 0.0
      %418 = vmatpush1.msra.mxu0 0.0
      %419 = vmatprep.subr.mxu0 0.0
      %420 = vmatpush1.msra.mxu0 0.0
      %421 = vmatprep.subr.mxu0 0.0
      %422 = vmatpush1.msra.mxu0 0.0
      %423 = vmatprep.subr.mxu0 0.0
      %424 = vmatpush1.msra.mxu0 0.0
      %425 = vmatprep.subr.mxu0 0.0
      %426 = vmatpush1.msra.mxu0 0.0
      %427 = vmatprep.subr.mxu0 0.0
      %428 = vmatpush1.msra.mxu0 0.0
      %429 = vmatprep.subr.mxu0 0.0
      %430 = vmatpush1.msra.mxu0 0.0
      %431 = vmatprep.subr.mxu0 0.0
      %432 = vmatpush1.msra.mxu0 0.0
      %433 = vmatprep.subr.mxu0 0.0
      %434 = vmatpush1.msra.mxu0 0.0
      %435 = vmatprep.subr.mxu0 0.0
      %436 = vmatpush1.msra.mxu0 0.0
      %437 = vmatprep.subr.mxu0 0.0
      %438 = vmatpush1.msra.mxu0 0.0
      %439 = vmatprep.subr.mxu0 0.0
      %440 = vmatpush1.msra.mxu0 0.0
      %441 = vmatprep.subr.mxu0 0.0
      %442 = vmatpush1.msra.mxu0 0.0
      %443 = vmatprep.subr.mxu0 0.0
      %444 = vmatpush1.msra.mxu0 0.0
      %445 = vmatprep.subr.mxu0 0.0
      %446 = vmatpush1.msra.mxu0 0.0
      %447 = vmatprep.subr.mxu0 0.0
      %448 = vmatpush1.msra.mxu0 0.0
      %449 = vmatprep.mubr.f32.mxu0 0.0
      %450 = vmatmul.mubr.f32.gmra.mrb[0].mxu0 %v383
      %v451 = vpop.f32.mrb[0].mxu0
      %v452 = vadd.f32 0.0, %v451
      %v453 = vpop.f32.mrb[0].mxu0
      %454 = vdwg.mxu0
      %v456 = vsel %vm114, %v452, 0
      %458 = vmatprep.subr.mxu0 0.0
      %459 = vmatpush1.msra.mxu0 %v379
      %460 = vmatprep.subr.mxu0 0.0
      %461 = vmatpush1.msra.mxu0 0.0
      %462 = vmatprep.subr.mxu0 0.0
      %463 = vmatpush1.msra.mxu0 0.0
      %464 = vmatprep.subr.mxu0 0.0
      %465 = vmatpush1.msra.mxu0 0.0
      %466 = vmatprep.subr.mxu0 0.0
      %467 = vmatpush1.msra.mxu0 0.0
      %468 = vmatprep.subr.mxu0 0.0
      %469 = vmatpush1.msra.mxu0 0.0
      %470 = vmatprep.subr.mxu0 0.0
      %471 = vmatpush1.msra.mxu0 0.0
      %472 = vmatprep.subr.mxu0 0.0
      %473 = vmatpush1.msra.mxu0 0.0
      %474 = vmatprep.subr.mxu0 0.0
      %475 = vmatpush1.msra.mxu0 0.0
      %476 = vmatprep.subr.mxu0 0.0
      %477 = vmatpush1.msra.mxu0 0.0
      %478 = vmatprep.subr.mxu0 0.0
      %479 = vmatpush1.msra.mxu0 0.0
      %480 = vmatprep.subr.mxu0 0.0
      %481 = vmatpush1.msra.mxu0 0.0
      %482 = vmatprep.subr.mxu0 0.0
      %483 = vmatpush1.msra.mxu0 0.0
      %484 = vmatprep.subr.mxu0 0.0
      %485 = vmatpush1.msra.mxu0 0.0
      %486 = vmatprep.subr.mxu0 0.0
      %487 = vmatpush1.msra.mxu0 0.0
      %488 = vmatprep.subr.mxu0 0.0
      %489 = vmatpush1.msra.mxu0 0.0
      %490 = vmatprep.subr.mxu0 0.0
      %491 = vmatpush1.msra.mxu0 0.0
      %492 = vmatprep.subr.mxu0 0.0
      %493 = vmatpush1.msra.mxu0 0.0
      %494 = vmatprep.subr.mxu0 0.0
      %495 = vmatpush1.msra.mxu0 0.0
      %496 = vmatprep.subr.mxu0 0.0
      %497 = vmatpush1.msra.mxu0 0.0
      %498 = vmatprep.subr.mxu0 0.0
      %499 = vmatpush1.msra.mxu0 0.0
      %500 = vmatprep.subr.mxu0 0.0
      %501 = vmatpush1.msra.mxu0 0.0
      %502 = vmatprep.subr.mxu0 0.0
      %503 = vmatpush1.msra.mxu0 0.0
      %504 = vmatprep.subr.mxu0 0.0
      %505 = vmatpush1.msra.mxu0 0.0
      %506 = vmatprep.subr.mxu0 0.0
      %507 = vmatpush1.msra.mxu0 0.0
      %508 = vmatprep.subr.mxu0 0.0
      %509 = vmatpush1.msra.mxu0 0.0
      %510 = vmatprep.subr.mxu0 0.0
      %511 = vmatpush1.msra.mxu0 0.0
      %512 = vmatprep.subr.mxu0 0.0
      %513 = vmatpush1.msra.mxu0 0.0
      %514 = vmatprep.subr.mxu0 0.0
      %515 = vmatpush1.msra.mxu0 0.0
      %516 = vmatprep.subr.mxu0 0.0
      %517 = vmatpush1.msra.mxu0 0.0
      %518 = vmatprep.subr.mxu0 0.0
      %519 = vmatpush1.msra.mxu0 0.0
      %520 = vmatprep.subr.mxu0 0.0
      %521 = vmatpush1.msra.mxu0 0.0
      %522 = vmatprep.mubr.f32.mxu0 0.0
      %523 = vmatmul.mubr.f32.gmra.mrb[0].mxu0 %v456
      %v524 = vpop.f32.mrb[0].mxu0
      %v525 = vadd.f32 0.0, %v524
      %v526 = vpop.f32.mrb[0].mxu0
      %527 = vdwg.mxu0
      %v528 = vmul.f32 %v525, 0.5
      %v529 = vsub.f32 %v230, %v528
      %v531 = vsel %vm114, %v379, 0
      %533 = vmatprep.subr.mxu0 0.0
      %534 = vmatpush1.msra.mxu0 %v529
      %535 = vmatprep.subr.mxu0 0.0
      %536 = vmatpush1.msra.mxu0 0.0
      %537 = vmatprep.subr.mxu0 0.0
      %538 = vmatpush1.msra.mxu0 0.0
      %539 = vmatprep.subr.mxu0 0.0
      %540 = vmatpush1.msra.mxu0 0.0
      %541 = vmatprep.subr.mxu0 0.0
      %542 = vmatpush1.msra.mxu0 0.0
      %543 = vmatprep.subr.mxu0 0.0
      %544 = vmatpush1.msra.mxu0 0.0
      %545 = vmatprep.subr.mxu0 0.0
      %546 = vmatpush1.msra.mxu0 0.0
      %547 = vmatprep.subr.mxu0 0.0
      %548 = vmatpush1.msra.mxu0 0.0
      %549 = vmatprep.subr.mxu0 0.0
      %550 = vmatpush1.msra.mxu0 0.0
      %551 = vmatprep.subr.mxu0 0.0
      %552 = vmatpush1.msra.mxu0 0.0
      %553 = vmatprep.subr.mxu0 0.0
      %554 = vmatpush1.msra.mxu0 0.0
      %555 = vmatprep.subr.mxu0 0.0
      %556 = vmatpush1.msra.mxu0 0.0
      %557 = vmatprep.subr.mxu0 0.0
      %558 = vmatpush1.msra.mxu0 0.0
      %559 = vmatprep.subr.mxu0 0.0
      %560 = vmatpush1.msra.mxu0 0.0
      %561 = vmatprep.subr.mxu0 0.0
      %562 = vmatpush1.msra.mxu0 0.0
      %563 = vmatprep.subr.mxu0 0.0
      %564 = vmatpush1.msra.mxu0 0.0
      %565 = vmatprep.subr.mxu0 0.0
      %566 = vmatpush1.msra.mxu0 0.0
      %567 = vmatprep.subr.mxu0 0.0
      %568 = vmatpush1.msra.mxu0 0.0
      %569 = vmatprep.subr.mxu0 0.0
      %570 = vmatpush1.msra.mxu0 0.0
      %571 = vmatprep.subr.mxu0 0.0
      %572 = vmatpush1.msra.mxu0 0.0
      %573 = vmatprep.subr.mxu0 0.0
      %574 = vmatpush1.msra.mxu0 0.0
      %575 = vmatprep.subr.mxu0 0.0
      %576 = vmatpush1.msra.mxu0 0.0
      %577 = vmatprep.subr.mxu0 0.0
      %578 = vmatpush1.msra.mxu0 0.0
      %579 = vmatprep.subr.mxu0 0.0
      %580 = vmatpush1.msra.mxu0 0.0
      %581 = vmatprep.subr.mxu0 0.0
      %582 = vmatpush1.msra.mxu0 0.0
      %583 = vmatprep.subr.mxu0 0.0
      %584 = vmatpush1.msra.mxu0 0.0
      %585 = vmatprep.subr.mxu0 0.0
      %586 = vmatpush1.msra.mxu0 0.0
      %587 = vmatprep.subr.mxu0 0.0
      %588 = vmatpush1.msra.mxu0 0.0
      %589 = vmatprep.subr.mxu0 0.0
      %590 = vmatpush1.msra.mxu0 0.0
      %591 = vmatprep.subr.mxu0 0.0
      %592 = vmatpush1.msra.mxu0 0.0
      %593 = vmatprep.subr.mxu0 0.0
      %594 = vmatpush1.msra.mxu0 0.0
      %595 = vmatprep.subr.mxu0 0.0
      %596 = vmatpush1.msra.mxu0 0.0
      %597 = vmatprep.mubr.f32.mxu0 0.0
      %598 = vmatmul.mubr.f32.gmra.mrb[0].mxu0 %v531
      %v599 = vpop.f32.mrb[0].mxu0
      %v600 = vadd.f32 0.0, %v599
      %v601 = vpop.f32.mrb[0].mxu0
      %602 = vdwg.mxu0
      %v604 = vsel %vm114, %v529, 0
      %606 = vmatprep.subr.mxu0 0.0
      %607 = vmatpush1.msra.mxu0 %v452
      %608 = vmatprep.subr.mxu0 0.0
      %609 = vmatpush1.msra.mxu0 0.0
      %610 = vmatprep.subr.mxu0 0.0
      %611 = vmatpush1.msra.mxu0 0.0
      %612 = vmatprep.subr.mxu0 0.0
      %613 = vmatpush1.msra.mxu0 0.0
      %614 = vmatprep.subr.mxu0 0.0
      %615 = vmatpush1.msra.mxu0 0.0
      %616 = vmatprep.subr.mxu0 0.0
      %617 = vmatpush1.msra.mxu0 0.0
      %618 = vmatprep.subr.mxu0 0.0
      %619 = vmatpush1.msra.mxu0 0.0
      %620 = vmatprep.subr.mxu0 0.0
      %621 = vmatpush1.msra.mxu0 0.0
      %622 = vmatprep.subr.mxu0 0.0
      %623 = vmatpush1.msra.mxu0 0.0
      %624 = vmatprep.subr.mxu0 0.0
      %625 = vmatpush1.msra.mxu0 0.0
      %626 = vmatprep.subr.mxu0 0.0
      %627 = vmatpush1.msra.mxu0 0.0
      %628 = vmatprep.subr.mxu0 0.0
      %629 = vmatpush1.msra.mxu0 0.0
      %630 = vmatprep.subr.mxu0 0.0
      %631 = vmatpush1.msra.mxu0 0.0
      %632 = vmatprep.subr.mxu0 0.0
      %633 = vmatpush1.msra.mxu0 0.0
      %634 = vmatprep.subr.mxu0 0.0
      %635 = vmatpush1.msra.mxu0 0.0
      %636 = vmatprep.subr.mxu0 0.0
      %637 = vmatpush1.msra.mxu0 0.0
      %638 = vmatprep.subr.mxu0 0.0
      %639 = vmatpush1.msra.mxu0 0.0
      %640 = vmatprep.subr.mxu0 0.0
      %641 = vmatpush1.msra.mxu0 0.0
      %642 = vmatprep.subr.mxu0 0.0
      %643 = vmatpush1.msra.mxu0 0.0
      %644 = vmatprep.subr.mxu0 0.0
      %645 = vmatpush1.msra.mxu0 0.0
      %646 = vmatprep.subr.mxu0 0.0
      %647 = vmatpush1.msra.mxu0 0.0
      %648 = vmatprep.subr.mxu0 0.0
      %649 = vmatpush1.msra.mxu0 0.0
      %650 = vmatprep.subr.mxu0 0.0
      %651 = vmatpush1.msra.mxu0 0.0
      %652 = vmatprep.subr.mxu0 0.0
      %653 = vmatpush1.msra.mxu0 0.0
      %654 = vmatprep.subr.mxu0 0.0
      %655 = vmatpush1.msra.mxu0 0.0
      %656 = vmatprep.subr.mxu0 0.0
      %657 = vmatpush1.msra.mxu0 0.0
      %658 = vmatprep.subr.mxu0 0.0
      %659 = vmatpush1.msra.mxu0 0.0
      %660 = vmatprep.subr.mxu0 0.0
      %661 = vmatpush1.msra.mxu0 0.0
      %662 = vmatprep.subr.mxu0 0.0
      %663 = vmatpush1.msra.mxu0 0.0
      %664 = vmatprep.subr.mxu0 0.0
      %665 = vmatpush1.msra.mxu0 0.0
      %666 = vmatprep.subr.mxu0 0.0
      %667 = vmatpush1.msra.mxu0 0.0
      %668 = vmatprep.subr.mxu0 0.0
      %669 = vmatpush1.msra.mxu0 0.0
      %670 = vmatprep.mubr.f32.mxu0 0.0
      %671 = vmatmul.mubr.f32.gmra.mrb[0].mxu0 %v604
      %v672 = vpop.f32.mrb[0].mxu0
      %v673 = vadd.f32 0.0, %v672
      %v674 = vpop.f32.mrb[0].mxu0
      %675 = vdwg.mxu0
      %v677 = vsel %vm114, %v673, 0
      %679 = vmatprep.subr.mxu0 0.0
      %680 = vmatpush1.msra.mxu0 %v600
      %681 = vmatprep.subr.mxu0 0.0
      %682 = vmatpush1.msra.mxu0 0.0
      %683 = vmatprep.subr.mxu0 0.0
      %684 = vmatpush1.msra.mxu0 0.0
      %685 = vmatprep.subr.mxu0 0.0
      %686 = vmatpush1.msra.mxu0 0.0
      %687 = vmatprep.subr.mxu0 0.0
      %688 = vmatpush1.msra.mxu0 0.0
      %689 = vmatprep.subr.mxu0 0.0
      %690 = vmatpush1.msra.mxu0 0.0
      %691 = vmatprep.subr.mxu0 0.0
      %692 = vmatpush1.msra.mxu0 0.0
      %693 = vmatprep.subr.mxu0 0.0
      %694 = vmatpush1.msra.mxu0 0.0
      %695 = vmatprep.subr.mxu0 0.0
      %696 = vmatpush1.msra.mxu0 0.0
      %697 = vmatprep.subr.mxu0 0.0
      %698 = vmatpush1.msra.mxu0 0.0
      %699 = vmatprep.subr.mxu0 0.0
      %700 = vmatpush1.msra.mxu0 0.0
      %701 = vmatprep.subr.mxu0 0.0
      %702 = vmatpush1.msra.mxu0 0.0
      %703 = vmatprep.subr.mxu0 0.0
      %704 = vmatpush1.msra.mxu0 0.0
      %705 = vmatprep.subr.mxu0 0.0
      %706 = vmatpush1.msra.mxu0 0.0
      %707 = vmatprep.subr.mxu0 0.0
      %708 = vmatpush1.msra.mxu0 0.0
      %709 = vmatprep.subr.mxu0 0.0
      %710 = vmatpush1.msra.mxu0 0.0
      %711 = vmatprep.subr.mxu0 0.0
      %712 = vmatpush1.msra.mxu0 0.0
      %713 = vmatprep.subr.mxu0 0.0
      %714 = vmatpush1.msra.mxu0 0.0
      %715 = vmatprep.subr.mxu0 0.0
      %716 = vmatpush1.msra.mxu0 0.0
      %717 = vmatprep.subr.mxu0 0.0
      %718 = vmatpush1.msra.mxu0 0.0
      %719 = vmatprep.subr.mxu0 0.0
      %720 = vmatpush1.msra.mxu0 0.0
      %721 = vmatprep.subr.mxu0 0.0
      %722 = vmatpush1.msra.mxu0 0.0
      %723 = vmatprep.subr.mxu0 0.0
      %724 = vmatpush1.msra.mxu0 0.0
      %725 = vmatprep.subr.mxu0 0.0
      %726 = vmatpush1.msra.mxu0 0.0
      %727 = vmatprep.subr.mxu0 0.0
      %728 = vmatpush1.msra.mxu0 0.0
      %729 = vmatprep.subr.mxu0 0.0
      %730 = vmatpush1.msra.mxu0 0.0
      %731 = vmatprep.subr.mxu0 0.0
      %732 = vmatpush1.msra.mxu0 0.0
      %733 = vmatprep.subr.mxu0 0.0
      %734 = vmatpush1.msra.mxu0 0.0
      %735 = vmatprep.subr.mxu0 0.0
      %736 = vmatpush1.msra.mxu0 0.0
      %737 = vmatprep.subr.mxu0 0.0
      %738 = vmatpush1.msra.mxu0 0.0
      %739 = vmatprep.subr.mxu0 0.0
      %740 = vmatpush1.msra.mxu0 0.0
      %741 = vmatprep.subr.mxu0 0.0
      %742 = vmatpush1.msra.mxu0 0.0
      %743 = vmatprep.mubr.f32.mxu0 0.0
      %744 = vmatmul.mubr.f32.gmra.mrb[0].mxu0 %v677
      %v745 = vpop.f32.mrb[0].mxu0
      %v746 = vadd.f32 0.0, %v745
      %v747 = vpop.f32.mrb[0].mxu0
      %748 = vdwg.mxu0
      %v749 = vmul.f32 %v746, 0.5
      %v750 = vsub.f32 %v230, %v749
      %v752 = vsel %vm114, %v600, 0
      %754 = vmatprep.subr.mxu0 0.0
      %755 = vmatpush1.msra.mxu0 %v750
      %756 = vmatprep.subr.mxu0 0.0
      %757 = vmatpush1.msra.mxu0 0.0
      %758 = vmatprep.subr.mxu0 0.0
      %759 = vmatpush1.msra.mxu0 0.0
      %760 = vmatprep.subr.mxu0 0.0
      %761 = vmatpush1.msra.mxu0 0.0
      %762 = vmatprep.subr.mxu0 0.0
      %763 = vmatpush1.msra.mxu0 0.0
      %764 = vmatprep.subr.mxu0 0.0
      %765 = vmatpush1.msra.mxu0 0.0
      %766 = vmatprep.subr.mxu0 0.0
      %767 = vmatpush1.msra.mxu0 0.0
      %768 = vmatprep.subr.mxu0 0.0
      %769 = vmatpush1.msra.mxu0 0.0
      %770 = vmatprep.subr.mxu0 0.0
      %771 = vmatpush1.msra.mxu0 0.0
      %772 = vmatprep.subr.mxu0 0.0
      %773 = vmatpush1.msra.mxu0 0.0
      %774 = vmatprep.subr.mxu0 0.0
      %775 = vmatpush1.msra.mxu0 0.0
      %776 = vmatprep.subr.mxu0 0.0
      %777 = vmatpush1.msra.mxu0 0.0
      %778 = vmatprep.subr.mxu0 0.0
      %779 = vmatpush1.msra.mxu0 0.0
      %780 = vmatprep.subr.mxu0 0.0
      %781 = vmatpush1.msra.mxu0 0.0
      %782 = vmatprep.subr.mxu0 0.0
      %783 = vmatpush1.msra.mxu0 0.0
      %784 = vmatprep.subr.mxu0 0.0
      %785 = vmatpush1.msra.mxu0 0.0
      %786 = vmatprep.subr.mxu0 0.0
      %787 = vmatpush1.msra.mxu0 0.0
      %788 = vmatprep.subr.mxu0 0.0
      %789 = vmatpush1.msra.mxu0 0.0
      %790 = vmatprep.subr.mxu0 0.0
      %791 = vmatpush1.msra.mxu0 0.0
      %792 = vmatprep.subr.mxu0 0.0
      %793 = vmatpush1.msra.mxu0 0.0
      %794 = vmatprep.subr.mxu0 0.0
      %795 = vmatpush1.msra.mxu0 0.0
      %796 = vmatprep.subr.mxu0 0.0
      %797 = vmatpush1.msra.mxu0 0.0
      %798 = vmatprep.subr.mxu0 0.0
      %799 = vmatpush1.msra.mxu0 0.0
      %800 = vmatprep.subr.mxu0 0.0
      %801 = vmatpush1.msra.mxu0 0.0
      %802 = vmatprep.subr.mxu0 0.0
      %803 = vmatpush1.msra.mxu0 0.0
      %804 = vmatprep.subr.mxu0 0.0
      %805 = vmatpush1.msra.mxu0 0.0
      %806 = vmatprep.subr.mxu0 0.0
      %807 = vmatpush1.msra.mxu0 0.0
      %808 = vmatprep.subr.mxu0 0.0
      %809 = vmatpush1.msra.mxu0 0.0
      %810 = vmatprep.subr.mxu0 0.0
      %811 = vmatpush1.msra.mxu0 0.0
      %812 = vmatprep.subr.mxu0 0.0
      %813 = vmatpush1.msra.mxu0 0.0
      %814 = vmatprep.subr.mxu0 0.0
      %815 = vmatpush1.msra.mxu0 0.0
      %816 = vmatprep.subr.mxu0 0.0
      %817 = vmatpush1.msra.mxu0 0.0
      %818 = vmatprep.mubr.f32.mxu0 0.0
      %819 = vmatmul.mubr.f32.gmra.mrb[0].mxu0 %v752
      %v820 = vpop.f32.mrb[0].mxu0
      %v821 = vadd.f32 0.0, %v820
      %v822 = vpop.f32.mrb[0].mxu0
      %823 = vdwg.mxu0
      %v825 = vsel %vm114, %v750, 0
      %827 = vmatprep.subr.mxu0 0.0
      %828 = vmatpush1.msra.mxu0 %v673
      %829 = vmatprep.subr.mxu0 0.0
      %830 = vmatpush1.msra.mxu0 0.0
      %831 = vmatprep.subr.mxu0 0.0
      %832 = vmatpush1.msra.mxu0 0.0
      %833 = vmatprep.subr.mxu0 0.0
      %834 = vmatpush1.msra.mxu0 0.0
      %835 = vmatprep.subr.mxu0 0.0
      %836 = vmatpush1.msra.mxu0 0.0
      %837 = vmatprep.subr.mxu0 0.0
      %838 = vmatpush1.msra.mxu0 0.0
      %839 = vmatprep.subr.mxu0 0.0
      %840 = vmatpush1.msra.mxu0 0.0
      %841 = vmatprep.subr.mxu0 0.0
      %842 = vmatpush1.msra.mxu0 0.0
      %843 = vmatprep.subr.mxu0 0.0
      %844 = vmatpush1.msra.mxu0 0.0
      %845 = vmatprep.subr.mxu0 0.0
      %846 = vmatpush1.msra.mxu0 0.0
      %847 = vmatprep.subr.mxu0 0.0
      %848 = vmatpush1.msra.mxu0 0.0
      %849 = vmatprep.subr.mxu0 0.0
      %850 = vmatpush1.msra.mxu0 0.0
      %851 = vmatprep.subr.mxu0 0.0
      %852 = vmatpush1.msra.mxu0 0.0
      %853 = vmatprep.subr.mxu0 0.0
      %854 = vmatpush1.msra.mxu0 0.0
      %855 = vmatprep.subr.mxu0 0.0
      %856 = vmatpush1.msra.mxu0 0.0
      %857 = vmatprep.subr.mxu0 0.0
      %858 = vmatpush1.msra.mxu0 0.0
      %859 = vmatprep.subr.mxu0 0.0
      %860 = vmatpush1.msra.mxu0 0.0
      %861 = vmatprep.subr.mxu0 0.0
      %862 = vmatpush1.msra.mxu0 0.0
      %863 = vmatprep.subr.mxu0 0.0
      %864 = vmatpush1.msra.mxu0 0.0
      %865 = vmatprep.subr.mxu0 0.0
      %866 = vmatpush1.msra.mxu0 0.0
      %867 = vmatprep.subr.mxu0 0.0
      %868 = vmatpush1.msra.mxu0 0.0
      %869 = vmatprep.subr.mxu0 0.0
      %870 = vmatpush1.msra.mxu0 0.0
      %871 = vmatprep.subr.mxu0 0.0
      %872 = vmatpush1.msra.mxu0 0.0
      %873 = vmatprep.subr.mxu0 0.0
      %874 = vmatpush1.msra.mxu0 0.0
      %875 = vmatprep.subr.mxu0 0.0
      %876 = vmatpush1.msra.mxu0 0.0
      %877 = vmatprep.subr.mxu0 0.0
      %878 = vmatpush1.msra.mxu0 0.0
      %879 = vmatprep.subr.mxu0 0.0
      %880 = vmatpush1.msra.mxu0 0.0
      %881 = vmatprep.subr.mxu0 0.0
      %882 = vmatpush1.msra.mxu0 0.0
      %883 = vmatprep.subr.mxu0 0.0
      %884 = vmatpush1.msra.mxu0 0.0
      %885 = vmatprep.subr.mxu0 0.0
      %886 = vmatpush1.msra.mxu0 0.0
      %887 = vmatprep.subr.mxu0 0.0
      %888 = vmatpush1.msra.mxu0 0.0
      %889 = vmatprep.subr.mxu0 0.0
      %890 = vmatpush1.msra.mxu0 0.0
      %891 = vmatprep.mubr.f32.mxu0 0.0
      %892 = vmatmul.mubr.f32.gmra.mrb[0].mxu0 %v825
      %v893 = vpop.f32.mrb[0].mxu0
      %v894 = vadd.f32 0.0, %v893
      %v895 = vpop.f32.mrb[0].mxu0
      %896 = vdwg.mxu0
      %v898 = vsel %vm114, %v894, 0
      %900 = vmatprep.subr.mxu0 0.0
      %901 = vmatpush1.msra.mxu0 %v821
      %902 = vmatprep.subr.mxu0 0.0
      %903 = vmatpush1.msra.mxu0 0.0
      %904 = vmatprep.subr.mxu0 0.0
      %905 = vmatpush1.msra.mxu0 0.0
      %906 = vmatprep.subr.mxu0 0.0
      %907 = vmatpush1.msra.mxu0 0.0
      %908 = vmatprep.subr.mxu0 0.0
      %909 = vmatpush1.msra.mxu0 0.0
      %910 = vmatprep.subr.mxu0 0.0
      %911 = vmatpush1.msra.mxu0 0.0
      %912 = vmatprep.subr.mxu0 0.0
      %913 = vmatpush1.msra.mxu0 0.0
      %914 = vmatprep.subr.mxu0 0.0
      %915 = vmatpush1.msra.mxu0 0.0
      %916 = vmatprep.subr.mxu0 0.0
      %917 = vmatpush1.msra.mxu0 0.0
      %918 = vmatprep.subr.mxu0 0.0
      %919 = vmatpush1.msra.mxu0 0.0
      %920 = vmatprep.subr.mxu0 0.0
      %921 = vmatpush1.msra.mxu0 0.0
      %922 = vmatprep.subr.mxu0 0.0
      %923 = vmatpush1.msra.mxu0 0.0
      %924 = vmatprep.subr.mxu0 0.0
      %925 = vmatpush1.msra.mxu0 0.0
      %926 = vmatprep.subr.mxu0 0.0
      %927 = vmatpush1.msra.mxu0 0.0
      %928 = vmatprep.subr.mxu0 0.0
      %929 = vmatpush1.msra.mxu0 0.0
      %930 = vmatprep.subr.mxu0 0.0
      %931 = vmatpush1.msra.mxu0 0.0
      %932 = vmatprep.subr.mxu0 0.0
      %933 = vmatpush1.msra.mxu0 0.0
      %934 = vmatprep.subr.mxu0 0.0
      %935 = vmatpush1.msra.mxu0 0.0
      %936 = vmatprep.subr.mxu0 0.0
      %937 = vmatpush1.msra.mxu0 0.0
      %938 = vmatprep.subr.mxu0 0.0
      %939 = vmatpush1.msra.mxu0 0.0
      %940 = vmatprep.subr.mxu0 0.0
      %941 = vmatpush1.msra.mxu0 0.0
      %942 = vmatprep.subr.mxu0 0.0
      %943 = vmatpush1.msra.mxu0 0.0
      %944 = vmatprep.subr.mxu0 0.0
      %945 = vmatpush1.msra.mxu0 0.0
      %946 = vmatprep.subr.mxu0 0.0
      %947 = vmatpush1.msra.mxu0 0.0
      %948 = vmatprep.subr.mxu0 0.0
      %949 = vmatpush1.msra.mxu0 0.0
      %950 = vmatprep.subr.mxu0 0.0
      %951 = vmatpush1.msra.mxu0 0.0
      %952 = vmatprep.subr.mxu0 0.0
      %953 = vmatpush1.msra.mxu0 0.0
      %954 = vmatprep.subr.mxu0 0.0
      %955 = vmatpush1.msra.mxu0 0.0
      %956 = vmatprep.subr.mxu0 0.0
      %957 = vmatpush1.msra.mxu0 0.0
      %958 = vmatprep.subr.mxu0 0.0
      %959 = vmatpush1.msra.mxu0 0.0
      %960 = vmatprep.subr.mxu0 0.0
      %961 = vmatpush1.msra.mxu0 0.0
      %962 = vmatprep.subr.mxu0 0.0
      %963 = vmatpush1.msra.mxu0 0.0
      %964 = vmatprep.mubr.f32.mxu0 0.0
      %965 = vmatmul.mubr.f32.gmra.mrb[0].mxu0 %v898
      %v966 = vpop.f32.mrb[0].mxu0
      %v967 = vadd.f32 0.0, %v966
      %v968 = vpop.f32.mrb[0].mxu0
      %969 = vdwg.mxu0
      %v970 = vmul.f32 %v967, 0.5
      %v971 = vsub.f32 %v230, %v970
      %v973 = vsel %vm114, %v821, 0
      %975 = vmatprep.subr.mxu0 0.0
      %976 = vmatpush1.msra.mxu0 %v971
      %977 = vmatprep.subr.mxu0 0.0
      %978 = vmatpush1.msra.mxu0 0.0
      %979 = vmatprep.subr.mxu0 0.0
      %980 = vmatpush1.msra.mxu0 0.0
      %981 = vmatprep.subr.mxu0 0.0
      %982 = vmatpush1.msra.mxu0 0.0
      %983 = vmatprep.subr.mxu0 0.0
      %984 = vmatpush1.msra.mxu0 0.0
      %985 = vmatprep.subr.mxu0 0.0
      %986 = vmatpush1.msra.mxu0 0.0
      %987 = vmatprep.subr.mxu0 0.0
      %988 = vmatpush1.msra.mxu0 0.0
      %989 = vmatprep.subr.mxu0 0.0
      %990 = vmatpush1.msra.mxu0 0.0
      %991 = vmatprep.subr.mxu0 0.0
      %992 = vmatpush1.msra.mxu0 0.0
      %993 = vmatprep.subr.mxu0 0.0
      %994 = vmatpush1.msra.mxu0 0.0
      %995 = vmatprep.subr.mxu0 0.0
      %996 = vmatpush1.msra.mxu0 0.0
      %997 = vmatprep.subr.mxu0 0.0
      %998 = vmatpush1.msra.mxu0 0.0
      %999 = vmatprep.subr.mxu0 0.0
      %1000 = vmatpush1.msra.mxu0 0.0
      %1001 = vmatprep.subr.mxu0 0.0
      %1002 = vmatpush1.msra.mxu0 0.0
      %1003 = vmatprep.subr.mxu0 0.0
      %1004 = vmatpush1.msra.mxu0 0.0
      %1005 = vmatprep.subr.mxu0 0.0
      %1006 = vmatpush1.msra.mxu0 0.0
      %1007 = vmatprep.subr.mxu0 0.0
      %1008 = vmatpush1.msra.mxu0 0.0
      %1009 = vmatprep.subr.mxu0 0.0
      %1010 = vmatpush1.msra.mxu0 0.0
      %1011 = vmatprep.subr.mxu0 0.0
      %1012 = vmatpush1.msra.mxu0 0.0
      %1013 = vmatprep.subr.mxu0 0.0
      %1014 = vmatpush1.msra.mxu0 0.0
      %1015 = vmatprep.subr.mxu0 0.0
      %1016 = vmatpush1.msra.mxu0 0.0
      %1017 = vmatprep.subr.mxu0 0.0
      %1018 = vmatpush1.msra.mxu0 0.0
      %1019 = vmatprep.subr.mxu0 0.0
      %1020 = vmatpush1.msra.mxu0 0.0
      %1021 = vmatprep.subr.mxu0 0.0
      %1022 = vmatpush1.msra.mxu0 0.0
      %1023 = vmatprep.subr.mxu0 0.0
      %1024 = vmatpush1.msra.mxu0 0.0
      %1025 = vmatprep.subr.mxu0 0.0
      %1026 = vmatpush1.msra.mxu0 0.0
      %1027 = vmatprep.subr.mxu0 0.0
      %1028 = vmatpush1.msra.mxu0 0.0
      %1029 = vmatprep.subr.mxu0 0.0
      %1030 = vmatpush1.msra.mxu0 0.0
      %1031 = vmatprep.subr.mxu0 0.0
      %1032 = vmatpush1.msra.mxu0 0.0
      %1033 = vmatprep.subr.mxu0 0.0
      %1034 = vmatpush1.msra.mxu0 0.0
      %1035 = vmatprep.subr.mxu0 0.0
      %1036 = vmatpush1.msra.mxu0 0.0
      %1037 = vmatprep.subr.mxu0 0.0
      %1038 = vmatpush1.msra.mxu0 0.0
      %1039 = vmatprep.mubr.f32.mxu0 0.0
      %1040 = vmatmul.mubr.f32.gmra.mrb[0].mxu0 %v973
      %v1041 = vpop.f32.mrb[0].mxu0
      %v1042 = vadd.f32 0.0, %v1041
      %v1043 = vpop.f32.mrb[0].mxu0
      %1044 = vdwg.mxu0
      %v1046 = vsel %vm114, %v971, 0
      %1048 = vmatprep.subr.mxu0 0.0
      %1049 = vmatpush1.msra.mxu0 %v894
      %1050 = vmatprep.subr.mxu0 0.0
      %1051 = vmatpush1.msra.mxu0 0.0
      %1052 = vmatprep.subr.mxu0 0.0
      %1053 = vmatpush1.msra.mxu0 0.0
      %1054 = vmatprep.subr.mxu0 0.0
      %1055 = vmatpush1.msra.mxu0 0.0
      %1056 = vmatprep.subr.mxu0 0.0
      %1057 = vmatpush1.msra.mxu0 0.0
      %1058 = vmatprep.subr.mxu0 0.0
      %1059 = vmatpush1.msra.mxu0 0.0
      %1060 = vmatprep.subr.mxu0 0.0
      %1061 = vmatpush1.msra.mxu0 0.0
      %1062 = vmatprep.subr.mxu0 0.0
      %1063 = vmatpush1.msra.mxu0 0.0
      %1064 = vmatprep.subr.mxu0 0.0
      %1065 = vmatpush1.msra.mxu0 0.0
      %1066 = vmatprep.subr.mxu0 0.0
      %1067 = vmatpush1.msra.mxu0 0.0
      %1068 = vmatprep.subr.mxu0 0.0
      %1069 = vmatpush1.msra.mxu0 0.0
      %1070 = vmatprep.subr.mxu0 0.0
      %1071 = vmatpush1.msra.mxu0 0.0
      %1072 = vmatprep.subr.mxu0 0.0
      %1073 = vmatpush1.msra.mxu0 0.0
      %1074 = vmatprep.subr.mxu0 0.0
      %1075 = vmatpush1.msra.mxu0 0.0
      %1076 = vmatprep.subr.mxu0 0.0
      %1077 = vmatpush1.msra.mxu0 0.0
      %1078 = vmatprep.subr.mxu0 0.0
      %1079 = vmatpush1.msra.mxu0 0.0
      %1080 = vmatprep.subr.mxu0 0.0
      %1081 = vmatpush1.msra.mxu0 0.0
      %1082 = vmatprep.subr.mxu0 0.0
      %1083 = vmatpush1.msra.mxu0 0.0
      %1084 = vmatprep.subr.mxu0 0.0
      %1085 = vmatpush1.msra.mxu0 0.0
      %1086 = vmatprep.subr.mxu0 0.0
      %1087 = vmatpush1.msra.mxu0 0.0
      %1088 = vmatprep.subr.mxu0 0.0
      %1089 = vmatpush1.msra.mxu0 0.0
      %1090 = vmatprep.subr.mxu0 0.0
      %1091 = vmatpush1.msra.mxu0 0.0
      %1092 = vmatprep.subr.mxu0 0.0
      %1093 = vmatpush1.msra.mxu0 0.0
      %1094 = vmatprep.subr.mxu0 0.0
      %1095 = vmatpush1.msra.mxu0 0.0
      %1096 = vmatprep.subr.mxu0 0.0
      %1097 = vmatpush1.msra.mxu0 0.0
      %1098 = vmatprep.subr.mxu0 0.0
      %1099 = vmatpush1.msra.mxu0 0.0
      %1100 = vmatprep.subr.mxu0 0.0
      %1101 = vmatpush1.msra.mxu0 0.0
      %1102 = vmatprep.subr.mxu0 0.0
      %1103 = vmatpush1.msra.mxu0 0.0
      %1104 = vmatprep.subr.mxu0 0.0
      %1105 = vmatpush1.msra.mxu0 0.0
      %1106 = vmatprep.subr.mxu0 0.0
      %1107 = vmatpush1.msra.mxu0 0.0
      %1108 = vmatprep.subr.mxu0 0.0
      %1109 = vmatpush1.msra.mxu0 0.0
      %1110 = vmatprep.subr.mxu0 0.0
      %1111 = vmatpush1.msra.mxu0 0.0
      %1112 = vmatprep.mubr.f32.mxu0 0.0
      %1113 = vmatmul.mubr.f32.gmra.mrb[0].mxu0 %v1046
      %v1114 = vpop.f32.mrb[0].mxu0
      %v1115 = vadd.f32 0.0, %v1114
      %v1116 = vpop.f32.mrb[0].mxu0
      %1117 = vdwg.mxu0
      %v1119 = vsel %vm114, %v1115, 0
      %1121 = vmatprep.subr.mxu0 0.0
      %1122 = vmatpush1.msra.mxu0 %v1042
      %1123 = vmatprep.subr.mxu0 0.0
      %1124 = vmatpush1.msra.mxu0 0.0
      %1125 = vmatprep.subr.mxu0 0.0
      %1126 = vmatpush1.msra.mxu0 0.0
      %1127 = vmatprep.subr.mxu0 0.0
      %1128 = vmatpush1.msra.mxu0 0.0
      %1129 = vmatprep.subr.mxu0 0.0
      %1130 = vmatpush1.msra.mxu0 0.0
      %1131 = vmatprep.subr.mxu0 0.0
      %1132 = vmatpush1.msra.mxu0 0.0
      %1133 = vmatprep.subr.mxu0 0.0
      %1134 = vmatpush1.msra.mxu0 0.0
      %1135 = vmatprep.subr.mxu0 0.0
      %1136 = vmatpush1.msra.mxu0 0.0
      %1137 = vmatprep.subr.mxu0 0.0
      %1138 = vmatpush1.msra.mxu0 0.0
      %1139 = vmatprep.subr.mxu0 0.0
      %1140 = vmatpush1.msra.mxu0 0.0
      %1141 = vmatprep.subr.mxu0 0.0
      %1142 = vmatpush1.msra.mxu0 0.0
      %1143 = vmatprep.subr.mxu0 0.0
      %1144 = vmatpush1.msra.mxu0 0.0
      %1145 = vmatprep.subr.mxu0 0.0
      %1146 = vmatpush1.msra.mxu0 0.0
      %1147 = vmatprep.subr.mxu0 0.0
      %1148 = vmatpush1.msra.mxu0 0.0
      %1149 = vmatprep.subr.mxu0 0.0
      %1150 = vmatpush1.msra.mxu0 0.0
      %1151 = vmatprep.subr.mxu0 0.0
      %1152 = vmatpush1.msra.mxu0 0.0
      %1153 = vmatprep.subr.mxu0 0.0
      %1154 = vmatpush1.msra.mxu0 0.0
      %1155 = vmatprep.subr.mxu0 0.0
      %1156 = vmatpush1.msra.mxu0 0.0
      %1157 = vmatprep.subr.mxu0 0.0
      %1158 = vmatpush1.msra.mxu0 0.0
      %1159 = vmatprep.subr.mxu0 0.0
      %1160 = vmatpush1.msra.mxu0 0.0
      %1161 = vmatprep.subr.mxu0 0.0
      %1162 = vmatpush1.msra.mxu0 0.0
      %1163 = vmatprep.subr.mxu0 0.0
      %1164 = vmatpush1.msra.mxu0 0.0
      %1165 = vmatprep.subr.mxu0 0.0
      %1166 = vmatpush1.msra.mxu0 0.0
      %1167 = vmatprep.subr.mxu0 0.0
      %1168 = vmatpush1.msra.mxu0 0.0
      %1169 = vmatprep.subr.mxu0 0.0
      %1170 = vmatpush1.msra.mxu0 0.0
      %1171 = vmatprep.subr.mxu0 0.0
      %1172 = vmatpush1.msra.mxu0 0.0
      %1173 = vmatprep.subr.mxu0 0.0
      %1174 = vmatpush1.msra.mxu0 0.0
      %1175 = vmatprep.subr.mxu0 0.0
      %1176 = vmatpush1.msra.mxu0 0.0
      %1177 = vmatprep.subr.mxu0 0.0
      %1178 = vmatpush1.msra.mxu0 0.0
      %1179 = vmatprep.subr.mxu0 0.0
      %1180 = vmatpush1.msra.mxu0 0.0
      %1181 = vmatprep.subr.mxu0 0.0
      %1182 = vmatpush1.msra.mxu0 0.0
      %1183 = vmatprep.subr.mxu0 0.0
      %1184 = vmatpush1.msra.mxu0 0.0
      %1185 = vmatprep.mubr.f32.mxu0 0.0
      %1186 = vmatmul.mubr.f32.gmra.mrb[0].mxu0 %v1119
      %v1187 = vpop.f32.mrb[0].mxu0
      %v1188 = vadd.f32 0.0, %v1187
      %v1189 = vpop.f32.mrb[0].mxu0
      %1190 = vdwg.mxu0
      %v1191 = vmul.f32 %v1188, 0.5
      %v1192 = vsub.f32 %v230, %v1191
      %v1194 = vsel %vm114, %v1042, 0
      %1196 = vmatprep.subr.mxu0 0.0
      %1197 = vmatpush1.msra.mxu0 %v1192
      %1198 = vmatprep.subr.mxu0 0.0
      %1199 = vmatpush1.msra.mxu0 0.0
      %1200 = vmatprep.subr.mxu0 0.0
      %1201 = vmatpush1.msra.mxu0 0.0
      %1202 = vmatprep.subr.mxu0 0.0
      %1203 = vmatpush1.msra.mxu0 0.0
      %1204 = vmatprep.subr.mxu0 0.0
      %1205 = vmatpush1.msra.mxu0 0.0
      %1206 = vmatprep.subr.mxu0 0.0
      %1207 = vmatpush1.msra.mxu0 0.0
      %1208 = vmatprep.subr.mxu0 0.0
      %1209 = vmatpush1.msra.mxu0 0.0
      %1210 = vmatprep.subr.mxu0 0.0
      %1211 = vmatpush1.msra.mxu0 0.0
      %1212 = vmatprep.subr.mxu0 0.0
      %1213 = vmatpush1.msra.mxu0 0.0
      %1214 = vmatprep.subr.mxu0 0.0
      %1215 = vmatpush1.msra.mxu0 0.0
      %1216 = vmatprep.subr.mxu0 0.0
      %1217 = vmatpush1.msra.mxu0 0.0
      %1218 = vmatprep.subr.mxu0 0.0
      %1219 = vmatpush1.msra.mxu0 0.0
      %1220 = vmatprep.subr.mxu0 0.0
      %1221 = vmatpush1.msra.mxu0 0.0
      %1222 = vmatprep.subr.mxu0 0.0
      %1223 = vmatpush1.msra.mxu0 0.0
      %1224 = vmatprep.subr.mxu0 0.0
      %1225 = vmatpush1.msra.mxu0 0.0
      %1226 = vmatprep.subr.mxu0 0.0
      %1227 = vmatpush1.msra.mxu0 0.0
      %1228 = vmatprep.subr.mxu0 0.0
      %1229 = vmatpush1.msra.mxu0 0.0
      %1230 = vmatprep.subr.mxu0 0.0
      %1231 = vmatpush1.msra.mxu0 0.0
      %1232 = vmatprep.subr.mxu0 0.0
      %1233 = vmatpush1.msra.mxu0 0.0
      %1234 = vmatprep.subr.mxu0 0.0
      %1235 = vmatpush1.msra.mxu0 0.0
      %1236 = vmatprep.subr.mxu0 0.0
      %1237 = vmatpush1.msra.mxu0 0.0
      %1238 = vmatprep.subr.mxu0 0.0
      %1239 = vmatpush1.msra.mxu0 0.0
      %1240 = vmatprep.subr.mxu0 0.0
      %1241 = vmatpush1.msra.mxu0 0.0
      %1242 = vmatprep.subr.mxu0 0.0
      %1243 = vmatpush1.msra.mxu0 0.0
      %1244 = vmatprep.subr.mxu0 0.0
      %1245 = vmatpush1.msra.mxu0 0.0
      %1246 = vmatprep.subr.mxu0 0.0
      %1247 = vmatpush1.msra.mxu0 0.0
      %1248 = vmatprep.subr.mxu0 0.0
      %1249 = vmatpush1.msra.mxu0 0.0
      %1250 = vmatprep.subr.mxu0 0.0
      %1251 = vmatpush1.msra.mxu0 0.0
      %1252 = vmatprep.subr.mxu0 0.0
      %1253 = vmatpush1.msra.mxu0 0.0
      %1254 = vmatprep.subr.mxu0 0.0
      %1255 = vmatpush1.msra.mxu0 0.0
      %1256 = vmatprep.subr.mxu0 0.0
      %1257 = vmatpush1.msra.mxu0 0.0
      %1258 = vmatprep.subr.mxu0 0.0
      %1259 = vmatpush1.msra.mxu0 0.0
      %1260 = vmatprep.mubr.f32.mxu0 0.0
      %1261 = vmatmul.mubr.f32.gmra.mrb[0].mxu0 %v1194
      %v1262 = vpop.f32.mrb[0].mxu0
      %v1263 = vadd.f32 0.0, %v1262
      %v1264 = vpop.f32.mrb[0].mxu0
      %1265 = vdwg.mxu0
      %v1267 = vsel %vm114, %v1192, 0
      %1269 = vmatprep.subr.mxu0 0.0
      %1270 = vmatpush1.msra.mxu0 %v1115
      %1271 = vmatprep.subr.mxu0 0.0
      %1272 = vmatpush1.msra.mxu0 0.0
      %1273 = vmatprep.subr.mxu0 0.0
      %1274 = vmatpush1.msra.mxu0 0.0
      %1275 = vmatprep.subr.mxu0 0.0
      %1276 = vmatpush1.msra.mxu0 0.0
      %1277 = vmatprep.subr.mxu0 0.0
      %1278 = vmatpush1.msra.mxu0 0.0
      %1279 = vmatprep.subr.mxu0 0.0
      %1280 = vmatpush1.msra.mxu0 0.0
      %1281 = vmatprep.subr.mxu0 0.0
      %1282 = vmatpush1.msra.mxu0 0.0
      %1283 = vmatprep.subr.mxu0 0.0
      %1284 = vmatpush1.msra.mxu0 0.0
      %1285 = vmatprep.subr.mxu0 0.0
      %1286 = vmatpush1.msra.mxu0 0.0
      %1287 = vmatprep.subr.mxu0 0.0
      %1288 = vmatpush1.msra.mxu0 0.0
      %1289 = vmatprep.subr.mxu0 0.0
      %1290 = vmatpush1.msra.mxu0 0.0
      %1291 = vmatprep.subr.mxu0 0.0
      %1292 = vmatpush1.msra.mxu0 0.0
      %1293 = vmatprep.subr.mxu0 0.0
      %1294 = vmatpush1.msra.mxu0 0.0
      %1295 = vmatprep.subr.mxu0 0.0
      %1296 = vmatpush1.msra.mxu0 0.0
      %1297 = vmatprep.subr.mxu0 0.0
      %1298 = vmatpush1.msra.mxu0 0.0
      %1299 = vmatprep.subr.mxu0 0.0
      %1300 = vmatpush1.msra.mxu0 0.0
      %1301 = vmatprep.subr.mxu0 0.0
      %1302 = vmatpush1.msra.mxu0 0.0
      %1303 = vmatprep.subr.mxu0 0.0
      %1304 = vmatpush1.msra.mxu0 0.0
      %1305 = vmatprep.subr.mxu0 0.0
      %1306 = vmatpush1.msra.mxu0 0.0
      %1307 = vmatprep.subr.mxu0 0.0
      %1308 = vmatpush1.msra.mxu0 0.0
      %1309 = vmatprep.subr.mxu0 0.0
      %1310 = vmatpush1.msra.mxu0 0.0
      %1311 = vmatprep.subr.mxu0 0.0
      %1312 = vmatpush1.msra.mxu0 0.0
      %1313 = vmatprep.subr.mxu0 0.0
      %1314 = vmatpush1.msra.mxu0 0.0
      %1315 = vmatprep.subr.mxu0 0.0
      %1316 = vmatpush1.msra.mxu0 0.0
      %1317 = vmatprep.subr.mxu0 0.0
      %1318 = vmatpush1.msra.mxu0 0.0
      %1319 = vmatprep.subr.mxu0 0.0
      %1320 = vmatpush1.msra.mxu0 0.0
      %1321 = vmatprep.subr.mxu0 0.0
      %1322 = vmatpush1.msra.mxu0 0.0
      %1323 = vmatprep.subr.mxu0 0.0
      %1324 = vmatpush1.msra.mxu0 0.0
      %1325 = vmatprep.subr.mxu0 0.0
      %1326 = vmatpush1.msra.mxu0 0.0
      %1327 = vmatprep.subr.mxu0 0.0
      %1328 = vmatpush1.msra.mxu0 0.0
      %1329 = vmatprep.subr.mxu0 0.0
      %1330 = vmatpush1.msra.mxu0 0.0
      %1331 = vmatprep.subr.mxu0 0.0
      %1332 = vmatpush1.msra.mxu0 0.0
      %1333 = vmatprep.mubr.f32.mxu0 0.0
      %1334 = vmatmul.mubr.f32.gmra.mrb[0].mxu0 %v1267
      %v1335 = vpop.f32.mrb[0].mxu0
      %v1336 = vadd.f32 0.0, %v1335
      %v1337 = vpop.f32.mrb[0].mxu0
      %1338 = vdwg.mxu0
      %v1340 = vsel %vm114, %v1336, 0
      %1342 = vmatprep.subr.mxu0 0.0
      %1343 = vmatpush1.msra.mxu0 %v1263
      %1344 = vmatprep.subr.mxu0 0.0
      %1345 = vmatpush1.msra.mxu0 0.0
      %1346 = vmatprep.subr.mxu0 0.0
      %1347 = vmatpush1.msra.mxu0 0.0
      %1348 = vmatprep.subr.mxu0 0.0
      %1349 = vmatpush1.msra.mxu0 0.0
      %1350 = vmatprep.subr.mxu0 0.0
      %1351 = vmatpush1.msra.mxu0 0.0
      %1352 = vmatprep.subr.mxu0 0.0
      %1353 = vmatpush1.msra.mxu0 0.0
      %1354 = vmatprep.subr.mxu0 0.0
      %1355 = vmatpush1.msra.mxu0 0.0
      %1356 = vmatprep.subr.mxu0 0.0
      %1357 = vmatpush1.msra.mxu0 0.0
      %1358 = vmatprep.subr.mxu0 0.0
      %1359 = vmatpush1.msra.mxu0 0.0
      %1360 = vmatprep.subr.mxu0 0.0
      %1361 = vmatpush1.msra.mxu0 0.0
      %1362 = vmatprep.subr.mxu0 0.0
      %1363 = vmatpush1.msra.mxu0 0.0
      %1364 = vmatprep.subr.mxu0 0.0
      %1365 = vmatpush1.msra.mxu0 0.0
      %1366 = vmatprep.subr.mxu0 0.0
      %1367 = vmatpush1.msra.mxu0 0.0
      %1368 = vmatprep.subr.mxu0 0.0
      %1369 = vmatpush1.msra.mxu0 0.0
      %1370 = vmatprep.subr.mxu0 0.0
      %1371 = vmatpush1.msra.mxu0 0.0
      %1372 = vmatprep.subr.mxu0 0.0
      %1373 = vmatpush1.msra.mxu0 0.0
      %1374 = vmatprep.subr.mxu0 0.0
      %1375 = vmatpush1.msra.mxu0 0.0
      %1376 = vmatprep.subr.mxu0 0.0
      %1377 = vmatpush1.msra.mxu0 0.0
      %1378 = vmatprep.subr.mxu0 0.0
      %1379 = vmatpush1.msra.mxu0 0.0
      %1380 = vmatprep.subr.mxu0 0.0
      %1381 = vmatpush1.msra.mxu0 0.0
      %1382 = vmatprep.subr.mxu0 0.0
      %1383 = vmatpush1.msra.mxu0 0.0
      %1384 = vmatprep.subr.mxu0 0.0
      %1385 = vmatpush1.msra.mxu0 0.0
      %1386 = vmatprep.subr.mxu0 0.0
      %1387 = vmatpush1.msra.mxu0 0.0
      %1388 = vmatprep.subr.mxu0 0.0
      %1389 = vmatpush1.msra.mxu0 0.0
      %1390 = vmatprep.subr.mxu0 0.0
      %1391 = vmatpush1.msra.mxu0 0.0
      %1392 = vmatprep.subr.mxu0 0.0
      %1393 = vmatpush1.msra.mxu0 0.0
      %1394 = vmatprep.subr.mxu0 0.0
      %1395 = vmatpush1.msra.mxu0 0.0
      %1396 = vmatprep.subr.mxu0 0.0
      %1397 = vmatpush1.msra.mxu0 0.0
      %1398 = vmatprep.subr.mxu0 0.0
      %1399 = vmatpush1.msra.mxu0 0.0
      %1400 = vmatprep.subr.mxu0 0.0
      %1401 = vmatpush1.msra.mxu0 0.0
      %1402 = vmatprep.subr.mxu0 0.0
      %1403 = vmatpush1.msra.mxu0 0.0
      %1404 = vmatprep.subr.mxu0 0.0
      %1405 = vmatpush1.msra.mxu0 0.0
      %1406 = vmatprep.mubr.f32.mxu0 0.0
      %1407 = vmatmul.mubr.f32.gmra.mrb[0].mxu0 %v1340
      %v1408 = vpop.f32.mrb[0].mxu0
      %v1409 = vadd.f32 0.0, %v1408
      %v1410 = vpop.f32.mrb[0].mxu0
      %1411 = vdwg.mxu0
      %v1412 = vmul.f32 %v1409, 0.5
      %v1413 = vsub.f32 %v230, %v1412
      %v1415 = vsel %vm114, %v1263, 0
      %1417 = vmatprep.subr.mxu0 0.0
      %1418 = vmatpush1.msra.mxu0 %v1413
      %1419 = vmatprep.subr.mxu0 0.0
      %1420 = vmatpush1.msra.mxu0 0.0
      %1421 = vmatprep.subr.mxu0 0.0
      %1422 = vmatpush1.msra.mxu0 0.0
      %1423 = vmatprep.subr.mxu0 0.0
      %1424 = vmatpush1.msra.mxu0 0.0
      %1425 = vmatprep.subr.mxu0 0.0
      %1426 = vmatpush1.msra.mxu0 0.0
      %1427 = vmatprep.subr.mxu0 0.0
      %1428 = vmatpush1.msra.mxu0 0.0
      %1429 = vmatprep.subr.mxu0 0.0
      %1430 = vmatpush1.msra.mxu0 0.0
      %1431 = vmatprep.subr.mxu0 0.0
      %1432 = vmatpush1.msra.mxu0 0.0
      %1433 = vmatprep.subr.mxu0 0.0
      %1434 = vmatpush1.msra.mxu0 0.0
      %1435 = vmatprep.subr.mxu0 0.0
      %1436 = vmatpush1.msra.mxu0 0.0
      %1437 = vmatprep.subr.mxu0 0.0
      %1438 = vmatpush1.msra.mxu0 0.0
      %1439 = vmatprep.subr.mxu0 0.0
      %1440 = vmatpush1.msra.mxu0 0.0
      %1441 = vmatprep.subr.mxu0 0.0
      %1442 = vmatpush1.msra.mxu0 0.0
      %1443 = vmatprep.subr.mxu0 0.0
      %1444 = vmatpush1.msra.mxu0 0.0
      %1445 = vmatprep.subr.mxu0 0.0
      %1446 = vmatpush1.msra.mxu0 0.0
      %1447 = vmatprep.subr.mxu0 0.0
      %1448 = vmatpush1.msra.mxu0 0.0
      %1449 = vmatprep.subr.mxu0 0.0
      %1450 = vmatpush1.msra.mxu0 0.0
      %1451 = vmatprep.subr.mxu0 0.0
      %1452 = vmatpush1.msra.mxu0 0.0
      %1453 = vmatprep.subr.mxu0 0.0
      %1454 = vmatpush1.msra.mxu0 0.0
      %1455 = vmatprep.subr.mxu0 0.0
      %1456 = vmatpush1.msra.mxu0 0.0
      %1457 = vmatprep.subr.mxu0 0.0
      %1458 = vmatpush1.msra.mxu0 0.0
      %1459 = vmatprep.subr.mxu0 0.0
      %1460 = vmatpush1.msra.mxu0 0.0
      %1461 = vmatprep.subr.mxu0 0.0
      %1462 = vmatpush1.msra.mxu0 0.0
      %1463 = vmatprep.subr.mxu0 0.0
      %1464 = vmatpush1.msra.mxu0 0.0
      %1465 = vmatprep.subr.mxu0 0.0
      %1466 = vmatpush1.msra.mxu0 0.0
      %1467 = vmatprep.subr.mxu0 0.0
      %1468 = vmatpush1.msra.mxu0 0.0
      %1469 = vmatprep.subr.mxu0 0.0
      %1470 = vmatpush1.msra.mxu0 0.0
      %1471 = vmatprep.subr.mxu0 0.0
      %1472 = vmatpush1.msra.mxu0 0.0
      %1473 = vmatprep.subr.mxu0 0.0
      %1474 = vmatpush1.msra.mxu0 0.0
      %1475 = vmatprep.subr.mxu0 0.0
      %1476 = vmatpush1.msra.mxu0 0.0
      %1477 = vmatprep.subr.mxu0 0.0
      %1478 = vmatpush1.msra.mxu0 0.0
      %1479 = vmatprep.subr.mxu0 0.0
      %1480 = vmatpush1.msra.mxu0 0.0
      %1481 = vmatprep.mubr.f32.mxu0 0.0
      %1482 = vmatmul.mubr.f32.gmra.mrb[0].mxu0 %v1415
      %v1483 = vpop.f32.mrb[0].mxu0
      %v1484 = vadd.f32 0.0, %v1483
      %v1485 = vpop.f32.mrb[0].mxu0
      %1486 = vdwg.mxu0
      %v1488 = vsel %vm114, %v1413, 0
      %1490 = vmatprep.subr.mxu0 0.0
      %1491 = vmatpush1.msra.mxu0 %v1336
      %1492 = vmatprep.subr.mxu0 0.0
      %1493 = vmatpush1.msra.mxu0 0.0
      %1494 = vmatprep.subr.mxu0 0.0
      %1495 = vmatpush1.msra.mxu0 0.0
      %1496 = vmatprep.subr.mxu0 0.0
      %1497 = vmatpush1.msra.mxu0 0.0
      %1498 = vmatprep.subr.mxu0 0.0
      %1499 = vmatpush1.msra.mxu0 0.0
      %1500 = vmatprep.subr.mxu0 0.0
      %1501 = vmatpush1.msra.mxu0 0.0
      %1502 = vmatprep.subr.mxu0 0.0
      %1503 = vmatpush1.msra.mxu0 0.0
      %1504 = vmatprep.subr.mxu0 0.0
      %1505 = vmatpush1.msra.mxu0 0.0
      %1506 = vmatprep.subr.mxu0 0.0
      %1507 = vmatpush1.msra.mxu0 0.0
      %1508 = vmatprep.subr.mxu0 0.0
      %1509 = vmatpush1.msra.mxu0 0.0
      %1510 = vmatprep.subr.mxu0 0.0
      %1511 = vmatpush1.msra.mxu0 0.0
      %1512 = vmatprep.subr.mxu0 0.0
      %1513 = vmatpush1.msra.mxu0 0.0
      %1514 = vmatprep.subr.mxu0 0.0
      %1515 = vmatpush1.msra.mxu0 0.0
      %1516 = vmatprep.subr.mxu0 0.0
      %1517 = vmatpush1.msra.mxu0 0.0
      %1518 = vmatprep.subr.mxu0 0.0
      %1519 = vmatpush1.msra.mxu0 0.0
      %1520 = vmatprep.subr.mxu0 0.0
      %1521 = vmatpush1.msra.mxu0 0.0
      %1522 = vmatprep.subr.mxu0 0.0
      %1523 = vmatpush1.msra.mxu0 0.0
      %1524 = vmatprep.subr.mxu0 0.0
      %1525 = vmatpush1.msra.mxu0 0.0
      %1526 = vmatprep.subr.mxu0 0.0
      %1527 = vmatpush1.msra.mxu0 0.0
      %1528 = vmatprep.subr.mxu0 0.0
      %1529 = vmatpush1.msra.mxu0 0.0
      %1530 = vmatprep.subr.mxu0 0.0
      %1531 = vmatpush1.msra.mxu0 0.0
      %1532 = vmatprep.subr.mxu0 0.0
      %1533 = vmatpush1.msra.mxu0 0.0
      %1534 = vmatprep.subr.mxu0 0.0
      %1535 = vmatpush1.msra.mxu0 0.0
      %1536 = vmatprep.subr.mxu0 0.0
      %1537 = vmatpush1.msra.mxu0 0.0
      %1538 = vmatprep.subr.mxu0 0.0
      %1539 = vmatpush1.msra.mxu0 0.0
      %1540 = vmatprep.subr.mxu0 0.0
      %1541 = vmatpush1.msra.mxu0 0.0
      %1542 = vmatprep.subr.mxu0 0.0
      %1543 = vmatpush1.msra.mxu0 0.0
      %1544 = vmatprep.subr.mxu0 0.0
      %1545 = vmatpush1.msra.mxu0 0.0
      %1546 = vmatprep.subr.mxu0 0.0
      %1547 = vmatpush1.msra.mxu0 0.0
      %1548 = vmatprep.subr.mxu0 0.0
      %1549 = vmatpush1.msra.mxu0 0.0
      %1550 = vmatprep.subr.mxu0 0.0
      %1551 = vmatpush1.msra.mxu0 0.0
      %1552 = vmatprep.subr.mxu0 0.0
      %1553 = vmatpush1.msra.mxu0 0.0
      %1554 = vmatprep.mubr.f32.mxu0 0.0
      %1555 = vmatmul.mubr.f32.gmra.mrb[0].mxu0 %v1488
      %v1556 = vpop.f32.mrb[0].mxu0
      %v1557 = vadd.f32 0.0, %v1556
      %v1558 = vpop.f32.mrb[0].mxu0
      %1559 = vdwg.mxu0
      %v1561 = vsel %vm114, %v1557, 0
      %1563 = vmatprep.subr.mxu0 0.0
      %1564 = vmatpush1.msra.mxu0 %v1484
      %1565 = vmatprep.subr.mxu0 0.0
      %1566 = vmatpush1.msra.mxu0 0.0
      %1567 = vmatprep.subr.mxu0 0.0
      %1568 = vmatpush1.msra.mxu0 0.0
      %1569 = vmatprep.subr.mxu0 0.0
      %1570 = vmatpush1.msra.mxu0 0.0
      %1571 = vmatprep.subr.mxu0 0.0
      %1572 = vmatpush1.msra.mxu0 0.0
      %1573 = vmatprep.subr.mxu0 0.0
      %1574 = vmatpush1.msra.mxu0 0.0
      %1575 = vmatprep.subr.mxu0 0.0
      %1576 = vmatpush1.msra.mxu0 0.0
      %1577 = vmatprep.subr.mxu0 0.0
      %1578 = vmatpush1.msra.mxu0 0.0
      %1579 = vmatprep.subr.mxu0 0.0
      %1580 = vmatpush1.msra.mxu0 0.0
      %1581 = vmatprep.subr.mxu0 0.0
      %1582 = vmatpush1.msra.mxu0 0.0
      %1583 = vmatprep.subr.mxu0 0.0
      %1584 = vmatpush1.msra.mxu0 0.0
      %1585 = vmatprep.subr.mxu0 0.0
      %1586 = vmatpush1.msra.mxu0 0.0
      %1587 = vmatprep.subr.mxu0 0.0
      %1588 = vmatpush1.msra.mxu0 0.0
      %1589 = vmatprep.subr.mxu0 0.0
      %1590 = vmatpush1.msra.mxu0 0.0
      %1591 = vmatprep.subr.mxu0 0.0
      %1592 = vmatpush1.msra.mxu0 0.0
      %1593 = vmatprep.subr.mxu0 0.0
      %1594 = vmatpush1.msra.mxu0 0.0
      %1595 = vmatprep.subr.mxu0 0.0
      %1596 = vmatpush1.msra.mxu0 0.0
      %1597 = vmatprep.subr.mxu0 0.0
      %1598 = vmatpush1.msra.mxu0 0.0
      %1599 = vmatprep.subr.mxu0 0.0
      %1600 = vmatpush1.msra.mxu0 0.0
      %1601 = vmatprep.subr.mxu0 0.0
      %1602 = vmatpush1.msra.mxu0 0.0
      %1603 = vmatprep.subr.mxu0 0.0
      %1604 = vmatpush1.msra.mxu0 0.0
      %1605 = vmatprep.subr.mxu0 0.0
      %1606 = vmatpush1.msra.mxu0 0.0
      %1607 = vmatprep.subr.mxu0 0.0
      %1608 = vmatpush1.msra.mxu0 0.0
      %1609 = vmatprep.subr.mxu0 0.0
      %1610 = vmatpush1.msra.mxu0 0.0
      %1611 = vmatprep.subr.mxu0 0.0
      %1612 = vmatpush1.msra.mxu0 0.0
      %1613 = vmatprep.subr.mxu0 0.0
      %1614 = vmatpush1.msra.mxu0 0.0
      %1615 = vmatprep.subr.mxu0 0.0
      %1616 = vmatpush1.msra.mxu0 0.0
      %1617 = vmatprep.subr.mxu0 0.0
      %1618 = vmatpush1.msra.mxu0 0.0
      %1619 = vmatprep.subr.mxu0 0.0
      %1620 = vmatpush1.msra.mxu0 0.0
      %1621 = vmatprep.subr.mxu0 0.0
      %1622 = vmatpush1.msra.mxu0 0.0
      %1623 = vmatprep.subr.mxu0 0.0
      %1624 = vmatpush1.msra.mxu0 0.0
      %1625 = vmatprep.subr.mxu0 0.0
      %1626 = vmatpush1.msra.mxu0 0.0
      %1627 = vmatprep.mubr.f32.mxu0 0.0
      %1628 = vmatmul.mubr.f32.gmra.mrb[0].mxu0 %v1561
      %v1629 = vpop.f32.mrb[0].mxu0
      %v1630 = vadd.f32 0.0, %v1629
      %v1631 = vpop.f32.mrb[0].mxu0
      %1632 = vdwg.mxu0
      %v1633 = vmul.f32 %v1630, 0.5
      %v1634 = vsub.f32 %v230, %v1633
      %v1636 = vsel %vm114, %v1484, 0
      %1638 = vmatprep.subr.mxu0 0.0
      %1639 = vmatpush1.msra.mxu0 %v1634
      %1640 = vmatprep.subr.mxu0 0.0
      %1641 = vmatpush1.msra.mxu0 0.0
      %1642 = vmatprep.subr.mxu0 0.0
      %1643 = vmatpush1.msra.mxu0 0.0
      %1644 = vmatprep.subr.mxu0 0.0
      %1645 = vmatpush1.msra.mxu0 0.0
      %1646 = vmatprep.subr.mxu0 0.0
      %1647 = vmatpush1.msra.mxu0 0.0
      %1648 = vmatprep.subr.mxu0 0.0
      %1649 = vmatpush1.msra.mxu0 0.0
      %1650 = vmatprep.subr.mxu0 0.0
      %1651 = vmatpush1.msra.mxu0 0.0
      %1652 = vmatprep.subr.mxu0 0.0
      %1653 = vmatpush1.msra.mxu0 0.0
      %1654 = vmatprep.subr.mxu0 0.0
      %1655 = vmatpush1.msra.mxu0 0.0
      %1656 = vmatprep.subr.mxu0 0.0
      %1657 = vmatpush1.msra.mxu0 0.0
      %1658 = vmatprep.subr.mxu0 0.0
      %1659 = vmatpush1.msra.mxu0 0.0
      %1660 = vmatprep.subr.mxu0 0.0
      %1661 = vmatpush1.msra.mxu0 0.0
      %1662 = vmatprep.subr.mxu0 0.0
      %1663 = vmatpush1.msra.mxu0 0.0
      %1664 = vmatprep.subr.mxu0 0.0
      %1665 = vmatpush1.msra.mxu0 0.0
      %1666 = vmatprep.subr.mxu0 0.0
      %1667 = vmatpush1.msra.mxu0 0.0
      %1668 = vmatprep.subr.mxu0 0.0
      %1669 = vmatpush1.msra.mxu0 0.0
      %1670 = vmatprep.subr.mxu0 0.0
      %1671 = vmatpush1.msra.mxu0 0.0
      %1672 = vmatprep.subr.mxu0 0.0
      %1673 = vmatpush1.msra.mxu0 0.0
      %1674 = vmatprep.subr.mxu0 0.0
      %1675 = vmatpush1.msra.mxu0 0.0
      %1676 = vmatprep.subr.mxu0 0.0
      %1677 = vmatpush1.msra.mxu0 0.0
      %1678 = vmatprep.subr.mxu0 0.0
      %1679 = vmatpush1.msra.mxu0 0.0
      %1680 = vmatprep.subr.mxu0 0.0
      %1681 = vmatpush1.msra.mxu0 0.0
      %1682 = vmatprep.subr.mxu0 0.0
      %1683 = vmatpush1.msra.mxu0 0.0
      %1684 = vmatprep.subr.mxu0 0.0
      %1685 = vmatpush1.msra.mxu0 0.0
      %1686 = vmatprep.subr.mxu0 0.0
      %1687 = vmatpush1.msra.mxu0 0.0
      %1688 = vmatprep.subr.mxu0 0.0
      %1689 = vmatpush1.msra.mxu0 0.0
      %1690 = vmatprep.subr.mxu0 0.0
      %1691 = vmatpush1.msra.mxu0 0.0
      %1692 = vmatprep.subr.mxu0 0.0
      %1693 = vmatpush1.msra.mxu0 0.0
      %1694 = vmatprep.subr.mxu0 0.0
      %1695 = vmatpush1.msra.mxu0 0.0
      %1696 = vmatprep.subr.mxu0 0.0
      %1697 = vmatpush1.msra.mxu0 0.0
      %1698 = vmatprep.subr.mxu0 0.0
      %1699 = vmatpush1.msra.mxu0 0.0
      %1700 = vmatprep.subr.mxu0 0.0
      %1701 = vmatpush1.msra.mxu0 0.0
      %1702 = vmatprep.mubr.f32.mxu0 0.0
      %1703 = vmatmul.mubr.f32.gmra.mrb[0].mxu0 %v1636
      %v1704 = vpop.f32.mrb[0].mxu0
      %v1705 = vadd.f32 0.0, %v1704
      %v1706 = vpop.f32.mrb[0].mxu0
      %1707 = vdwg.mxu0
      %v1709 = vsel %vm114, %v1634, 0
      %1711 = vmatprep.subr.mxu0 0.0
      %1712 = vmatpush1.msra.mxu0 %v1557
      %1713 = vmatprep.subr.mxu0 0.0
      %1714 = vmatpush1.msra.mxu0 0.0
      %1715 = vmatprep.subr.mxu0 0.0
      %1716 = vmatpush1.msra.mxu0 0.0
      %1717 = vmatprep.subr.mxu0 0.0
      %1718 = vmatpush1.msra.mxu0 0.0
      %1719 = vmatprep.subr.mxu0 0.0
      %1720 = vmatpush1.msra.mxu0 0.0
      %1721 = vmatprep.subr.mxu0 0.0
      %1722 = vmatpush1.msra.mxu0 0.0
      %1723 = vmatprep.subr.mxu0 0.0
      %1724 = vmatpush1.msra.mxu0 0.0
      %1725 = vmatprep.subr.mxu0 0.0
      %1726 = vmatpush1.msra.mxu0 0.0
      %1727 = vmatprep.subr.mxu0 0.0
      %1728 = vmatpush1.msra.mxu0 0.0
      %1729 = vmatprep.subr.mxu0 0.0
      %1730 = vmatpush1.msra.mxu0 0.0
      %1731 = vmatprep.subr.mxu0 0.0
      %1732 = vmatpush1.msra.mxu0 0.0
      %1733 = vmatprep.subr.mxu0 0.0
      %1734 = vmatpush1.msra.mxu0 0.0
      %1735 = vmatprep.subr.mxu0 0.0
      %1736 = vmatpush1.msra.mxu0 0.0
      %1737 = vmatprep.subr.mxu0 0.0
      %1738 = vmatpush1.msra.mxu0 0.0
      %1739 = vmatprep.subr.mxu0 0.0
      %1740 = vmatpush1.msra.mxu0 0.0
      %1741 = vmatprep.subr.mxu0 0.0
      %1742 = vmatpush1.msra.mxu0 0.0
      %1743 = vmatprep.subr.mxu0 0.0
      %1744 = vmatpush1.msra.mxu0 0.0
      %1745 = vmatprep.subr.mxu0 0.0
      %1746 = vmatpush1.msra.mxu0 0.0
      %1747 = vmatprep.subr.mxu0 0.0
      %1748 = vmatpush1.msra.mxu0 0.0
      %1749 = vmatprep.subr.mxu0 0.0
      %1750 = vmatpush1.msra.mxu0 0.0
      %1751 = vmatprep.subr.mxu0 0.0
      %1752 = vmatpush1.msra.mxu0 0.0
      %1753 = vmatprep.subr.mxu0 0.0
      %1754 = vmatpush1.msra.mxu0 0.0
      %1755 = vmatprep.subr.mxu0 0.0
      %1756 = vmatpush1.msra.mxu0 0.0
      %1757 = vmatprep.subr.mxu0 0.0
      %1758 = vmatpush1.msra.mxu0 0.0
      %1759 = vmatprep.subr.mxu0 0.0
      %1760 = vmatpush1.msra.mxu0 0.0
      %1761 = vmatprep.subr.mxu0 0.0
      %1762 = vmatpush1.msra.mxu0 0.0
      %1763 = vmatprep.subr.mxu0 0.0
      %1764 = vmatpush1.msra.mxu0 0.0
      %1765 = vmatprep.subr.mxu0 0.0
      %1766 = vmatpush1.msra.mxu0 0.0
      %1767 = vmatprep.subr.mxu0 0.0
      %1768 = vmatpush1.msra.mxu0 0.0
      %1769 = vmatprep.subr.mxu0 0.0
      %1770 = vmatpush1.msra.mxu0 0.0
      %1771 = vmatprep.subr.mxu0 0.0
      %1772 = vmatpush1.msra.mxu0 0.0
      %1773 = vmatprep.subr.mxu0 0.0
      %1774 = vmatpush1.msra.mxu0 0.0
      %1775 = vmatprep.mubr.f32.mxu0 0.0
      %1776 = vmatmul.mubr.f32.gmra.mrb[0].mxu0 %v1709
      %v1777 = vpop.f32.mrb[0].mxu0
      %v1778 = vadd.f32 0.0, %v1777
      %v1779 = vpop.f32.mrb[0].mxu0
      %1780 = vdwg.mxu0
      %v1782 = vsel %vm114, %v1778, 0
      %1784 = vmatprep.subr.mxu0 0.0
      %1785 = vmatpush1.msra.mxu0 %v1705
      %1786 = vmatprep.subr.mxu0 0.0
      %1787 = vmatpush1.msra.mxu0 0.0
      %1788 = vmatprep.subr.mxu0 0.0
      %1789 = vmatpush1.msra.mxu0 0.0
      %1790 = vmatprep.subr.mxu0 0.0
      %1791 = vmatpush1.msra.mxu0 0.0
      %1792 = vmatprep.subr.mxu0 0.0
      %1793 = vmatpush1.msra.mxu0 0.0
      %1794 = vmatprep.subr.mxu0 0.0
      %1795 = vmatpush1.msra.mxu0 0.0
      %1796 = vmatprep.subr.mxu0 0.0
      %1797 = vmatpush1.msra.mxu0 0.0
      %1798 = vmatprep.subr.mxu0 0.0
      %1799 = vmatpush1.msra.mxu0 0.0
      %1800 = vmatprep.subr.mxu0 0.0
      %1801 = vmatpush1.msra.mxu0 0.0
      %1802 = vmatprep.subr.mxu0 0.0
      %1803 = vmatpush1.msra.mxu0 0.0
      %1804 = vmatprep.subr.mxu0 0.0
      %1805 = vmatpush1.msra.mxu0 0.0
      %1806 = vmatprep.subr.mxu0 0.0
      %1807 = vmatpush1.msra.mxu0 0.0
      %1808 = vmatprep.subr.mxu0 0.0
      %1809 = vmatpush1.msra.mxu0 0.0
      %1810 = vmatprep.subr.mxu0 0.0
      %1811 = vmatpush1.msra.mxu0 0.0
      %1812 = vmatprep.subr.mxu0 0.0
      %1813 = vmatpush1.msra.mxu0 0.0
      %1814 = vmatprep.subr.mxu0 0.0
      %1815 = vmatpush1.msra.mxu0 0.0
      %1816 = vmatprep.subr.mxu0 0.0
      %1817 = vmatpush1.msra.mxu0 0.0
      %1818 = vmatprep.subr.mxu0 0.0
      %1819 = vmatpush1.msra.mxu0 0.0
      %1820 = vmatprep.subr.mxu0 0.0
      %1821 = vmatpush1.msra.mxu0 0.0
      %1822 = vmatprep.subr.mxu0 0.0
      %1823 = vmatpush1.msra.mxu0 0.0
      %1824 = vmatprep.subr.mxu0 0.0
      %1825 = vmatpush1.msra.mxu0 0.0
      %1826 = vmatprep.subr.mxu0 0.0
      %1827 = vmatpush1.msra.mxu0 0.0
      %1828 = vmatprep.subr.mxu0 0.0
      %1829 = vmatpush1.msra.mxu0 0.0
      %1830 = vmatprep.subr.mxu0 0.0
      %1831 = vmatpush1.msra.mxu0 0.0
      %1832 = vmatprep.subr.mxu0 0.0
      %1833 = vmatpush1.msra.mxu0 0.0
      %1834 = vmatprep.subr.mxu0 0.0
      %1835 = vmatpush1.msra.mxu0 0.0
      %1836 = vmatprep.subr.mxu0 0.0
      %1837 = vmatpush1.msra.mxu0 0.0
      %1838 = vmatprep.subr.mxu0 0.0
      %1839 = vmatpush1.msra.mxu0 0.0
      %1840 = vmatprep.subr.mxu0 0.0
      %1841 = vmatpush1.msra.mxu0 0.0
      %1842 = vmatprep.subr.mxu0 0.0
      %1843 = vmatpush1.msra.mxu0 0.0
      %1844 = vmatprep.subr.mxu0 0.0
      %1845 = vmatpush1.msra.mxu0 0.0
      %1846 = vmatprep.subr.mxu0 0.0
      %1847 = vmatpush1.msra.mxu0 0.0
      %1848 = vmatprep.mubr.f32.mxu0 0.0
      %1849 = vmatmul.mubr.f32.gmra.mrb[0].mxu0 %v1782
      %v1850 = vpop.f32.mrb[0].mxu0
      %v1851 = vadd.f32 0.0, %v1850
      %v1852 = vpop.f32.mrb[0].mxu0
      %1853 = vdwg.mxu0
      %v1854 = vmul.f32 %v1851, 0.5
      %v1855 = vsub.f32 %v230, %v1854
      %v1857 = vsel %vm114, %v1705, 0
      %1859 = vmatprep.subr.mxu0 0.0
      %1860 = vmatpush1.msra.mxu0 %v1855
      %1861 = vmatprep.subr.mxu0 0.0
      %1862 = vmatpush1.msra.mxu0 0.0
      %1863 = vmatprep.subr.mxu0 0.0
      %1864 = vmatpush1.msra.mxu0 0.0
      %1865 = vmatprep.subr.mxu0 0.0
      %1866 = vmatpush1.msra.mxu0 0.0
      %1867 = vmatprep.subr.mxu0 0.0
      %1868 = vmatpush1.msra.mxu0 0.0
      %1869 = vmatprep.subr.mxu0 0.0
      %1870 = vmatpush1.msra.mxu0 0.0
      %1871 = vmatprep.subr.mxu0 0.0
      %1872 = vmatpush1.msra.mxu0 0.0
      %1873 = vmatprep.subr.mxu0 0.0
      %1874 = vmatpush1.msra.mxu0 0.0
      %1875 = vmatprep.subr.mxu0 0.0
      %1876 = vmatpush1.msra.mxu0 0.0
      %1877 = vmatprep.subr.mxu0 0.0
      %1878 = vmatpush1.msra.mxu0 0.0
      %1879 = vmatprep.subr.mxu0 0.0
      %1880 = vmatpush1.msra.mxu0 0.0
      %1881 = vmatprep.subr.mxu0 0.0
      %1882 = vmatpush1.msra.mxu0 0.0
      %1883 = vmatprep.subr.mxu0 0.0
      %1884 = vmatpush1.msra.mxu0 0.0
      %1885 = vmatprep.subr.mxu0 0.0
      %1886 = vmatpush1.msra.mxu0 0.0
      %1887 = vmatprep.subr.mxu0 0.0
      %1888 = vmatpush1.msra.mxu0 0.0
      %1889 = vmatprep.subr.mxu0 0.0
      %1890 = vmatpush1.msra.mxu0 0.0
      %1891 = vmatprep.subr.mxu0 0.0
      %1892 = vmatpush1.msra.mxu0 0.0
      %1893 = vmatprep.subr.mxu0 0.0
      %1894 = vmatpush1.msra.mxu0 0.0
      %1895 = vmatprep.subr.mxu0 0.0
      %1896 = vmatpush1.msra.mxu0 0.0
      %1897 = vmatprep.subr.mxu0 0.0
      %1898 = vmatpush1.msra.mxu0 0.0
      %1899 = vmatprep.subr.mxu0 0.0
      %1900 = vmatpush1.msra.mxu0 0.0
      %1901 = vmatprep.subr.mxu0 0.0
      %1902 = vmatpush1.msra.mxu0 0.0
      %1903 = vmatprep.subr.mxu0 0.0
      %1904 = vmatpush1.msra.mxu0 0.0
      %1905 = vmatprep.subr.mxu0 0.0
      %1906 = vmatpush1.msra.mxu0 0.0
      %1907 = vmatprep.subr.mxu0 0.0
      %1908 = vmatpush1.msra.mxu0 0.0
      %1909 = vmatprep.subr.mxu0 0.0
      %1910 = vmatpush1.msra.mxu0 0.0
      %1911 = vmatprep.subr.mxu0 0.0
      %1912 = vmatpush1.msra.mxu0 0.0
      %1913 = vmatprep.subr.mxu0 0.0
      %1914 = vmatpush1.msra.mxu0 0.0
      %1915 = vmatprep.subr.mxu0 0.0
      %1916 = vmatpush1.msra.mxu0 0.0
      %1917 = vmatprep.subr.mxu0 0.0
      %1918 = vmatpush1.msra.mxu0 0.0
      %1919 = vmatprep.subr.mxu0 0.0
      %1920 = vmatpush1.msra.mxu0 0.0
      %1921 = vmatprep.subr.mxu0 0.0
      %1922 = vmatpush1.msra.mxu0 0.0
      %1923 = vmatprep.mubr.f32.mxu0 0.0
      %1924 = vmatmul.mubr.f32.gmra.mrb[0].mxu0 %v1857
      %v1925 = vpop.f32.mrb[0].mxu0
      %v1926 = vadd.f32 0.0, %v1925
      %v1927 = vpop.f32.mrb[0].mxu0
      %1928 = vdwg.mxu0
      %v1930 = vsel %vm114, %v1855, 0
      %1932 = vmatprep.subr.mxu0 0.0
      %1933 = vmatpush1.msra.mxu0 %v1778
      %1934 = vmatprep.subr.mxu0 0.0
      %1935 = vmatpush1.msra.mxu0 0.0
      %1936 = vmatprep.subr.mxu0 0.0
      %1937 = vmatpush1.msra.mxu0 0.0
      %1938 = vmatprep.subr.mxu0 0.0
      %1939 = vmatpush1.msra.mxu0 0.0
      %1940 = vmatprep.subr.mxu0 0.0
      %1941 = vmatpush1.msra.mxu0 0.0
      %1942 = vmatprep.subr.mxu0 0.0
      %1943 = vmatpush1.msra.mxu0 0.0
      %1944 = vmatprep.subr.mxu0 0.0
      %1945 = vmatpush1.msra.mxu0 0.0
      %1946 = vmatprep.subr.mxu0 0.0
      %1947 = vmatpush1.msra.mxu0 0.0
      %1948 = vmatprep.subr.mxu0 0.0
      %1949 = vmatpush1.msra.mxu0 0.0
      %1950 = vmatprep.subr.mxu0 0.0
      %1951 = vmatpush1.msra.mxu0 0.0
      %1952 = vmatprep.subr.mxu0 0.0
      %1953 = vmatpush1.msra.mxu0 0.0
      %1954 = vmatprep.subr.mxu0 0.0
      %1955 = vmatpush1.msra.mxu0 0.0
      %1956 = vmatprep.subr.mxu0 0.0
      %1957 = vmatpush1.msra.mxu0 0.0
      %1958 = vmatprep.subr.mxu0 0.0
      %1959 = vmatpush1.msra.mxu0 0.0
      %1960 = vmatprep.subr.mxu0 0.0
      %1961 = vmatpush1.msra.mxu0 0.0
      %1962 = vmatprep.subr.mxu0 0.0
      %1963 = vmatpush1.msra.mxu0 0.0
      %1964 = vmatprep.subr.mxu0 0.0
      %1965 = vmatpush1.msra.mxu0 0.0
      %1966 = vmatprep.subr.mxu0 0.0
      %1967 = vmatpush1.msra.mxu0 0.0
      %1968 = vmatprep.subr.mxu0 0.0
      %1969 = vmatpush1.msra.mxu0 0.0
      %1970 = vmatprep.subr.mxu0 0.0
      %1971 = vmatpush1.msra.mxu0 0.0
      %1972 = vmatprep.subr.mxu0 0.0
      %1973 = vmatpush1.msra.mxu0 0.0
      %1974 = vmatprep.subr.mxu0 0.0
      %1975 = vmatpush1.msra.mxu0 0.0
      %1976 = vmatprep.subr.mxu0 0.0
      %1977 = vmatpush1.msra.mxu0 0.0
      %1978 = vmatprep.subr.mxu0 0.0
      %1979 = vmatpush1.msra.mxu0 0.0
      %1980 = vmatprep.subr.mxu0 0.0
      %1981 = vmatpush1.msra.mxu0 0.0
      %1982 = vmatprep.subr.mxu0 0.0
      %1983 = vmatpush1.msra.mxu0 0.0
      %1984 = vmatprep.subr.mxu0 0.0
      %1985 = vmatpush1.msra.mxu0 0.0
      %1986 = vmatprep.subr.mxu0 0.0
      %1987 = vmatpush1.msra.mxu0 0.0
      %1988 = vmatprep.subr.mxu0 0.0
      %1989 = vmatpush1.msra.mxu0 0.0
      %1990 = vmatprep.subr.mxu0 0.0
      %1991 = vmatpush1.msra.mxu0 0.0
      %1992 = vmatprep.subr.mxu0 0.0
      %1993 = vmatpush1.msra.mxu0 0.0
      %1994 = vmatprep.subr.mxu0 0.0
      %1995 = vmatpush1.msra.mxu0 0.0
      %1996 = vmatprep.mubr.f32.mxu0 0.0
      %1997 = vmatmul.mubr.f32.gmra.mrb[0].mxu0 %v1930
      %v1998 = vpop.f32.mrb[0].mxu0
      %v1999 = vadd.f32 0.0, %v1998
      %v2000 = vpop.f32.mrb[0].mxu0
      %2001 = vdwg.mxu0
      %v2003 = vsel %vm114, %v1999, 0
      %2005 = vmatprep.subr.mxu0 0.0
      %2006 = vmatpush1.msra.mxu0 %v1926
      %2007 = vmatprep.subr.mxu0 0.0
      %2008 = vmatpush1.msra.mxu0 0.0
      %2009 = vmatprep.subr.mxu0 0.0
      %2010 = vmatpush1.msra.mxu0 0.0
      %2011 = vmatprep.subr.mxu0 0.0
      %2012 = vmatpush1.msra.mxu0 0.0
      %2013 = vmatprep.subr.mxu0 0.0
      %2014 = vmatpush1.msra.mxu0 0.0
      %2015 = vmatprep.subr.mxu0 0.0
      %2016 = vmatpush1.msra.mxu0 0.0
      %2017 = vmatprep.subr.mxu0 0.0
      %2018 = vmatpush1.msra.mxu0 0.0
      %2019 = vmatprep.subr.mxu0 0.0
      %2020 = vmatpush1.msra.mxu0 0.0
      %2021 = vmatprep.subr.mxu0 0.0
      %2022 = vmatpush1.msra.mxu0 0.0
      %2023 = vmatprep.subr.mxu0 0.0
      %2024 = vmatpush1.msra.mxu0 0.0
      %2025 = vmatprep.subr.mxu0 0.0
      %2026 = vmatpush1.msra.mxu0 0.0
      %2027 = vmatprep.subr.mxu0 0.0
      %2028 = vmatpush1.msra.mxu0 0.0
      %2029 = vmatprep.subr.mxu0 0.0
      %2030 = vmatpush1.msra.mxu0 0.0
      %2031 = vmatprep.subr.mxu0 0.0
      %2032 = vmatpush1.msra.mxu0 0.0
      %2033 = vmatprep.subr.mxu0 0.0
      %2034 = vmatpush1.msra.mxu0 0.0
      %2035 = vmatprep.subr.mxu0 0.0
      %2036 = vmatpush1.msra.mxu0 0.0
      %2037 = vmatprep.subr.mxu0 0.0
      %2038 = vmatpush1.msra.mxu0 0.0
      %2039 = vmatprep.subr.mxu0 0.0
      %2040 = vmatpush1.msra.mxu0 0.0
      %2041 = vmatprep.subr.mxu0 0.0
      %2042 = vmatpush1.msra.mxu0 0.0
      %2043 = vmatprep.subr.mxu0 0.0
      %2044 = vmatpush1.msra.mxu0 0.0
      %2045 = vmatprep.subr.mxu0 0.0
      %2046 = vmatpush1.msra.mxu0 0.0
      %2047 = vmatprep.subr.mxu0 0.0
      %2048 = vmatpush1.msra.mxu0 0.0
      %2049 = vmatprep.subr.mxu0 0.0
      %2050 = vmatpush1.msra.mxu0 0.0
      %2051 = vmatprep.subr.mxu0 0.0
      %2052 = vmatpush1.msra.mxu0 0.0
      %2053 = vmatprep.subr.mxu0 0.0
      %2054 = vmatpush1.msra.mxu0 0.0
      %2055 = vmatprep.subr.mxu0 0.0
      %2056 = vmatpush1.msra.mxu0 0.0
      %2057 = vmatprep.subr.mxu0 0.0
      %2058 = vmatpush1.msra.mxu0 0.0
      %2059 = vmatprep.subr.mxu0 0.0
      %2060 = vmatpush1.msra.mxu0 0.0
      %2061 = vmatprep.subr.mxu0 0.0
      %2062 = vmatpush1.msra.mxu0 0.0
      %2063 = vmatprep.subr.mxu0 0.0
      %2064 = vmatpush1.msra.mxu0 0.0
      %2065 = vmatprep.subr.mxu0 0.0
      %2066 = vmatpush1.msra.mxu0 0.0
      %2067 = vmatprep.subr.mxu0 0.0
      %2068 = vmatpush1.msra.mxu0 0.0
      %2069 = vmatprep.mubr.f32.mxu0 0.0
      %2070 = vmatmul.mubr.f32.gmra.mrb[0].mxu0 %v2003
      %v2071 = vpop.f32.mrb[0].mxu0
      %v2072 = vadd.f32 0.0, %v2071
      %v2073 = vpop.f32.mrb[0].mxu0
      %2074 = vdwg.mxu0
      %v2075 = vmul.f32 %v2072, 0.5
      %v2076 = vsub.f32 %v230, %v2075
      %v2078 = vsel %vm114, %v1926, 0
      %2080 = vmatprep.subr.mxu0 0.0
      %2081 = vmatpush1.msra.mxu0 %v2076
      %2082 = vmatprep.subr.mxu0 0.0
      %2083 = vmatpush1.msra.mxu0 0.0
      %2084 = vmatprep.subr.mxu0 0.0
      %2085 = vmatpush1.msra.mxu0 0.0
      %2086 = vmatprep.subr.mxu0 0.0
      %2087 = vmatpush1.msra.mxu0 0.0
      %2088 = vmatprep.subr.mxu0 0.0
      %2089 = vmatpush1.msra.mxu0 0.0
      %2090 = vmatprep.subr.mxu0 0.0
      %2091 = vmatpush1.msra.mxu0 0.0
      %2092 = vmatprep.subr.mxu0 0.0
      %2093 = vmatpush1.msra.mxu0 0.0
      %2094 = vmatprep.subr.mxu0 0.0
      %2095 = vmatpush1.msra.mxu0 0.0
      %2096 = vmatprep.subr.mxu0 0.0
      %2097 = vmatpush1.msra.mxu0 0.0
      %2098 = vmatprep.subr.mxu0 0.0
      %2099 = vmatpush1.msra.mxu0 0.0
      %2100 = vmatprep.subr.mxu0 0.0
      %2101 = vmatpush1.msra.mxu0 0.0
      %2102 = vmatprep.subr.mxu0 0.0
      %2103 = vmatpush1.msra.mxu0 0.0
      %2104 = vmatprep.subr.mxu0 0.0
      %2105 = vmatpush1.msra.mxu0 0.0
      %2106 = vmatprep.subr.mxu0 0.0
      %2107 = vmatpush1.msra.mxu0 0.0
      %2108 = vmatprep.subr.mxu0 0.0
      %2109 = vmatpush1.msra.mxu0 0.0
      %2110 = vmatprep.subr.mxu0 0.0
      %2111 = vmatpush1.msra.mxu0 0.0
      %2112 = vmatprep.subr.mxu0 0.0
      %2113 = vmatpush1.msra.mxu0 0.0
      %2114 = vmatprep.subr.mxu0 0.0
      %2115 = vmatpush1.msra.mxu0 0.0
      %2116 = vmatprep.subr.mxu0 0.0
      %2117 = vmatpush1.msra.mxu0 0.0
      %2118 = vmatprep.subr.mxu0 0.0
      %2119 = vmatpush1.msra.mxu0 0.0
      %2120 = vmatprep.subr.mxu0 0.0
      %2121 = vmatpush1.msra.mxu0 0.0
      %2122 = vmatprep.subr.mxu0 0.0
      %2123 = vmatpush1.msra.mxu0 0.0
      %2124 = vmatprep.subr.mxu0 0.0
      %2125 = vmatpush1.msra.mxu0 0.0
      %2126 = vmatprep.subr.mxu0 0.0
      %2127 = vmatpush1.msra.mxu0 0.0
      %2128 = vmatprep.subr.mxu0 0.0
      %2129 = vmatpush1.msra.mxu0 0.0
      %2130 = vmatprep.subr.mxu0 0.0
      %2131 = vmatpush1.msra.mxu0 0.0
      %2132 = vmatprep.subr.mxu0 0.0
      %2133 = vmatpush1.msra.mxu0 0.0
      %2134 = vmatprep.subr.mxu0 0.0
      %2135 = vmatpush1.msra.mxu0 0.0
      %2136 = vmatprep.subr.mxu0 0.0
      %2137 = vmatpush1.msra.mxu0 0.0
      %2138 = vmatprep.subr.mxu0 0.0
      %2139 = vmatpush1.msra.mxu0 0.0
      %2140 = vmatprep.subr.mxu0 0.0
      %2141 = vmatpush1.msra.mxu0 0.0
      %2142 = vmatprep.subr.mxu0 0.0
      %2143 = vmatpush1.msra.mxu0 0.0
      %2144 = vmatprep.mubr.f32.mxu0 0.0
      %2145 = vmatmul.mubr.f32.gmra.mrb[0].mxu0 %v2078
      %v2146 = vpop.f32.mrb[0].mxu0
      %v2147 = vadd.f32 0.0, %v2146
      %v2148 = vpop.f32.mrb[0].mxu0
      %2149 = vdwg.mxu0
      %v2151 = vsel %vm114, %v2076, 0
      %2153 = vmatprep.subr.mxu0 0.0
      %2154 = vmatpush1.msra.mxu0 %v1999
      %2155 = vmatprep.subr.mxu0 0.0
      %2156 = vmatpush1.msra.mxu0 0.0
      %2157 = vmatprep.subr.mxu0 0.0
      %2158 = vmatpush1.msra.mxu0 0.0
      %2159 = vmatprep.subr.mxu0 0.0
      %2160 = vmatpush1.msra.mxu0 0.0
      %2161 = vmatprep.subr.mxu0 0.0
      %2162 = vmatpush1.msra.mxu0 0.0
      %2163 = vmatprep.subr.mxu0 0.0
      %2164 = vmatpush1.msra.mxu0 0.0
      %2165 = vmatprep.subr.mxu0 0.0
      %2166 = vmatpush1.msra.mxu0 0.0
      %2167 = vmatprep.subr.mxu0 0.0
      %2168 = vmatpush1.msra.mxu0 0.0
      %2169 = vmatprep.subr.mxu0 0.0
      %2170 = vmatpush1.msra.mxu0 0.0
      %2171 = vmatprep.subr.mxu0 0.0
      %2172 = vmatpush1.msra.mxu0 0.0
      %2173 = vmatprep.subr.mxu0 0.0
      %2174 = vmatpush1.msra.mxu0 0.0
      %2175 = vmatprep.subr.mxu0 0.0
      %2176 = vmatpush1.msra.mxu0 0.0
      %2177 = vmatprep.subr.mxu0 0.0
      %2178 = vmatpush1.msra.mxu0 0.0
      %2179 = vmatprep.subr.mxu0 0.0
      %2180 = vmatpush1.msra.mxu0 0.0
      %2181 = vmatprep.subr.mxu0 0.0
      %2182 = vmatpush1.msra.mxu0 0.0
      %2183 = vmatprep.subr.mxu0 0.0
      %2184 = vmatpush1.msra.mxu0 0.0
      %2185 = vmatprep.subr.mxu0 0.0
      %2186 = vmatpush1.msra.mxu0 0.0
      %2187 = vmatprep.subr.mxu0 0.0
      %2188 = vmatpush1.msra.mxu0 0.0
      %2189 = vmatprep.subr.mxu0 0.0
      %2190 = vmatpush1.msra.mxu0 0.0
      %2191 = vmatprep.subr.mxu0 0.0
      %2192 = vmatpush1.msra.mxu0 0.0
      %2193 = vmatprep.subr.mxu0 0.0
      %2194 = vmatpush1.msra.mxu0 0.0
      %2195 = vmatprep.subr.mxu0 0.0
      %2196 = vmatpush1.msra.mxu0 0.0
      %2197 = vmatprep.subr.mxu0 0.0
      %2198 = vmatpush1.msra.mxu0 0.0
      %2199 = vmatprep.subr.mxu0 0.0
      %2200 = vmatpush1.msra.mxu0 0.0
      %2201 = vmatprep.subr.mxu0 0.0
      %2202 = vmatpush1.msra.mxu0 0.0
      %2203 = vmatprep.subr.mxu0 0.0
      %2204 = vmatpush1.msra.mxu0 0.0
      %2205 = vmatprep.subr.mxu0 0.0
      %2206 = vmatpush1.msra.mxu0 0.0
      %2207 = vmatprep.subr.mxu0 0.0
      %2208 = vmatpush1.msra.mxu0 0.0
      %2209 = vmatprep.subr.mxu0 0.0
      %2210 = vmatpush1.msra.mxu0 0.0
      %2211 = vmatprep.subr.mxu0 0.0
      %2212 = vmatpush1.msra.mxu0 0.0
      %2213 = vmatprep.subr.mxu0 0.0
      %2214 = vmatpush1.msra.mxu0 0.0
      %2215 = vmatprep.subr.mxu0 0.0
      %2216 = vmatpush1.msra.mxu0 0.0
      %2217 = vmatprep.mubr.f32.mxu0 0.0
      %2218 = vmatmul.mubr.f32.gmra.mrb[0].mxu0 %v2151
      %v2219 = vpop.f32.mrb[0].mxu0
      %v2220 = vadd.f32 0.0, %v2219
      %v2221 = vpop.f32.mrb[0].mxu0
      %2222 = vdwg.mxu0
      %v2224 = vsel %vm114, %v2220, 0
      %2226 = vmatprep.subr.mxu0 0.0
      %2227 = vmatpush1.msra.mxu0 %v2147
      %2228 = vmatprep.subr.mxu0 0.0
      %2229 = vmatpush1.msra.mxu0 0.0
      %2230 = vmatprep.subr.mxu0 0.0
      %2231 = vmatpush1.msra.mxu0 0.0
      %2232 = vmatprep.subr.mxu0 0.0
      %2233 = vmatpush1.msra.mxu0 0.0
      %2234 = vmatprep.subr.mxu0 0.0
      %2235 = vmatpush1.msra.mxu0 0.0
      %2236 = vmatprep.subr.mxu0 0.0
      %2237 = vmatpush1.msra.mxu0 0.0
      %2238 = vmatprep.subr.mxu0 0.0
      %2239 = vmatpush1.msra.mxu0 0.0
      %2240 = vmatprep.subr.mxu0 0.0
      %2241 = vmatpush1.msra.mxu0 0.0
      %2242 = vmatprep.subr.mxu0 0.0
      %2243 = vmatpush1.msra.mxu0 0.0
      %2244 = vmatprep.subr.mxu0 0.0
      %2245 = vmatpush1.msra.mxu0 0.0
      %2246 = vmatprep.subr.mxu0 0.0
      %2247 = vmatpush1.msra.mxu0 0.0
      %2248 = vmatprep.subr.mxu0 0.0
      %2249 = vmatpush1.msra.mxu0 0.0
      %2250 = vmatprep.subr.mxu0 0.0
      %2251 = vmatpush1.msra.mxu0 0.0
      %2252 = vmatprep.subr.mxu0 0.0
      %2253 = vmatpush1.msra.mxu0 0.0
      %2254 = vmatprep.subr.mxu0 0.0
      %2255 = vmatpush1.msra.mxu0 0.0
      %2256 = vmatprep.subr.mxu0 0.0
      %2257 = vmatpush1.msra.mxu0 0.0
      %2258 = vmatprep.subr.mxu0 0.0
      %2259 = vmatpush1.msra.mxu0 0.0
      %2260 = vmatprep.subr.mxu0 0.0
      %2261 = vmatpush1.msra.mxu0 0.0
      %2262 = vmatprep.subr.mxu0 0.0
      %2263 = vmatpush1.msra.mxu0 0.0
      %2264 = vmatprep.subr.mxu0 0.0
      %2265 = vmatpush1.msra.mxu0 0.0
      %2266 = vmatprep.subr.mxu0 0.0
      %2267 = vmatpush1.msra.mxu0 0.0
      %2268 = vmatprep.subr.mxu0 0.0
      %2269 = vmatpush1.msra.mxu0 0.0
      %2270 = vmatprep.subr.mxu0 0.0
      %2271 = vmatpush1.msra.mxu0 0.0
      %2272 = vmatprep.subr.mxu0 0.0
      %2273 = vmatpush1.msra.mxu0 0.0
      %2274 = vmatprep.subr.mxu0 0.0
      %2275 = vmatpush1.msra.mxu0 0.0
      %2276 = vmatprep.subr.mxu0 0.0
      %2277 = vmatpush1.msra.mxu0 0.0
      %2278 = vmatprep.subr.mxu0 0.0
      %2279 = vmatpush1.msra.mxu0 0.0
      %2280 = vmatprep.subr.mxu0 0.0
      %2281 = vmatpush1.msra.mxu0 0.0
      %2282 = vmatprep.subr.mxu0 0.0
      %2283 = vmatpush1.msra.mxu0 0.0
      %2284 = vmatprep.subr.mxu0 0.0
      %2285 = vmatpush1.msra.mxu0 0.0
      %2286 = vmatprep.subr.mxu0 0.0
      %2287 = vmatpush1.msra.mxu0 0.0
      %2288 = vmatprep.subr.mxu0 0.0
      %2289 = vmatpush1.msra.mxu0 0.0
      %2290 = vmatprep.mubr.f32.mxu0 0.0
      %2291 = vmatmul.mubr.f32.gmra.mrb[0].mxu0 %v2224
      %v2292 = vpop.f32.mrb[0].mxu0
      %v2293 = vadd.f32 0.0, %v2292
      %v2294 = vpop.f32.mrb[0].mxu0
      %2295 = vdwg.mxu0
      %v2296 = vmul.f32 %v2293, 0.5
      %v2297 = vsub.f32 %v230, %v2296
      %v2299 = vsel %vm114, %v2147, 0
      %2301 = vmatprep.subr.mxu0 0.0
      %2302 = vmatpush1.msra.mxu0 %v2297
      %2303 = vmatprep.subr.mxu0 0.0
      %2304 = vmatpush1.msra.mxu0 0.0
      %2305 = vmatprep.subr.mxu0 0.0
      %2306 = vmatpush1.msra.mxu0 0.0
      %2307 = vmatprep.subr.mxu0 0.0
      %2308 = vmatpush1.msra.mxu0 0.0
      %2309 = vmatprep.subr.mxu0 0.0
      %2310 = vmatpush1.msra.mxu0 0.0
      %2311 = vmatprep.subr.mxu0 0.0
      %2312 = vmatpush1.msra.mxu0 0.0
      %2313 = vmatprep.subr.mxu0 0.0
      %2314 = vmatpush1.msra.mxu0 0.0
      %2315 = vmatprep.subr.mxu0 0.0
      %2316 = vmatpush1.msra.mxu0 0.0
      %2317 = vmatprep.subr.mxu0 0.0
      %2318 = vmatpush1.msra.mxu0 0.0
      %2319 = vmatprep.subr.mxu0 0.0
      %2320 = vmatpush1.msra.mxu0 0.0
      %2321 = vmatprep.subr.mxu0 0.0
      %2322 = vmatpush1.msra.mxu0 0.0
      %2323 = vmatprep.subr.mxu0 0.0
      %2324 = vmatpush1.msra.mxu0 0.0
      %2325 = vmatprep.subr.mxu0 0.0
      %2326 = vmatpush1.msra.mxu0 0.0
      %2327 = vmatprep.subr.mxu0 0.0
      %2328 = vmatpush1.msra.mxu0 0.0
      %2329 = vmatprep.subr.mxu0 0.0
      %2330 = vmatpush1.msra.mxu0 0.0
      %2331 = vmatprep.subr.mxu0 0.0
      %2332 = vmatpush1.msra.mxu0 0.0
      %2333 = vmatprep.subr.mxu0 0.0
      %2334 = vmatpush1.msra.mxu0 0.0
      %2335 = vmatprep.subr.mxu0 0.0
      %2336 = vmatpush1.msra.mxu0 0.0
      %2337 = vmatprep.subr.mxu0 0.0
      %2338 = vmatpush1.msra.mxu0 0.0
      %2339 = vmatprep.subr.mxu0 0.0
      %2340 = vmatpush1.msra.mxu0 0.0
      %2341 = vmatprep.subr.mxu0 0.0
      %2342 = vmatpush1.msra.mxu0 0.0
      %2343 = vmatprep.subr.mxu0 0.0
      %2344 = vmatpush1.msra.mxu0 0.0
      %2345 = vmatprep.subr.mxu0 0.0
      %2346 = vmatpush1.msra.mxu0 0.0
      %2347 = vmatprep.subr.mxu0 0.0
      %2348 = vmatpush1.msra.mxu0 0.0
      %2349 = vmatprep.subr.mxu0 0.0
      %2350 = vmatpush1.msra.mxu0 0.0
      %2351 = vmatprep.subr.mxu0 0.0
      %2352 = vmatpush1.msra.mxu0 0.0
      %2353 = vmatprep.subr.mxu0 0.0
      %2354 = vmatpush1.msra.mxu0 0.0
      %2355 = vmatprep.subr.mxu0 0.0
      %2356 = vmatpush1.msra.mxu0 0.0
      %2357 = vmatprep.subr.mxu0 0.0
      %2358 = vmatpush1.msra.mxu0 0.0
      %2359 = vmatprep.subr.mxu0 0.0
      %2360 = vmatpush1.msra.mxu0 0.0
      %2361 = vmatprep.subr.mxu0 0.0
      %2362 = vmatpush1.msra.mxu0 0.0
      %2363 = vmatprep.subr.mxu0 0.0
      %2364 = vmatpush1.msra.mxu0 0.0
      %2365 = vmatprep.mubr.f32.mxu0 0.0
      %2366 = vmatmul.mubr.f32.gmra.mrb[0].mxu0 %v2299
      %v2367 = vpop.f32.mrb[0].mxu0
      %v2368 = vadd.f32 0.0, %v2367
      %v2369 = vpop.f32.mrb[0].mxu0
      %2370 = vdwg.mxu0
      %v2372 = vsel %vm114, %v2297, 0
      %2374 = vmatprep.subr.mxu0 0.0
      %2375 = vmatpush1.msra.mxu0 %v2220
      %2376 = vmatprep.subr.mxu0 0.0
      %2377 = vmatpush1.msra.mxu0 0.0
      %2378 = vmatprep.subr.mxu0 0.0
      %2379 = vmatpush1.msra.mxu0 0.0
      %2380 = vmatprep.subr.mxu0 0.0
      %2381 = vmatpush1.msra.mxu0 0.0
      %2382 = vmatprep.subr.mxu0 0.0
      %2383 = vmatpush1.msra.mxu0 0.0
      %2384 = vmatprep.subr.mxu0 0.0
      %2385 = vmatpush1.msra.mxu0 0.0
      %2386 = vmatprep.subr.mxu0 0.0
      %2387 = vmatpush1.msra.mxu0 0.0
      %2388 = vmatprep.subr.mxu0 0.0
      %2389 = vmatpush1.msra.mxu0 0.0
      %2390 = vmatprep.subr.mxu0 0.0
      %2391 = vmatpush1.msra.mxu0 0.0
      %2392 = vmatprep.subr.mxu0 0.0
      %2393 = vmatpush1.msra.mxu0 0.0
      %2394 = vmatprep.subr.mxu0 0.0
      %2395 = vmatpush1.msra.mxu0 0.0
      %2396 = vmatprep.subr.mxu0 0.0
      %2397 = vmatpush1.msra.mxu0 0.0
      %2398 = vmatprep.subr.mxu0 0.0
      %2399 = vmatpush1.msra.mxu0 0.0
      %2400 = vmatprep.subr.mxu0 0.0
      %2401 = vmatpush1.msra.mxu0 0.0
      %2402 = vmatprep.subr.mxu0 0.0
      %2403 = vmatpush1.msra.mxu0 0.0
      %2404 = vmatprep.subr.mxu0 0.0
      %2405 = vmatpush1.msra.mxu0 0.0
      %2406 = vmatprep.subr.mxu0 0.0
      %2407 = vmatpush1.msra.mxu0 0.0
      %2408 = vmatprep.subr.mxu0 0.0
      %2409 = vmatpush1.msra.mxu0 0.0
      %2410 = vmatprep.subr.mxu0 0.0
      %2411 = vmatpush1.msra.mxu0 0.0
      %2412 = vmatprep.subr.mxu0 0.0
      %2413 = vmatpush1.msra.mxu0 0.0
      %2414 = vmatprep.subr.mxu0 0.0
      %2415 = vmatpush1.msra.mxu0 0.0
      %2416 = vmatprep.subr.mxu0 0.0
      %2417 = vmatpush1.msra.mxu0 0.0
      %2418 = vmatprep.subr.mxu0 0.0
      %2419 = vmatpush1.msra.mxu0 0.0
      %2420 = vmatprep.subr.mxu0 0.0
      %2421 = vmatpush1.msra.mxu0 0.0
      %2422 = vmatprep.subr.mxu0 0.0
      %2423 = vmatpush1.msra.mxu0 0.0
      %2424 = vmatprep.subr.mxu0 0.0
      %2425 = vmatpush1.msra.mxu0 0.0
      %2426 = vmatprep.subr.mxu0 0.0
      %2427 = vmatpush1.msra.mxu0 0.0
      %2428 = vmatprep.subr.mxu0 0.0
      %2429 = vmatpush1.msra.mxu0 0.0
      %2430 = vmatprep.subr.mxu0 0.0
      %2431 = vmatpush1.msra.mxu0 0.0
      %2432 = vmatprep.subr.mxu0 0.0
      %2433 = vmatpush1.msra.mxu0 0.0
      %2434 = vmatprep.subr.mxu0 0.0
      %2435 = vmatpush1.msra.mxu0 0.0
      %2436 = vmatprep.subr.mxu0 0.0
      %2437 = vmatpush1.msra.mxu0 0.0
      %2438 = vmatprep.mubr.f32.mxu0 0.0
      %2439 = vmatmul.mubr.f32.gmra.mrb[0].mxu0 %v2372
      %v2440 = vpop.f32.mrb[0].mxu0
      %v2441 = vadd.f32 0.0, %v2440
      %v2442 = vpop.f32.mrb[0].mxu0
      %2443 = vdwg.mxu0
      %v2445 = vsel %vm114, %v2441, 0
      %2447 = vmatprep.subr.mxu0 0.0
      %2448 = vmatpush1.msra.mxu0 %v2368
      %2449 = vmatprep.subr.mxu0 0.0
      %2450 = vmatpush1.msra.mxu0 0.0
      %2451 = vmatprep.subr.mxu0 0.0
      %2452 = vmatpush1.msra.mxu0 0.0
      %2453 = vmatprep.subr.mxu0 0.0
      %2454 = vmatpush1.msra.mxu0 0.0
      %2455 = vmatprep.subr.mxu0 0.0
      %2456 = vmatpush1.msra.mxu0 0.0
      %2457 = vmatprep.subr.mxu0 0.0
      %2458 = vmatpush1.msra.mxu0 0.0
      %2459 = vmatprep.subr.mxu0 0.0
      %2460 = vmatpush1.msra.mxu0 0.0
      %2461 = vmatprep.subr.mxu0 0.0
      %2462 = vmatpush1.msra.mxu0 0.0
      %2463 = vmatprep.subr.mxu0 0.0
      %2464 = vmatpush1.msra.mxu0 0.0
      %2465 = vmatprep.subr.mxu0 0.0
      %2466 = vmatpush1.msra.mxu0 0.0
      %2467 = vmatprep.subr.mxu0 0.0
      %2468 = vmatpush1.msra.mxu0 0.0
      %2469 = vmatprep.subr.mxu0 0.0
      %2470 = vmatpush1.msra.mxu0 0.0
      %2471 = vmatprep.subr.mxu0 0.0
      %2472 = vmatpush1.msra.mxu0 0.0
      %2473 = vmatprep.subr.mxu0 0.0
      %2474 = vmatpush1.msra.mxu0 0.0
      %2475 = vmatprep.subr.mxu0 0.0
      %2476 = vmatpush1.msra.mxu0 0.0
      %2477 = vmatprep.subr.mxu0 0.0
      %2478 = vmatpush1.msra.mxu0 0.0
      %2479 = vmatprep.subr.mxu0 0.0
      %2480 = vmatpush1.msra.mxu0 0.0
      %2481 = vmatprep.subr.mxu0 0.0
      %2482 = vmatpush1.msra.mxu0 0.0
      %2483 = vmatprep.subr.mxu0 0.0
      %2484 = vmatpush1.msra.mxu0 0.0
      %2485 = vmatprep.subr.mxu0 0.0
      %2486 = vmatpush1.msra.mxu0 0.0
      %2487 = vmatprep.subr.mxu0 0.0
      %2488 = vmatpush1.msra.mxu0 0.0
      %2489 = vmatprep.subr.mxu0 0.0
      %2490 = vmatpush1.msra.mxu0 0.0
      %2491 = vmatprep.subr.mxu0 0.0
      %2492 = vmatpush1.msra.mxu0 0.0
      %2493 = vmatprep.subr.mxu0 0.0
      %2494 = vmatpush1.msra.mxu0 0.0
      %2495 = vmatprep.subr.mxu0 0.0
      %2496 = vmatpush1.msra.mxu0 0.0
      %2497 = vmatprep.subr.mxu0 0.0
      %2498 = vmatpush1.msra.mxu0 0.0
      %2499 = vmatprep.subr.mxu0 0.0
      %2500 = vmatpush1.msra.mxu0 0.0
      %2501 = vmatprep.subr.mxu0 0.0
      %2502 = vmatpush1.msra.mxu0 0.0
      %2503 = vmatprep.subr.mxu0 0.0
      %2504 = vmatpush1.msra.mxu0 0.0
      %2505 = vmatprep.subr.mxu0 0.0
      %2506 = vmatpush1.msra.mxu0 0.0
      %2507 = vmatprep.subr.mxu0 0.0
      %2508 = vmatpush1.msra.mxu0 0.0
      %2509 = vmatprep.subr.mxu0 0.0
      %2510 = vmatpush1.msra.mxu0 0.0
      %2511 = vmatprep.mubr.f32.mxu0 0.0
      %2512 = vmatmul.mubr.f32.gmra.mrb[0].mxu0 %v2445
      %v2513 = vpop.f32.mrb[0].mxu0
      %v2514 = vadd.f32 0.0, %v2513
      %v2515 = vpop.f32.mrb[0].mxu0
      %2516 = vdwg.mxu0
      %v2517 = vmul.f32 %v2514, 0.5
      %v2518 = vsub.f32 %v230, %v2517
      %v2520 = vsel %vm114, %v2368, 0
      %2522 = vmatprep.subr.mxu0 0.0
      %2523 = vmatpush1.msra.mxu0 %v2518
      %2524 = vmatprep.subr.mxu0 0.0
      %2525 = vmatpush1.msra.mxu0 0.0
      %2526 = vmatprep.subr.mxu0 0.0
      %2527 = vmatpush1.msra.mxu0 0.0
      %2528 = vmatprep.subr.mxu0 0.0
      %2529 = vmatpush1.msra.mxu0 0.0
      %2530 = vmatprep.subr.mxu0 0.0
      %2531 = vmatpush1.msra.mxu0 0.0
      %2532 = vmatprep.subr.mxu0 0.0
      %2533 = vmatpush1.msra.mxu0 0.0
      %2534 = vmatprep.subr.mxu0 0.0
      %2535 = vmatpush1.msra.mxu0 0.0
      %2536 = vmatprep.subr.mxu0 0.0
      %2537 = vmatpush1.msra.mxu0 0.0
      %2538 = vmatprep.subr.mxu0 0.0
      %2539 = vmatpush1.msra.mxu0 0.0
      %2540 = vmatprep.subr.mxu0 0.0
      %2541 = vmatpush1.msra.mxu0 0.0
      %2542 = vmatprep.subr.mxu0 0.0
      %2543 = vmatpush1.msra.mxu0 0.0
      %2544 = vmatprep.subr.mxu0 0.0
      %2545 = vmatpush1.msra.mxu0 0.0
      %2546 = vmatprep.subr.mxu0 0.0
      %2547 = vmatpush1.msra.mxu0 0.0
      %2548 = vmatprep.subr.mxu0 0.0
      %2549 = vmatpush1.msra.mxu0 0.0
      %2550 = vmatprep.subr.mxu0 0.0
      %2551 = vmatpush1.msra.mxu0 0.0
      %2552 = vmatprep.subr.mxu0 0.0
      %2553 = vmatpush1.msra.mxu0 0.0
      %2554 = vmatprep.subr.mxu0 0.0
      %2555 = vmatpush1.msra.mxu0 0.0
      %2556 = vmatprep.subr.mxu0 0.0
      %2557 = vmatpush1.msra.mxu0 0.0
      %2558 = vmatprep.subr.mxu0 0.0
      %2559 = vmatpush1.msra.mxu0 0.0
      %2560 = vmatprep.subr.mxu0 0.0
      %2561 = vmatpush1.msra.mxu0 0.0
      %2562 = vmatprep.subr.mxu0 0.0
      %2563 = vmatpush1.msra.mxu0 0.0
      %2564 = vmatprep.subr.mxu0 0.0
      %2565 = vmatpush1.msra.mxu0 0.0
      %2566 = vmatprep.subr.mxu0 0.0
      %2567 = vmatpush1.msra.mxu0 0.0
      %2568 = vmatprep.subr.mxu0 0.0
      %2569 = vmatpush1.msra.mxu0 0.0
      %2570 = vmatprep.subr.mxu0 0.0
      %2571 = vmatpush1.msra.mxu0 0.0
      %2572 = vmatprep.subr.mxu0 0.0
      %2573 = vmatpush1.msra.mxu0 0.0
      %2574 = vmatprep.subr.mxu0 0.0
      %2575 = vmatpush1.msra.mxu0 0.0
      %2576 = vmatprep.subr.mxu0 0.0
      %2577 = vmatpush1.msra.mxu0 0.0
      %2578 = vmatprep.subr.mxu0 0.0
      %2579 = vmatpush1.msra.mxu0 0.0
      %2580 = vmatprep.subr.mxu0 0.0
      %2581 = vmatpush1.msra.mxu0 0.0
      %2582 = vmatprep.subr.mxu0 0.0
      %2583 = vmatpush1.msra.mxu0 0.0
      %2584 = vmatprep.subr.mxu0 0.0
      %2585 = vmatpush1.msra.mxu0 0.0
      %2586 = vmatprep.mubr.f32.mxu0 0.0
      %2587 = vmatmul.mubr.f32.gmra.mrb[0].mxu0 %v2520
      %v2588 = vpop.f32.mrb[0].mxu0
      %v2589 = vadd.f32 0.0, %v2588
      %v2590 = vpop.f32.mrb[0].mxu0
      %2591 = vdwg.mxu0
      %v2593 = vsel %vm114, %v2518, 0
      %2595 = vmatprep.subr.mxu0 0.0
      %2596 = vmatpush1.msra.mxu0 %v2441
      %2597 = vmatprep.subr.mxu0 0.0
      %2598 = vmatpush1.msra.mxu0 0.0
      %2599 = vmatprep.subr.mxu0 0.0
      %2600 = vmatpush1.msra.mxu0 0.0
      %2601 = vmatprep.subr.mxu0 0.0
      %2602 = vmatpush1.msra.mxu0 0.0
      %2603 = vmatprep.subr.mxu0 0.0
      %2604 = vmatpush1.msra.mxu0 0.0
      %2605 = vmatprep.subr.mxu0 0.0
      %2606 = vmatpush1.msra.mxu0 0.0
      %2607 = vmatprep.subr.mxu0 0.0
      %2608 = vmatpush1.msra.mxu0 0.0
      %2609 = vmatprep.subr.mxu0 0.0
      %2610 = vmatpush1.msra.mxu0 0.0
      %2611 = vmatprep.subr.mxu0 0.0
      %2612 = vmatpush1.msra.mxu0 0.0
      %2613 = vmatprep.subr.mxu0 0.0
      %2614 = vmatpush1.msra.mxu0 0.0
      %2615 = vmatprep.subr.mxu0 0.0
      %2616 = vmatpush1.msra.mxu0 0.0
      %2617 = vmatprep.subr.mxu0 0.0
      %2618 = vmatpush1.msra.mxu0 0.0
      %2619 = vmatprep.subr.mxu0 0.0
      %2620 = vmatpush1.msra.mxu0 0.0
      %2621 = vmatprep.subr.mxu0 0.0
      %2622 = vmatpush1.msra.mxu0 0.0
      %2623 = vmatprep.subr.mxu0 0.0
      %2624 = vmatpush1.msra.mxu0 0.0
      %2625 = vmatprep.subr.mxu0 0.0
      %2626 = vmatpush1.msra.mxu0 0.0
      %2627 = vmatprep.subr.mxu0 0.0
      %2628 = vmatpush1.msra.mxu0 0.0
      %2629 = vmatprep.subr.mxu0 0.0
      %2630 = vmatpush1.msra.mxu0 0.0
      %2631 = vmatprep.subr.mxu0 0.0
      %2632 = vmatpush1.msra.mxu0 0.0
      %2633 = vmatprep.subr.mxu0 0.0
      %2634 = vmatpush1.msra.mxu0 0.0
      %2635 = vmatprep.subr.mxu0 0.0
      %2636 = vmatpush1.msra.mxu0 0.0
      %2637 = vmatprep.subr.mxu0 0.0
      %2638 = vmatpush1.msra.mxu0 0.0
      %2639 = vmatprep.subr.mxu0 0.0
      %2640 = vmatpush1.msra.mxu0 0.0
      %2641 = vmatprep.subr.mxu0 0.0
      %2642 = vmatpush1.msra.mxu0 0.0
      %2643 = vmatprep.subr.mxu0 0.0
      %2644 = vmatpush1.msra.mxu0 0.0
      %2645 = vmatprep.subr.mxu0 0.0
      %2646 = vmatpush1.msra.mxu0 0.0
      %2647 = vmatprep.subr.mxu0 0.0
      %2648 = vmatpush1.msra.mxu0 0.0
      %2649 = vmatprep.subr.mxu0 0.0
      %2650 = vmatpush1.msra.mxu0 0.0
      %2651 = vmatprep.subr.mxu0 0.0
      %2652 = vmatpush1.msra.mxu0 0.0
      %2653 = vmatprep.subr.mxu0 0.0
      %2654 = vmatpush1.msra.mxu0 0.0
      %2655 = vmatprep.subr.mxu0 0.0
      %2656 = vmatpush1.msra.mxu0 0.0
      %2657 = vmatprep.subr.mxu0 0.0
      %2658 = vmatpush1.msra.mxu0 0.0
      %2659 = vmatprep.mubr.f32.mxu0 0.0
      %2660 = vmatmul.mubr.f32.gmra.mrb[0].mxu0 %v2593
      %v2661 = vpop.f32.mrb[0].mxu0
      %v2662 = vadd.f32 0.0, %v2661
      %v2663 = vpop.f32.mrb[0].mxu0
      %2664 = vdwg.mxu0
      %v2666 = vsel %vm114, %v2662, 0
      %2668 = vmatprep.subr.mxu0 0.0
      %2669 = vmatpush1.msra.mxu0 %v2589
      %2670 = vmatprep.subr.mxu0 0.0
      %2671 = vmatpush1.msra.mxu0 0.0
      %2672 = vmatprep.subr.mxu0 0.0
      %2673 = vmatpush1.msra.mxu0 0.0
      %2674 = vmatprep.subr.mxu0 0.0
      %2675 = vmatpush1.msra.mxu0 0.0
      %2676 = vmatprep.subr.mxu0 0.0
      %2677 = vmatpush1.msra.mxu0 0.0
      %2678 = vmatprep.subr.mxu0 0.0
      %2679 = vmatpush1.msra.mxu0 0.0
      %2680 = vmatprep.subr.mxu0 0.0
      %2681 = vmatpush1.msra.mxu0 0.0
      %2682 = vmatprep.subr.mxu0 0.0
      %2683 = vmatpush1.msra.mxu0 0.0
      %2684 = vmatprep.subr.mxu0 0.0
      %2685 = vmatpush1.msra.mxu0 0.0
      %2686 = vmatprep.subr.mxu0 0.0
      %2687 = vmatpush1.msra.mxu0 0.0
      %2688 = vmatprep.subr.mxu0 0.0
      %2689 = vmatpush1.msra.mxu0 0.0
      %2690 = vmatprep.subr.mxu0 0.0
      %2691 = vmatpush1.msra.mxu0 0.0
      %2692 = vmatprep.subr.mxu0 0.0
      %2693 = vmatpush1.msra.mxu0 0.0
      %2694 = vmatprep.subr.mxu0 0.0
      %2695 = vmatpush1.msra.mxu0 0.0
      %2696 = vmatprep.subr.mxu0 0.0
      %2697 = vmatpush1.msra.mxu0 0.0
      %2698 = vmatprep.subr.mxu0 0.0
      %2699 = vmatpush1.msra.mxu0 0.0
      %2700 = vmatprep.subr.mxu0 0.0
      %2701 = vmatpush1.msra.mxu0 0.0
      %2702 = vmatprep.subr.mxu0 0.0
      %2703 = vmatpush1.msra.mxu0 0.0
      %2704 = vmatprep.subr.mxu0 0.0
      %2705 = vmatpush1.msra.mxu0 0.0
      %2706 = vmatprep.subr.mxu0 0.0
      %2707 = vmatpush1.msra.mxu0 0.0
      %2708 = vmatprep.subr.mxu0 0.0
      %2709 = vmatpush1.msra.mxu0 0.0
      %2710 = vmatprep.subr.mxu0 0.0
      %2711 = vmatpush1.msra.mxu0 0.0
      %2712 = vmatprep.subr.mxu0 0.0
      %2713 = vmatpush1.msra.mxu0 0.0
      %2714 = vmatprep.subr.mxu0 0.0
      %2715 = vmatpush1.msra.mxu0 0.0
      %2716 = vmatprep.subr.mxu0 0.0
      %2717 = vmatpush1.msra.mxu0 0.0
      %2718 = vmatprep.subr.mxu0 0.0
      %2719 = vmatpush1.msra.mxu0 0.0
      %2720 = vmatprep.subr.mxu0 0.0
      %2721 = vmatpush1.msra.mxu0 0.0
      %2722 = vmatprep.subr.mxu0 0.0
      %2723 = vmatpush1.msra.mxu0 0.0
      %2724 = vmatprep.subr.mxu0 0.0
      %2725 = vmatpush1.msra.mxu0 0.0
      %2726 = vmatprep.subr.mxu0 0.0
      %2727 = vmatpush1.msra.mxu0 0.0
      %2728 = vmatprep.subr.mxu0 0.0
      %2729 = vmatpush1.msra.mxu0 0.0
      %2730 = vmatprep.subr.mxu0 0.0
      %2731 = vmatpush1.msra.mxu0 0.0
      %2732 = vmatprep.mubr.f32.mxu0 0.0
      %2733 = vmatmul.mubr.f32.gmra.mrb[0].mxu0 %v2666
      %v2734 = vpop.f32.mrb[0].mxu0
      %v2735 = vadd.f32 0.0, %v2734
      %v2736 = vpop.f32.mrb[0].mxu0
      %2737 = vdwg.mxu0
      %v2738 = vmul.f32 %v2735, 0.5
      %v2739 = vsub.f32 %v230, %v2738
      %v2741 = vsel %vm114, %v2589, 0
      %2743 = vmatprep.subr.mxu0 0.0
      %2744 = vmatpush1.msra.mxu0 %v2739
      %2745 = vmatprep.subr.mxu0 0.0
      %2746 = vmatpush1.msra.mxu0 0.0
      %2747 = vmatprep.subr.mxu0 0.0
      %2748 = vmatpush1.msra.mxu0 0.0
      %2749 = vmatprep.subr.mxu0 0.0
      %2750 = vmatpush1.msra.mxu0 0.0
      %2751 = vmatprep.subr.mxu0 0.0
      %2752 = vmatpush1.msra.mxu0 0.0
      %2753 = vmatprep.subr.mxu0 0.0
      %2754 = vmatpush1.msra.mxu0 0.0
      %2755 = vmatprep.subr.mxu0 0.0
      %2756 = vmatpush1.msra.mxu0 0.0
      %2757 = vmatprep.subr.mxu0 0.0
      %2758 = vmatpush1.msra.mxu0 0.0
      %2759 = vmatprep.subr.mxu0 0.0
      %2760 = vmatpush1.msra.mxu0 0.0
      %2761 = vmatprep.subr.mxu0 0.0
      %2762 = vmatpush1.msra.mxu0 0.0
      %2763 = vmatprep.subr.mxu0 0.0
      %2764 = vmatpush1.msra.mxu0 0.0
      %2765 = vmatprep.subr.mxu0 0.0
      %2766 = vmatpush1.msra.mxu0 0.0
      %2767 = vmatprep.subr.mxu0 0.0
      %2768 = vmatpush1.msra.mxu0 0.0
      %2769 = vmatprep.subr.mxu0 0.0
      %2770 = vmatpush1.msra.mxu0 0.0
      %2771 = vmatprep.subr.mxu0 0.0
      %2772 = vmatpush1.msra.mxu0 0.0
      %2773 = vmatprep.subr.mxu0 0.0
      %2774 = vmatpush1.msra.mxu0 0.0
      %2775 = vmatprep.subr.mxu0 0.0
      %2776 = vmatpush1.msra.mxu0 0.0
      %2777 = vmatprep.subr.mxu0 0.0
      %2778 = vmatpush1.msra.mxu0 0.0
      %2779 = vmatprep.subr.mxu0 0.0
      %2780 = vmatpush1.msra.mxu0 0.0
      %2781 = vmatprep.subr.mxu0 0.0
      %2782 = vmatpush1.msra.mxu0 0.0
      %2783 = vmatprep.subr.mxu0 0.0
      %2784 = vmatpush1.msra.mxu0 0.0
      %2785 = vmatprep.subr.mxu0 0.0
      %2786 = vmatpush1.msra.mxu0 0.0
      %2787 = vmatprep.subr.mxu0 0.0
      %2788 = vmatpush1.msra.mxu0 0.0
      %2789 = vmatprep.subr.mxu0 0.0
      %2790 = vmatpush1.msra.mxu0 0.0
      %2791 = vmatprep.subr.mxu0 0.0
      %2792 = vmatpush1.msra.mxu0 0.0
      %2793 = vmatprep.subr.mxu0 0.0
      %2794 = vmatpush1.msra.mxu0 0.0
      %2795 = vmatprep.subr.mxu0 0.0
      %2796 = vmatpush1.msra.mxu0 0.0
      %2797 = vmatprep.subr.mxu0 0.0
      %2798 = vmatpush1.msra.mxu0 0.0
      %2799 = vmatprep.subr.mxu0 0.0
      %2800 = vmatpush1.msra.mxu0 0.0
      %2801 = vmatprep.subr.mxu0 0.0
      %2802 = vmatpush1.msra.mxu0 0.0
      %2803 = vmatprep.subr.mxu0 0.0
      %2804 = vmatpush1.msra.mxu0 0.0
      %2805 = vmatprep.subr.mxu0 0.0
      %2806 = vmatpush1.msra.mxu0 0.0
      %2807 = vmatprep.mubr.f32.mxu0 0.0
      %2808 = vmatmul.mubr.f32.gmra.mrb[0].mxu0 %v2741
      %v2809 = vpop.f32.mrb[0].mxu0
      %v2810 = vadd.f32 0.0, %v2809
      %v2811 = vpop.f32.mrb[0].mxu0
      %2812 = vdwg.mxu0
      %v2814 = vsel %vm114, %v2739, 0
      %2816 = vmatprep.subr.mxu0 0.0
      %2817 = vmatpush1.msra.mxu0 %v2662
      %2818 = vmatprep.subr.mxu0 0.0
      %2819 = vmatpush1.msra.mxu0 0.0
      %2820 = vmatprep.subr.mxu0 0.0
      %2821 = vmatpush1.msra.mxu0 0.0
      %2822 = vmatprep.subr.mxu0 0.0
      %2823 = vmatpush1.msra.mxu0 0.0
      %2824 = vmatprep.subr.mxu0 0.0
      %2825 = vmatpush1.msra.mxu0 0.0
      %2826 = vmatprep.subr.mxu0 0.0
      %2827 = vmatpush1.msra.mxu0 0.0
      %2828 = vmatprep.subr.mxu0 0.0
      %2829 = vmatpush1.msra.mxu0 0.0
      %2830 = vmatprep.subr.mxu0 0.0
      %2831 = vmatpush1.msra.mxu0 0.0
      %2832 = vmatprep.subr.mxu0 0.0
      %2833 = vmatpush1.msra.mxu0 0.0
      %2834 = vmatprep.subr.mxu0 0.0
      %2835 = vmatpush1.msra.mxu0 0.0
      %2836 = vmatprep.subr.mxu0 0.0
      %2837 = vmatpush1.msra.mxu0 0.0
      %2838 = vmatprep.subr.mxu0 0.0
      %2839 = vmatpush1.msra.mxu0 0.0
      %2840 = vmatprep.subr.mxu0 0.0
      %2841 = vmatpush1.msra.mxu0 0.0
      %2842 = vmatprep.subr.mxu0 0.0
      %2843 = vmatpush1.msra.mxu0 0.0
      %2844 = vmatprep.subr.mxu0 0.0
      %2845 = vmatpush1.msra.mxu0 0.0
      %2846 = vmatprep.subr.mxu0 0.0
      %2847 = vmatpush1.msra.mxu0 0.0
      %2848 = vmatprep.subr.mxu0 0.0
      %2849 = vmatpush1.msra.mxu0 0.0
      %2850 = vmatprep.subr.mxu0 0.0
      %2851 = vmatpush1.msra.mxu0 0.0
      %2852 = vmatprep.subr.mxu0 0.0
      %2853 = vmatpush1.msra.mxu0 0.0
      %2854 = vmatprep.subr.mxu0 0.0
      %2855 = vmatpush1.msra.mxu0 0.0
      %2856 = vmatprep.subr.mxu0 0.0
      %2857 = vmatpush1.msra.mxu0 0.0
      %2858 = vmatprep.subr.mxu0 0.0
      %2859 = vmatpush1.msra.mxu0 0.0
      %2860 = vmatprep.subr.mxu0 0.0
      %2861 = vmatpush1.msra.mxu0 0.0
      %2862 = vmatprep.subr.mxu0 0.0
      %2863 = vmatpush1.msra.mxu0 0.0
      %2864 = vmatprep.subr.mxu0 0.0
      %2865 = vmatpush1.msra.mxu0 0.0
      %2866 = vmatprep.subr.mxu0 0.0
      %2867 = vmatpush1.msra.mxu0 0.0
      %2868 = vmatprep.subr.mxu0 0.0
      %2869 = vmatpush1.msra.mxu0 0.0
      %2870 = vmatprep.subr.mxu0 0.0
      %2871 = vmatpush1.msra.mxu0 0.0
      %2872 = vmatprep.subr.mxu0 0.0
      %2873 = vmatpush1.msra.mxu0 0.0
      %2874 = vmatprep.subr.mxu0 0.0
      %2875 = vmatpush1.msra.mxu0 0.0
      %2876 = vmatprep.subr.mxu0 0.0
      %2877 = vmatpush1.msra.mxu0 0.0
      %2878 = vmatprep.subr.mxu0 0.0
      %2879 = vmatpush1.msra.mxu0 0.0
      %2880 = vmatprep.mubr.f32.mxu0 0.0
      %2881 = vmatmul.mubr.f32.gmra.mrb[0].mxu0 %v2814
      %v2882 = vpop.f32.mrb[0].mxu0
      %v2883 = vadd.f32 0.0, %v2882
      %v2884 = vpop.f32.mrb[0].mxu0
      %2885 = vdwg.mxu0
      %v2887 = vsel %vm114, %v2883, 0
      %2889 = vmatprep.subr.mxu0 0.0
      %2890 = vmatpush1.msra.mxu0 %v2810
      %2891 = vmatprep.subr.mxu0 0.0
      %2892 = vmatpush1.msra.mxu0 0.0
      %2893 = vmatprep.subr.mxu0 0.0
      %2894 = vmatpush1.msra.mxu0 0.0
      %2895 = vmatprep.subr.mxu0 0.0
      %2896 = vmatpush1.msra.mxu0 0.0
      %2897 = vmatprep.subr.mxu0 0.0
      %2898 = vmatpush1.msra.mxu0 0.0
      %2899 = vmatprep.subr.mxu0 0.0
      %2900 = vmatpush1.msra.mxu0 0.0
      %2901 = vmatprep.subr.mxu0 0.0
      %2902 = vmatpush1.msra.mxu0 0.0
      %2903 = vmatprep.subr.mxu0 0.0
      %2904 = vmatpush1.msra.mxu0 0.0
      %2905 = vmatprep.subr.mxu0 0.0
      %2906 = vmatpush1.msra.mxu0 0.0
      %2907 = vmatprep.subr.mxu0 0.0
      %2908 = vmatpush1.msra.mxu0 0.0
      %2909 = vmatprep.subr.mxu0 0.0
      %2910 = vmatpush1.msra.mxu0 0.0
      %2911 = vmatprep.subr.mxu0 0.0
      %2912 = vmatpush1.msra.mxu0 0.0
      %2913 = vmatprep.subr.mxu0 0.0
      %2914 = vmatpush1.msra.mxu0 0.0
      %2915 = vmatprep.subr.mxu0 0.0
      %2916 = vmatpush1.msra.mxu0 0.0
      %2917 = vmatprep.subr.mxu0 0.0
      %2918 = vmatpush1.msra.mxu0 0.0
      %2919 = vmatprep.subr.mxu0 0.0
      %2920 = vmatpush1.msra.mxu0 0.0
      %2921 = vmatprep.subr.mxu0 0.0
      %2922 = vmatpush1.msra.mxu0 0.0
      %2923 = vmatprep.subr.mxu0 0.0
      %2924 = vmatpush1.msra.mxu0 0.0
      %2925 = vmatprep.subr.mxu0 0.0
      %2926 = vmatpush1.msra.mxu0 0.0
      %2927 = vmatprep.subr.mxu0 0.0
      %2928 = vmatpush1.msra.mxu0 0.0
      %2929 = vmatprep.subr.mxu0 0.0
      %2930 = vmatpush1.msra.mxu0 0.0
      %2931 = vmatprep.subr.mxu0 0.0
      %2932 = vmatpush1.msra.mxu0 0.0
      %2933 = vmatprep.subr.mxu0 0.0
      %2934 = vmatpush1.msra.mxu0 0.0
      %2935 = vmatprep.subr.mxu0 0.0
      %2936 = vmatpush1.msra.mxu0 0.0
      %2937 = vmatprep.subr.mxu0 0.0
      %2938 = vmatpush1.msra.mxu0 0.0
      %2939 = vmatprep.subr.mxu0 0.0
      %2940 = vmatpush1.msra.mxu0 0.0
      %2941 = vmatprep.subr.mxu0 0.0
      %2942 = vmatpush1.msra.mxu0 0.0
      %2943 = vmatprep.subr.mxu0 0.0
      %2944 = vmatpush1.msra.mxu0 0.0
      %2945 = vmatprep.subr.mxu0 0.0
      %2946 = vmatpush1.msra.mxu0 0.0
      %2947 = vmatprep.subr.mxu0 0.0
      %2948 = vmatpush1.msra.mxu0 0.0
      %2949 = vmatprep.subr.mxu0 0.0
      %2950 = vmatpush1.msra.mxu0 0.0
      %2951 = vmatprep.subr.mxu0 0.0
      %2952 = vmatpush1.msra.mxu0 0.0
      %2953 = vmatprep.mubr.f32.mxu0 0.0
      %2954 = vmatmul.mubr.f32.gmra.mrb[0].mxu0 %v2887
      %v2955 = vpop.f32.mrb[0].mxu0
      %v2956 = vadd.f32 0.0, %v2955
      %v2957 = vpop.f32.mrb[0].mxu0
      %2958 = vdwg.mxu0
      %v2959 = vmul.f32 %v2956, 0.5
      %v2960 = vsub.f32 %v230, %v2959
      %v2962 = vsel %vm114, %v2810, 0
      %2964 = vmatprep.subr.mxu0 0.0
      %2965 = vmatpush1.msra.mxu0 %v2960
      %2966 = vmatprep.subr.mxu0 0.0
      %2967 = vmatpush1.msra.mxu0 0.0
      %2968 = vmatprep.subr.mxu0 0.0
      %2969 = vmatpush1.msra.mxu0 0.0
      %2970 = vmatprep.subr.mxu0 0.0
      %2971 = vmatpush1.msra.mxu0 0.0
      %2972 = vmatprep.subr.mxu0 0.0
      %2973 = vmatpush1.msra.mxu0 0.0
      %2974 = vmatprep.subr.mxu0 0.0
      %2975 = vmatpush1.msra.mxu0 0.0
      %2976 = vmatprep.subr.mxu0 0.0
      %2977 = vmatpush1.msra.mxu0 0.0
      %2978 = vmatprep.subr.mxu0 0.0
      %2979 = vmatpush1.msra.mxu0 0.0
      %2980 = vmatprep.subr.mxu0 0.0
      %2981 = vmatpush1.msra.mxu0 0.0
      %2982 = vmatprep.subr.mxu0 0.0
      %2983 = vmatpush1.msra.mxu0 0.0
      %2984 = vmatprep.subr.mxu0 0.0
      %2985 = vmatpush1.msra.mxu0 0.0
      %2986 = vmatprep.subr.mxu0 0.0
      %2987 = vmatpush1.msra.mxu0 0.0
      %2988 = vmatprep.subr.mxu0 0.0
      %2989 = vmatpush1.msra.mxu0 0.0
      %2990 = vmatprep.subr.mxu0 0.0
      %2991 = vmatpush1.msra.mxu0 0.0
      %2992 = vmatprep.subr.mxu0 0.0
      %2993 = vmatpush1.msra.mxu0 0.0
      %2994 = vmatprep.subr.mxu0 0.0
      %2995 = vmatpush1.msra.mxu0 0.0
      %2996 = vmatprep.subr.mxu0 0.0
      %2997 = vmatpush1.msra.mxu0 0.0
      %2998 = vmatprep.subr.mxu0 0.0
      %2999 = vmatpush1.msra.mxu0 0.0
      %3000 = vmatprep.subr.mxu0 0.0
      %3001 = vmatpush1.msra.mxu0 0.0
      %3002 = vmatprep.subr.mxu0 0.0
      %3003 = vmatpush1.msra.mxu0 0.0
      %3004 = vmatprep.subr.mxu0 0.0
      %3005 = vmatpush1.msra.mxu0 0.0
      %3006 = vmatprep.subr.mxu0 0.0
      %3007 = vmatpush1.msra.mxu0 0.0
      %3008 = vmatprep.subr.mxu0 0.0
      %3009 = vmatpush1.msra.mxu0 0.0
      %3010 = vmatprep.subr.mxu0 0.0
      %3011 = vmatpush1.msra.mxu0 0.0
      %3012 = vmatprep.subr.mxu0 0.0
      %3013 = vmatpush1.msra.mxu0 0.0
      %3014 = vmatprep.subr.mxu0 0.0
      %3015 = vmatpush1.msra.mxu0 0.0
      %3016 = vmatprep.subr.mxu0 0.0
      %3017 = vmatpush1.msra.mxu0 0.0
      %3018 = vmatprep.subr.mxu0 0.0
      %3019 = vmatpush1.msra.mxu0 0.0
      %3020 = vmatprep.subr.mxu0 0.0
      %3021 = vmatpush1.msra.mxu0 0.0
      %3022 = vmatprep.subr.mxu0 0.0
      %3023 = vmatpush1.msra.mxu0 0.0
      %3024 = vmatprep.subr.mxu0 0.0
      %3025 = vmatpush1.msra.mxu0 0.0
      %3026 = vmatprep.subr.mxu0 0.0
      %3027 = vmatpush1.msra.mxu0 0.0
      %3028 = vmatprep.mubr.f32.mxu0 0.0
      %3029 = vmatmul.mubr.f32.gmra.mrb[0].mxu0 %v2962
      %v3030 = vpop.f32.mrb[0].mxu0
      %v3031 = vadd.f32 0.0, %v3030
      %v3032 = vpop.f32.mrb[0].mxu0
      %3033 = vdwg.mxu0
      %v3035 = vsel %vm114, %v2960, 0
      %3037 = vmatprep.subr.mxu0 0.0
      %3038 = vmatpush1.msra.mxu0 %v2883
      %3039 = vmatprep.subr.mxu0 0.0
      %3040 = vmatpush1.msra.mxu0 0.0
      %3041 = vmatprep.subr.mxu0 0.0
      %3042 = vmatpush1.msra.mxu0 0.0
      %3043 = vmatprep.subr.mxu0 0.0
      %3044 = vmatpush1.msra.mxu0 0.0
      %3045 = vmatprep.subr.mxu0 0.0
      %3046 = vmatpush1.msra.mxu0 0.0
      %3047 = vmatprep.subr.mxu0 0.0
      %3048 = vmatpush1.msra.mxu0 0.0
      %3049 = vmatprep.subr.mxu0 0.0
      %3050 = vmatpush1.msra.mxu0 0.0
      %3051 = vmatprep.subr.mxu0 0.0
      %3052 = vmatpush1.msra.mxu0 0.0
      %3053 = vmatprep.subr.mxu0 0.0
      %3054 = vmatpush1.msra.mxu0 0.0
      %3055 = vmatprep.subr.mxu0 0.0
      %3056 = vmatpush1.msra.mxu0 0.0
      %3057 = vmatprep.subr.mxu0 0.0
      %3058 = vmatpush1.msra.mxu0 0.0
      %3059 = vmatprep.subr.mxu0 0.0
      %3060 = vmatpush1.msra.mxu0 0.0
      %3061 = vmatprep.subr.mxu0 0.0
      %3062 = vmatpush1.msra.mxu0 0.0
      %3063 = vmatprep.subr.mxu0 0.0
      %3064 = vmatpush1.msra.mxu0 0.0
      %3065 = vmatprep.subr.mxu0 0.0
      %3066 = vmatpush1.msra.mxu0 0.0
      %3067 = vmatprep.subr.mxu0 0.0
      %3068 = vmatpush1.msra.mxu0 0.0
      %3069 = vmatprep.subr.mxu0 0.0
      %3070 = vmatpush1.msra.mxu0 0.0
      %3071 = vmatprep.subr.mxu0 0.0
      %3072 = vmatpush1.msra.mxu0 0.0
      %3073 = vmatprep.subr.mxu0 0.0
      %3074 = vmatpush1.msra.mxu0 0.0
      %3075 = vmatprep.subr.mxu0 0.0
      %3076 = vmatpush1.msra.mxu0 0.0
      %3077 = vmatprep.subr.mxu0 0.0
      %3078 = vmatpush1.msra.mxu0 0.0
      %3079 = vmatprep.subr.mxu0 0.0
      %3080 = vmatpush1.msra.mxu0 0.0
      %3081 = vmatprep.subr.mxu0 0.0
      %3082 = vmatpush1.msra.mxu0 0.0
      %3083 = vmatprep.subr.mxu0 0.0
      %3084 = vmatpush1.msra.mxu0 0.0
      %3085 = vmatprep.subr.mxu0 0.0
      %3086 = vmatpush1.msra.mxu0 0.0
      %3087 = vmatprep.subr.mxu0 0.0
      %3088 = vmatpush1.msra.mxu0 0.0
      %3089 = vmatprep.subr.mxu0 0.0
      %3090 = vmatpush1.msra.mxu0 0.0
      %3091 = vmatprep.subr.mxu0 0.0
      %3092 = vmatpush1.msra.mxu0 0.0
      %3093 = vmatprep.subr.mxu0 0.0
      %3094 = vmatpush1.msra.mxu0 0.0
      %3095 = vmatprep.subr.mxu0 0.0
      %3096 = vmatpush1.msra.mxu0 0.0
      %3097 = vmatprep.subr.mxu0 0.0
      %3098 = vmatpush1.msra.mxu0 0.0
      %3099 = vmatprep.subr.mxu0 0.0
      %3100 = vmatpush1.msra.mxu0 0.0
      %3101 = vmatprep.mubr.f32.mxu0 0.0
      %3102 = vmatmul.mubr.f32.gmra.mrb[0].mxu0 %v3035
      %v3103 = vpop.f32.mrb[0].mxu0
      %v3104 = vadd.f32 0.0, %v3103
      %v3105 = vpop.f32.mrb[0].mxu0
      %3106 = vdwg.mxu0
      %v3108 = vsel %vm114, %v3104, 0
      %3110 = vmatprep.subr.mxu0 0.0
      %3111 = vmatpush1.msra.mxu0 %v3031
      %3112 = vmatprep.subr.mxu0 0.0
      %3113 = vmatpush1.msra.mxu0 0.0
      %3114 = vmatprep.subr.mxu0 0.0
      %3115 = vmatpush1.msra.mxu0 0.0
      %3116 = vmatprep.subr.mxu0 0.0
      %3117 = vmatpush1.msra.mxu0 0.0
      %3118 = vmatprep.subr.mxu0 0.0
      %3119 = vmatpush1.msra.mxu0 0.0
      %3120 = vmatprep.subr.mxu0 0.0
      %3121 = vmatpush1.msra.mxu0 0.0
      %3122 = vmatprep.subr.mxu0 0.0
      %3123 = vmatpush1.msra.mxu0 0.0
      %3124 = vmatprep.subr.mxu0 0.0
      %3125 = vmatpush1.msra.mxu0 0.0
      %3126 = vmatprep.subr.mxu0 0.0
      %3127 = vmatpush1.msra.mxu0 0.0
      %3128 = vmatprep.subr.mxu0 0.0
      %3129 = vmatpush1.msra.mxu0 0.0
      %3130 = vmatprep.subr.mxu0 0.0
      %3131 = vmatpush1.msra.mxu0 0.0
      %3132 = vmatprep.subr.mxu0 0.0
      %3133 = vmatpush1.msra.mxu0 0.0
      %3134 = vmatprep.subr.mxu0 0.0
      %3135 = vmatpush1.msra.mxu0 0.0
      %3136 = vmatprep.subr.mxu0 0.0
      %3137 = vmatpush1.msra.mxu0 0.0
      %3138 = vmatprep.subr.mxu0 0.0
      %3139 = vmatpush1.msra.mxu0 0.0
      %3140 = vmatprep.subr.mxu0 0.0
      %3141 = vmatpush1.msra.mxu0 0.0
      %3142 = vmatprep.subr.mxu0 0.0
      %3143 = vmatpush1.msra.mxu0 0.0
      %3144 = vmatprep.subr.mxu0 0.0
      %3145 = vmatpush1.msra.mxu0 0.0
      %3146 = vmatprep.subr.mxu0 0.0
      %3147 = vmatpush1.msra.mxu0 0.0
      %3148 = vmatprep.subr.mxu0 0.0
      %3149 = vmatpush1.msra.mxu0 0.0
      %3150 = vmatprep.subr.mxu0 0.0
      %3151 = vmatpush1.msra.mxu0 0.0
      %3152 = vmatprep.subr.mxu0 0.0
      %3153 = vmatpush1.msra.mxu0 0.0
      %3154 = vmatprep.subr.mxu0 0.0
      %3155 = vmatpush1.msra.mxu0 0.0
      %3156 = vmatprep.subr.mxu0 0.0
      %3157 = vmatpush1.msra.mxu0 0.0
      %3158 = vmatprep.subr.mxu0 0.0
      %3159 = vmatpush1.msra.mxu0 0.0
      %3160 = vmatprep.subr.mxu0 0.0
      %3161 = vmatpush1.msra.mxu0 0.0
      %3162 = vmatprep.subr.mxu0 0.0
      %3163 = vmatpush1.msra.mxu0 0.0
      %3164 = vmatprep.subr.mxu0 0.0
      %3165 = vmatpush1.msra.mxu0 0.0
      %3166 = vmatprep.subr.mxu0 0.0
      %3167 = vmatpush1.msra.mxu0 0.0
      %3168 = vmatprep.subr.mxu0 0.0
      %3169 = vmatpush1.msra.mxu0 0.0
      %3170 = vmatprep.subr.mxu0 0.0
      %3171 = vmatpush1.msra.mxu0 0.0
      %3172 = vmatprep.subr.mxu0 0.0
      %3173 = vmatpush1.msra.mxu0 0.0
      %3174 = vmatprep.mubr.f32.mxu0 0.0
      %3175 = vmatmul.mubr.f32.gmra.mrb[0].mxu0 %v3108
      %v3176 = vpop.f32.mrb[0].mxu0
      %v3177 = vadd.f32 0.0, %v3176
      %v3178 = vpop.f32.mrb[0].mxu0
      %3179 = vdwg.mxu0
      %v3180 = vmul.f32 %v3177, 0.5
      %v3181 = vsub.f32 %v230, %v3180
      %v3183 = vsel %vm114, %v3031, 0
      %3185 = vmatprep.subr.mxu0 0.0
      %3186 = vmatpush1.msra.mxu0 %v3181
      %3187 = vmatprep.subr.mxu0 0.0
      %3188 = vmatpush1.msra.mxu0 0.0
      %3189 = vmatprep.subr.mxu0 0.0
      %3190 = vmatpush1.msra.mxu0 0.0
      %3191 = vmatprep.subr.mxu0 0.0
      %3192 = vmatpush1.msra.mxu0 0.0
      %3193 = vmatprep.subr.mxu0 0.0
      %3194 = vmatpush1.msra.mxu0 0.0
      %3195 = vmatprep.subr.mxu0 0.0
      %3196 = vmatpush1.msra.mxu0 0.0
      %3197 = vmatprep.subr.mxu0 0.0
      %3198 = vmatpush1.msra.mxu0 0.0
      %3199 = vmatprep.subr.mxu0 0.0
      %3200 = vmatpush1.msra.mxu0 0.0
      %3201 = vmatprep.subr.mxu0 0.0
      %3202 = vmatpush1.msra.mxu0 0.0
      %3203 = vmatprep.subr.mxu0 0.0
      %3204 = vmatpush1.msra.mxu0 0.0
      %3205 = vmatprep.subr.mxu0 0.0
      %3206 = vmatpush1.msra.mxu0 0.0
      %3207 = vmatprep.subr.mxu0 0.0
      %3208 = vmatpush1.msra.mxu0 0.0
      %3209 = vmatprep.subr.mxu0 0.0
      %3210 = vmatpush1.msra.mxu0 0.0
      %3211 = vmatprep.subr.mxu0 0.0
      %3212 = vmatpush1.msra.mxu0 0.0
      %3213 = vmatprep.subr.mxu0 0.0
      %3214 = vmatpush1.msra.mxu0 0.0
      %3215 = vmatprep.subr.mxu0 0.0
      %3216 = vmatpush1.msra.mxu0 0.0
      %3217 = vmatprep.subr.mxu0 0.0
      %3218 = vmatpush1.msra.mxu0 0.0
      %3219 = vmatprep.subr.mxu0 0.0
      %3220 = vmatpush1.msra.mxu0 0.0
      %3221 = vmatprep.subr.mxu0 0.0
      %3222 = vmatpush1.msra.mxu0 0.0
      %3223 = vmatprep.subr.mxu0 0.0
      %3224 = vmatpush1.msra.mxu0 0.0
      %3225 = vmatprep.subr.mxu0 0.0
      %3226 = vmatpush1.msra.mxu0 0.0
      %3227 = vmatprep.subr.mxu0 0.0
      %3228 = vmatpush1.msra.mxu0 0.0
      %3229 = vmatprep.subr.mxu0 0.0
      %3230 = vmatpush1.msra.mxu0 0.0
      %3231 = vmatprep.subr.mxu0 0.0
      %3232 = vmatpush1.msra.mxu0 0.0
      %3233 = vmatprep.subr.mxu0 0.0
      %3234 = vmatpush1.msra.mxu0 0.0
      %3235 = vmatprep.subr.mxu0 0.0
      %3236 = vmatpush1.msra.mxu0 0.0
      %3237 = vmatprep.subr.mxu0 0.0
      %3238 = vmatpush1.msra.mxu0 0.0
      %3239 = vmatprep.subr.mxu0 0.0
      %3240 = vmatpush1.msra.mxu0 0.0
      %3241 = vmatprep.subr.mxu0 0.0
      %3242 = vmatpush1.msra.mxu0 0.0
      %3243 = vmatprep.subr.mxu0 0.0
      %3244 = vmatpush1.msra.mxu0 0.0
      %3245 = vmatprep.subr.mxu0 0.0
      %3246 = vmatpush1.msra.mxu0 0.0
      %3247 = vmatprep.subr.mxu0 0.0
      %3248 = vmatpush1.msra.mxu0 0.0
      %3249 = vmatprep.mubr.f32.mxu0 0.0
      %3250 = vmatmul.mubr.f32.gmra.mrb[0].mxu0 %v3183
      %v3251 = vpop.f32.mrb[0].mxu0
      %v3252 = vadd.f32 0.0, %v3251
      %v3253 = vpop.f32.mrb[0].mxu0
      %3254 = vdwg.mxu0
      %v3256 = vsel %vm114, %v3181, 0
      %3258 = vmatprep.subr.mxu0 0.0
      %3259 = vmatpush1.msra.mxu0 %v3104
      %3260 = vmatprep.subr.mxu0 0.0
      %3261 = vmatpush1.msra.mxu0 0.0
      %3262 = vmatprep.subr.mxu0 0.0
      %3263 = vmatpush1.msra.mxu0 0.0
      %3264 = vmatprep.subr.mxu0 0.0
      %3265 = vmatpush1.msra.mxu0 0.0
      %3266 = vmatprep.subr.mxu0 0.0
      %3267 = vmatpush1.msra.mxu0 0.0
      %3268 = vmatprep.subr.mxu0 0.0
      %3269 = vmatpush1.msra.mxu0 0.0
      %3270 = vmatprep.subr.mxu0 0.0
      %3271 = vmatpush1.msra.mxu0 0.0
      %3272 = vmatprep.subr.mxu0 0.0
      %3273 = vmatpush1.msra.mxu0 0.0
      %3274 = vmatprep.subr.mxu0 0.0
      %3275 = vmatpush1.msra.mxu0 0.0
      %3276 = vmatprep.subr.mxu0 0.0
      %3277 = vmatpush1.msra.mxu0 0.0
      %3278 = vmatprep.subr.mxu0 0.0
      %3279 = vmatpush1.msra.mxu0 0.0
      %3280 = vmatprep.subr.mxu0 0.0
      %3281 = vmatpush1.msra.mxu0 0.0
      %3282 = vmatprep.subr.mxu0 0.0
      %3283 = vmatpush1.msra.mxu0 0.0
      %3284 = vmatprep.subr.mxu0 0.0
      %3285 = vmatpush1.msra.mxu0 0.0
      %3286 = vmatprep.subr.mxu0 0.0
      %3287 = vmatpush1.msra.mxu0 0.0
      %3288 = vmatprep.subr.mxu0 0.0
      %3289 = vmatpush1.msra.mxu0 0.0
      %3290 = vmatprep.subr.mxu0 0.0
      %3291 = vmatpush1.msra.mxu0 0.0
      %3292 = vmatprep.subr.mxu0 0.0
      %3293 = vmatpush1.msra.mxu0 0.0
      %3294 = vmatprep.subr.mxu0 0.0
      %3295 = vmatpush1.msra.mxu0 0.0
      %3296 = vmatprep.subr.mxu0 0.0
      %3297 = vmatpush1.msra.mxu0 0.0
      %3298 = vmatprep.subr.mxu0 0.0
      %3299 = vmatpush1.msra.mxu0 0.0
      %3300 = vmatprep.subr.mxu0 0.0
      %3301 = vmatpush1.msra.mxu0 0.0
      %3302 = vmatprep.subr.mxu0 0.0
      %3303 = vmatpush1.msra.mxu0 0.0
      %3304 = vmatprep.subr.mxu0 0.0
      %3305 = vmatpush1.msra.mxu0 0.0
      %3306 = vmatprep.subr.mxu0 0.0
      %3307 = vmatpush1.msra.mxu0 0.0
      %3308 = vmatprep.subr.mxu0 0.0
      %3309 = vmatpush1.msra.mxu0 0.0
      %3310 = vmatprep.subr.mxu0 0.0
      %3311 = vmatpush1.msra.mxu0 0.0
      %3312 = vmatprep.subr.mxu0 0.0
      %3313 = vmatpush1.msra.mxu0 0.0
      %3314 = vmatprep.subr.mxu0 0.0
      %3315 = vmatpush1.msra.mxu0 0.0
      %3316 = vmatprep.subr.mxu0 0.0
      %3317 = vmatpush1.msra.mxu0 0.0
      %3318 = vmatprep.subr.mxu0 0.0
      %3319 = vmatpush1.msra.mxu0 0.0
      %3320 = vmatprep.subr.mxu0 0.0
      %3321 = vmatpush1.msra.mxu0 0.0
      %3322 = vmatprep.mubr.f32.mxu0 0.0
      %3323 = vmatmul.mubr.f32.gmra.mrb[0].mxu0 %v3256
      %v3324 = vpop.f32.mrb[0].mxu0
      %v3325 = vadd.f32 0.0, %v3324
      %v3326 = vpop.f32.mrb[0].mxu0
      %3327 = vdwg.mxu0
      %v3329 = vsel %vm114, %v3325, 0
      %3331 = vmatprep.subr.mxu0 0.0
      %3332 = vmatpush1.msra.mxu0 %v3252
      %3333 = vmatprep.subr.mxu0 0.0
      %3334 = vmatpush1.msra.mxu0 0.0
      %3335 = vmatprep.subr.mxu0 0.0
      %3336 = vmatpush1.msra.mxu0 0.0
      %3337 = vmatprep.subr.mxu0 0.0
      %3338 = vmatpush1.msra.mxu0 0.0
      %3339 = vmatprep.subr.mxu0 0.0
      %3340 = vmatpush1.msra.mxu0 0.0
      %3341 = vmatprep.subr.mxu0 0.0
      %3342 = vmatpush1.msra.mxu0 0.0
      %3343 = vmatprep.subr.mxu0 0.0
      %3344 = vmatpush1.msra.mxu0 0.0
      %3345 = vmatprep.subr.mxu0 0.0
      %3346 = vmatpush1.msra.mxu0 0.0
      %3347 = vmatprep.subr.mxu0 0.0
      %3348 = vmatpush1.msra.mxu0 0.0
      %3349 = vmatprep.subr.mxu0 0.0
      %3350 = vmatpush1.msra.mxu0 0.0
      %3351 = vmatprep.subr.mxu0 0.0
      %3352 = vmatpush1.msra.mxu0 0.0
      %3353 = vmatprep.subr.mxu0 0.0
      %3354 = vmatpush1.msra.mxu0 0.0
      %3355 = vmatprep.subr.mxu0 0.0
      %3356 = vmatpush1.msra.mxu0 0.0
      %3357 = vmatprep.subr.mxu0 0.0
      %3358 = vmatpush1.msra.mxu0 0.0
      %3359 = vmatprep.subr.mxu0 0.0
      %3360 = vmatpush1.msra.mxu0 0.0
      %3361 = vmatprep.subr.mxu0 0.0
      %3362 = vmatpush1.msra.mxu0 0.0
      %3363 = vmatprep.subr.mxu0 0.0
      %3364 = vmatpush1.msra.mxu0 0.0
      %3365 = vmatprep.subr.mxu0 0.0
      %3366 = vmatpush1.msra.mxu0 0.0
      %3367 = vmatprep.subr.mxu0 0.0
      %3368 = vmatpush1.msra.mxu0 0.0
      %3369 = vmatprep.subr.mxu0 0.0
      %3370 = vmatpush1.msra.mxu0 0.0
      %3371 = vmatprep.subr.mxu0 0.0
      %3372 = vmatpush1.msra.mxu0 0.0
      %3373 = vmatprep.subr.mxu0 0.0
      %3374 = vmatpush1.msra.mxu0 0.0
      %3375 = vmatprep.subr.mxu0 0.0
      %3376 = vmatpush1.msra.mxu0 0.0
      %3377 = vmatprep.subr.mxu0 0.0
      %3378 = vmatpush1.msra.mxu0 0.0
      %3379 = vmatprep.subr.mxu0 0.0
      %3380 = vmatpush1.msra.mxu0 0.0
      %3381 = vmatprep.subr.mxu0 0.0
      %3382 = vmatpush1.msra.mxu0 0.0
      %3383 = vmatprep.subr.mxu0 0.0
      %3384 = vmatpush1.msra.mxu0 0.0
      %3385 = vmatprep.subr.mxu0 0.0
      %3386 = vmatpush1.msra.mxu0 0.0
      %3387 = vmatprep.subr.mxu0 0.0
      %3388 = vmatpush1.msra.mxu0 0.0
      %3389 = vmatprep.subr.mxu0 0.0
      %3390 = vmatpush1.msra.mxu0 0.0
      %3391 = vmatprep.subr.mxu0 0.0
      %3392 = vmatpush1.msra.mxu0 0.0
      %3393 = vmatprep.subr.mxu0 0.0
      %3394 = vmatpush1.msra.mxu0 0.0
      %3395 = vmatprep.mubr.f32.mxu0 0.0
      %3396 = vmatmul.mubr.f32.gmra.mrb[0].mxu0 %v3329
      %v3397 = vpop.f32.mrb[0].mxu0
      %v3398 = vadd.f32 0.0, %v3397
      %v3399 = vpop.f32.mrb[0].mxu0
      %3400 = vdwg.mxu0
      %v3401 = vmul.f32 %v3398, 0.5
      %v3402 = vsub.f32 %v230, %v3401
      %v3404 = vsel %vm114, %v3252, 0
      %3406 = vmatprep.subr.mxu0 0.0
      %3407 = vmatpush1.msra.mxu0 %v3402
      %3408 = vmatprep.subr.mxu0 0.0
      %3409 = vmatpush1.msra.mxu0 0.0
      %3410 = vmatprep.subr.mxu0 0.0
      %3411 = vmatpush1.msra.mxu0 0.0
      %3412 = vmatprep.subr.mxu0 0.0
      %3413 = vmatpush1.msra.mxu0 0.0
      %3414 = vmatprep.subr.mxu0 0.0
      %3415 = vmatpush1.msra.mxu0 0.0
      %3416 = vmatprep.subr.mxu0 0.0
      %3417 = vmatpush1.msra.mxu0 0.0
      %3418 = vmatprep.subr.mxu0 0.0
      %3419 = vmatpush1.msra.mxu0 0.0
      %3420 = vmatprep.subr.mxu0 0.0
      %3421 = vmatpush1.msra.mxu0 0.0
      %3422 = vmatprep.subr.mxu0 0.0
      %3423 = vmatpush1.msra.mxu0 0.0
      %3424 = vmatprep.subr.mxu0 0.0
      %3425 = vmatpush1.msra.mxu0 0.0
      %3426 = vmatprep.subr.mxu0 0.0
      %3427 = vmatpush1.msra.mxu0 0.0
      %3428 = vmatprep.subr.mxu0 0.0
      %3429 = vmatpush1.msra.mxu0 0.0
      %3430 = vmatprep.subr.mxu0 0.0
      %3431 = vmatpush1.msra.mxu0 0.0
      %3432 = vmatprep.subr.mxu0 0.0
      %3433 = vmatpush1.msra.mxu0 0.0
      %3434 = vmatprep.subr.mxu0 0.0
      %3435 = vmatpush1.msra.mxu0 0.0
      %3436 = vmatprep.subr.mxu0 0.0
      %3437 = vmatpush1.msra.mxu0 0.0
      %3438 = vmatprep.subr.mxu0 0.0
      %3439 = vmatpush1.msra.mxu0 0.0
      %3440 = vmatprep.subr.mxu0 0.0
      %3441 = vmatpush1.msra.mxu0 0.0
      %3442 = vmatprep.subr.mxu0 0.0
      %3443 = vmatpush1.msra.mxu0 0.0
      %3444 = vmatprep.subr.mxu0 0.0
      %3445 = vmatpush1.msra.mxu0 0.0
      %3446 = vmatprep.subr.mxu0 0.0
      %3447 = vmatpush1.msra.mxu0 0.0
      %3448 = vmatprep.subr.mxu0 0.0
      %3449 = vmatpush1.msra.mxu0 0.0
      %3450 = vmatprep.subr.mxu0 0.0
      %3451 = vmatpush1.msra.mxu0 0.0
      %3452 = vmatprep.subr.mxu0 0.0
      %3453 = vmatpush1.msra.mxu0 0.0
      %3454 = vmatprep.subr.mxu0 0.0
      %3455 = vmatpush1.msra.mxu0 0.0
      %3456 = vmatprep.subr.mxu0 0.0
      %3457 = vmatpush1.msra.mxu0 0.0
      %3458 = vmatprep.subr.mxu0 0.0
      %3459 = vmatpush1.msra.mxu0 0.0
      %3460 = vmatprep.subr.mxu0 0.0
      %3461 = vmatpush1.msra.mxu0 0.0
      %3462 = vmatprep.subr.mxu0 0.0
      %3463 = vmatpush1.msra.mxu0 0.0
      %3464 = vmatprep.subr.mxu0 0.0
      %3465 = vmatpush1.msra.mxu0 0.0
      %3466 = vmatprep.subr.mxu0 0.0
      %3467 = vmatpush1.msra.mxu0 0.0
      %3468 = vmatprep.subr.mxu0 0.0
      %3469 = vmatpush1.msra.mxu0 0.0
      %3470 = vmatprep.mubr.f32.mxu0 0.0
      %3471 = vmatmul.mubr.f32.gmra.mrb[0].mxu0 %v3404
      %v3472 = vpop.f32.mrb[0].mxu0
      %v3473 = vadd.f32 0.0, %v3472
      %v3474 = vpop.f32.mrb[0].mxu0
      %3475 = vdwg.mxu0
      %v3476 = vstv %s229
      %v3477 = vrsqrt.pop %v3476
      %v3478 = vmul.f32 %v3476, %v3477
      %vm3479 = vcmp.eq.f32.partialorder %v3476, inf
      %v3480 = vsel %vm3479, %v3476, %v3478
      %vm3481 = vcmp.eq.f32.partialorder %v3476, 0.0
      %v3482 = vand.u32 %v3476, 2147483648
      %v3483 = vsel %vm3481, %v3482, %v3480
      %s3484 = vtos %v3483
      %v3485 = vstv %s3484
      %v3486 = vmul.f32 %v3473, %v3485
      %3487 = vst.msk [vmem:[#allocation8] sm:$0xff] %vm114, %v3486
    $region17: #{tpu_custom_call.1} parent=1 // pred_fallthru
      _
    // Predicated region
    $region18: #{tpu_custom_call.1} parent=1 // pred_check
      _
    $region19: #{tpu_custom_call.1} parent=1 // pred_check_branch
      %3489 = sbr.rel (0) target = $region21
    $region20: #{tpu_custom_call.1} parent=1 // pred_region
      _
    $region21: #{tpu_custom_call.1} parent=1 // pred_fallthru
      _
    // Predicated region
    $region22: #{tpu_custom_call.1} parent=1 // pred_check
      _
    $region23: #{tpu_custom_call.1} parent=1 // pred_check_branch
      %3491 = sbr.rel (0) target = $region25
    $region24: #{tpu_custom_call.1} parent=1 // pred_region
      %s3493 = ssub.s32 128, 128
      %3494 = vsyncadd [#allocation6], %s3493
      %s3496 = sshll.u32 [#allocation7], 4
      %s3497 = int_to_ptr.vmem [resolvable:$true] %s3496
      %3499 = dma.vmem_to_hbm [thread:$0]  %s3497, 128, %s2, [#allocation6]
    $region25: #{tpu_custom_call.1} parent=1 // pred_fallthru
      _
    // Predicated region
    $region26: #{tpu_custom_call.1} parent=1 // pred_check
      _
    $region27: #{tpu_custom_call.1} parent=1 // pred_check_branch
      %3501 = sbr.rel (0) target = $region29
    $region28: #{tpu_custom_call.1} parent=1 // pred_region
      %s3503 = ssub.s32 128, 128
      %3504 = vsyncadd [#allocation9], %s3503
      %s3506 = sshll.u32 [#allocation8], 4
      %s3507 = int_to_ptr.vmem [resolvable:$true] %s3506
      %3509 = dma.vmem_to_hbm [thread:$0]  %s3507, 128, %s3, [#allocation9]
    $region29: #{tpu_custom_call.1} parent=1 // pred_fallthru
      _
    // Predicated region
    $region30: #{tpu_custom_call.1} parent=1 // pred_check
      _
    $region31: #{tpu_custom_call.1} parent=1 // pred_check_branch
      %3511 = sbr.rel (0) target = $region33
    $region32: #{tpu_custom_call.1} parent=1 // pred_region
      _
    $region33: #{tpu_custom_call.1} parent=1 // pred_fallthru
      _
    // Predicated region
    $region34: #{tpu_custom_call.1} parent=1 // pred_check
      _
    $region35: #{tpu_custom_call.1} parent=1 // pred_check_branch
      %3513 = sbr.rel (0) target = $region37
    $region36: #{tpu_custom_call.1} parent=1 // pred_region
      %3514 = dma.done [#allocation6], 128
    $region37: #{tpu_custom_call.1} parent=1 // pred_fallthru
      _
    // Predicated region
    $region38: #{tpu_custom_call.1} parent=1 // pred_check
      _
    $region39: #{tpu_custom_call.1} parent=1 // pred_check_branch
      %3516 = sbr.rel (0) target = $region41
    $region40: #{tpu_custom_call.1} parent=1 // pred_region
      %3517 = dma.done [#allocation9], 128
    $region41: #{tpu_custom_call.1} parent=1 // pred_fallthru
      _
    %3518 = vsyncpa [#allocation5], 1
    %3519 = vsyncpa [#allocation6], 1
    %3520 = vsyncpa [#allocation9], 1

</llo_original>
